<compile_context>
chip_gen: v5e
topology: v5e:2x2
jax: 0.10.0
libtpu: 0.0.40
codegen_flags: <defaults>
</compile_context>

<pallas_src>
import jax
import jax.numpy as jnp
from jax.experimental import pallas as pl
from jax.experimental.pallas import tpu as pltpu

# Problem constants (from the PyTorch module).
IN_H = IN_W = 28
KH = KW = 10
OUT_H = OUT_W = 19
NC = 17                  # conv output channels
KK = KH * KW             # 100 taps per conv output
NP = OUT_H * OUT_W       # 361 spatial outputs per channel
FEAT = NC * NP           # 6137
HID = 58
NCLS = 10

# Kernel tiling / padded-layout constants.
TB = 8                   # images per grid step (batch tile)
CP = 384                 # patch dim padded 361 -> 384  (lane multiple of 128)
HP = 128                 # hidden dim padded 58 -> 128  (full lane)


# ----------------------------------------------------------------------------
# Fused kernel: conv-as-matmul -> Linear -> tanh -> Linear -> log-softmax.
#   cols_ref : (TB*100, 384)  im2col'd tile, row = b*100 + (ki*10+kj)
#   abd_ref  : (17*TB, TB*100) block-diagonal expanded conv weight
#   w1p_ref  : (17, 384, 128)  w1 reshaped/padded: w1p[c, p, n] = w1[n, c*361+p]
#   hb_ref   : (1, 128)        folded conv-bias contribution to the hidden layer
#   w3p_ref  : (128, 10)       w3 transposed + zero-padded rows
#   out_ref  : (TB, 10)        log-softmax outputs
#   conv_scr : (17*TB, 384)    VMEM scratch holding the conv slab for this tile
# ----------------------------------------------------------------------------
def fused_kernel(cols_ref, abd_ref, w1p_ref, hb_ref, w3p_ref, out_ref, conv_scr):
    # Stage 1: conv for the whole batch tile as one MXU matmul (stays in VMEM).
    conv_scr[...] = jnp.dot(
        abd_ref[...], cols_ref[...], preferred_element_type=jnp.float32
    )

    # Stage 2: first Linear, accumulated over conv channels.
    # Each channel's rows [c*TB, (c+1)*TB) are an 8-sublane-aligned view.
    h = jnp.zeros((TB, HP), dtype=jnp.float32)
    for c in range(NC):
        conv_c = conv_scr[pl.ds(c * TB, TB), :]                 # (TB, 384)
        h = h + jnp.dot(conv_c, w1p_ref[c], preferred_element_type=jnp.float32)
    h = jnp.tanh(h + hb_ref[...])                               # (TB, 128)

    # Stage 3: second Linear + log-softmax over the 10 real classes.
    logits = jnp.dot(h, w3p_ref[...], preferred_element_type=jnp.float32)
    m = jnp.max(logits, axis=1, keepdims=True)
    lse = jnp.log(jnp.sum(jnp.exp(logits - m), axis=1, keepdims=True)) + m
    out_ref[...] = logits - lse


# ----------------------------------------------------------------------------
# One-time parameter preparation (outside the jitted per-call path).
# ----------------------------------------------------------------------------
def prepare_params(wc, bc, w1, w3, tb=TB):
    wc2 = wc.reshape(NC, KK).astype(jnp.float32)                # (17, 100)
    # Block-diagonal expanded conv weight: abd[c*tb+b, b'*100+k] = wc2[c,k]*delta_{bb'}
    eye = jnp.eye(tb, dtype=jnp.float32)
    abd = (wc2[:, None, None, :] * eye[None, :, :, None]).reshape(NC * tb, tb * KK)

    # w1 (58, 6137) -> (58, 17, 361) -> pad (128, 17, 384) -> (17, 384, 128)
    w1r = w1.astype(jnp.float32).reshape(HID, NC, NP)
    w1p = jnp.pad(w1r, ((0, HP - HID), (0, 0), (0, CP - NP))).transpose(1, 2, 0)

    # Conv bias folded into the hidden pre-activation:
    #   hb[n] = sum_c bc[c] * sum_p w1[n, c*361 + p]
    hb = (w1r.sum(axis=2) @ bc.astype(jnp.float32)).reshape(1, HID)
    hb = jnp.pad(hb, ((0, 0), (0, HP - HID)))                   # (1, 128)

    # w3 (10, 58) -> (58, 10) -> zero-pad rows -> (128, 10)
    w3p = jnp.pad(w3.astype(jnp.float32).T, ((0, HP - HID), (0, 0)))

    return {"abd": abd, "w1p": w1p, "hb": hb, "w3p": w3p}


# ----------------------------------------------------------------------------
# im2col in the wrapper (pure data movement): -> (B*100, 384), zero-padded lanes.
# Row = b*100 + (ki*10 + kj); column p = oi*19 + oj (PyTorch NCHW flatten order).
# ----------------------------------------------------------------------------
def im2col_cols2(x):
    b = x.shape[0]
    x2 = x.reshape(b, IN_H, IN_W).astype(jnp.float32)
    rows = jnp.stack([x2[:, ki:ki + OUT_H, :] for ki in range(KH)], axis=1)      # (B,10,19,28)
    patches = jnp.stack([rows[..., kj:kj + OUT_W] for kj in range(KW)], axis=2)  # (B,10,10,19,19)
    cols = patches.reshape(b, KK, NP)                                            # (B,100,361)
    cols = jnp.pad(cols, ((0, 0), (0, 0), (0, CP - NP)))                         # (B,100,384)
    return cols.reshape(b * KK, CP)                                              # (B*100,384)


@jax.jit
def conv2dthenlinear_28_forward(x, params):
    b = x.shape[0]
    bpad = ((b + TB - 1) // TB) * TB
    x = x.astype(jnp.float32).reshape(b, 1, IN_H, IN_W)
    if bpad != b:
        x = jnp.pad(x, ((0, bpad - b), (0, 0), (0, 0), (0, 0)))
    cols2 = im2col_cols2(x)                                      # (bpad*100, 384)

    out = pl.pallas_call(
        fused_kernel,
        out_shape=jax.ShapeDtypeStruct((bpad, NCLS), jnp.float32),
        grid=(bpad // TB,),
        in_specs=[
            pl.BlockSpec((TB * KK, CP), lambda i: (i, 0)),       # cols tile
            pl.BlockSpec((NC * TB, TB * KK), lambda i: (0, 0)),  # block-diag conv weight
            pl.BlockSpec((NC, CP, HP), lambda i: (0, 0, 0)),     # padded w1
            pl.BlockSpec((1, HP), lambda i: (0, 0)),             # folded bias
            pl.BlockSpec((HP, NCLS), lambda i: (0, 0)),          # padded w3
        ],
        out_specs=pl.BlockSpec((TB, NCLS), lambda i: (i, 0)),
        scratch_shapes=[pltpu.VMEM((NC * TB, CP), jnp.float32)],
        compiler_params=pltpu.CompilerParams(
            dimension_semantics=("parallel",),
            vmem_limit_bytes=32 * 1024 * 1024,
        ),
    )(cols2, params["abd"], params["w1p"], params["hb"], params["w3p"])
    return out[:b]


# ----------------------------------------------------------------------------
# Pure-JAX reference (high precision) mirroring the PyTorch module.
# ----------------------------------------------------------------------------
def reference_forward(x, wc, bc, w1, w3):
    b = x.shape[0]
    xf = x.astype(jnp.float32).reshape(b, 1, IN_H, IN_W)
    conv = jax.lax.conv_general_dilated(
        xf, wc.astype(jnp.float32), (1, 1), "VALID",
        dimension_numbers=("NCHW", "OIHW", "NCHW"),
        precision=jax.lax.Precision.HIGHEST,
    ) + bc.reshape(1, NC, 1, 1)
    feat = conv.reshape(b, FEAT)
    h = jnp.tanh(jnp.dot(feat, w1.T, precision=jax.lax.Precision.HIGHEST))
    logits = jnp.dot(h, w3.T, precision=jax.lax.Precision.HIGHEST)
    return jax.nn.log_softmax(logits, axis=1)


if __name__ == "__main__":
    key = jax.random.PRNGKey(0)
    kx, kwc, kbc, kw1, kw3 = jax.random.split(key, 5)

    B = 2
    x = jax.random.normal(kx, (B, 1, 28, 28), dtype=jnp.float32)

    # Deterministic PyTorch-style parameter init.
    wc = jax.random.uniform(kwc, (NC, 1, KH, KW), jnp.float32, -0.1, 0.1)
    bc = jax.random.uniform(kbc, (NC,), jnp.float32, -0.1, 0.1)
    w1 = jax.random.uniform(kw1, (HID, FEAT), jnp.float32,
                            -1.0 / jnp.sqrt(float(FEAT)), 1.0 / jnp.sqrt(float(FEAT)))
    w3 = jax.random.uniform(kw3, (NCLS, HID), jnp.float32,
                            -1.0 / jnp.sqrt(float(HID)), 1.0 / jnp.sqrt(float(HID)))

    # Weight prep done once, outside the jitted forward.
    params = prepare_params(wc, bc, w1, w3)
    params = jax.tree_util.tree_map(jax.block_until_ready, params)

    out = jax.block_until_ready(conv2dthenlinear_28_forward(x, params))
    ref = jax.block_until_ready(reference_forward(x, wc, bc, w1, w3))

    assert out.shape == (B, NCLS), out.shape
    assert bool(jnp.all(jnp.isfinite(out)))
    # Kernel runs at DEFAULT MXU precision (f32 accumulation); reference is HIGHEST.
    assert jnp.allclose(out, ref, rtol=2e-3, atol=2e-3), (out, ref)

    print("KERNEL_OK")
</pallas_src>

<mosaic_0001>
module attributes {stable_mosaic.version = 11 : i64} {
  func.func @fused_kernel(%arg0: i32, %arg1: memref<800x384xf32, #tpu.memory_space<vmem>>, %arg2: memref<136x800xf32, #tpu.memory_space<vmem>>, %arg3: memref<17x384x128xf32, #tpu.memory_space<vmem>>, %arg4: memref<1x128xf32, #tpu.memory_space<vmem>>, %arg5: memref<128x10xf32, #tpu.memory_space<vmem>>, %arg6: memref<8x10xf32, #tpu.memory_space<vmem>>, %arg7: memref<136x384xf32, #tpu.memory_space<vmem>>) attributes {dimension_semantics = [#tpu.dimension_semantics<parallel>], iteration_bounds = array<i64: 1>, scalar_prefetch = 0 : i64, scratch_operands = 1 : i64, tpu.core_type = #tpu.core_type<tc>, window_params = [{transform_indices = @transform_0, window_bounds = array<i64: 800, 384>}, {pipeline_mode = #tpu.pipeline_mode<synchronous>, transform_indices = @transform_1, window_bounds = array<i64: 136, 800>}, {pipeline_mode = #tpu.pipeline_mode<synchronous>, transform_indices = @transform_2, window_bounds = array<i64: 17, 384, 128>}, {pipeline_mode = #tpu.pipeline_mode<synchronous>, transform_indices = @transform_3, window_bounds = array<i64: 1, 128>}, {pipeline_mode = #tpu.pipeline_mode<synchronous>, transform_indices = @transform_4, window_bounds = array<i64: 128, 10>}, {transform_indices = @transform_5, window_bounds = array<i64: 8, 10>}]} {
    %c0 = arith.constant 0 : index
    %c0_0 = arith.constant 0 : index
    %0 = vector.load %arg2[%c0, %c0_0] : memref<136x800xf32, #tpu.memory_space<vmem>>, vector<136x800xf32>
    %c0_1 = arith.constant 0 : index
    %c0_2 = arith.constant 0 : index
    %1 = vector.load %arg1[%c0_1, %c0_2] : memref<800x384xf32, #tpu.memory_space<vmem>>, vector<800x384xf32>
    %cst = arith.constant dense<0.000000e+00> : vector<136x384xf32>
    %2 = tpu.matmul %0, %1, %cst {dimension_numbers = #tpu.dot_dimension_numbers<[1], [0], [0], [1], [0, 0, 1, 1], [], []>} : vector<136x800xf32>, vector<800x384xf32>, vector<136x384xf32> -> vector<136x384xf32>
    %c0_3 = arith.constant 0 : index
    %c0_4 = arith.constant 0 : index
    %3 = vector.load %arg7[%c0_3, %c0_4] : memref<136x384xf32, #tpu.memory_space<vmem>>, vector<136x384xf32>
    tpu.vector_store %arg7[%c0_3, %c0_4], %2 {strides = array<i32>} : memref<136x384xf32, #tpu.memory_space<vmem>>, vector<136x384xf32>,
    %cst_5 = arith.constant 0.000000e+00 : f32
    %4 = vector.broadcast %cst_5 : f32 to vector<8x128xf32>
    %c0_6 = arith.constant 0 : index
    %c0_7 = arith.constant 0 : index
    %5 = vector.load %arg7[%c0_6, %c0_7] : memref<136x384xf32, #tpu.memory_space<vmem>>, vector<8x384xf32>
    %c0_8 = arith.constant 0 : index
    %c0_9 = arith.constant 0 : index
    %c0_10 = arith.constant 0 : index
    %6 = vector.load %arg3[%c0_8, %c0_9, %c0_10] : memref<17x384x128xf32, #tpu.memory_space<vmem>>, vector<1x384x128xf32>
    %7 = vector.shape_cast %6 : vector<1x384x128xf32> to vector<384x128xf32>
    %cst_11 = arith.constant dense<0.000000e+00> : vector<8x128xf32>
    %8 = tpu.matmul %5, %7, %cst_11 {dimension_numbers = #tpu.dot_dimension_numbers<[1], [0], [0], [1], [0, 0, 1, 1], [], []>} : vector<8x384xf32>, vector<384x128xf32>, vector<8x128xf32> -> vector<8x128xf32>
    %9 = arith.addf %4, %8 : vector<8x128xf32>
    %c8 = arith.constant 8 : index
    %c0_12 = arith.constant 0 : index
    %10 = vector.load %arg7[%c8, %c0_12] : memref<136x384xf32, #tpu.memory_space<vmem>>, vector<8x384xf32>
    %c1 = arith.constant 1 : index
    %c0_13 = arith.constant 0 : index
    %c0_14 = arith.constant 0 : index
    %11 = vector.load %arg3[%c1, %c0_13, %c0_14] : memref<17x384x128xf32, #tpu.memory_space<vmem>>, vector<1x384x128xf32>
    %12 = vector.shape_cast %11 : vector<1x384x128xf32> to vector<384x128xf32>
    %cst_15 = arith.constant dense<0.000000e+00> : vector<8x128xf32>
    %13 = tpu.matmul %10, %12, %cst_15 {dimension_numbers = #tpu.dot_dimension_numbers<[1], [0], [0], [1], [0, 0, 1, 1], [], []>} : vector<8x384xf32>, vector<384x128xf32>, vector<8x128xf32> -> vector<8x128xf32>
    %14 = arith.addf %9, %13 : vector<8x128xf32>
    %c16 = arith.constant 16 : index
    %c0_16 = arith.constant 0 : index
    %15 = vector.load %arg7[%c16, %c0_16] : memref<136x384xf32, #tpu.memory_space<vmem>>, vector<8x384xf32>
    %c2 = arith.constant 2 : index
    %c0_17 = arith.constant 0 : index
    %c0_18 = arith.constant 0 : index
    %16 = vector.load %arg3[%c2, %c0_17, %c0_18] : memref<17x384x128xf32, #tpu.memory_space<vmem>>, vector<1x384x128xf32>
    %17 = vector.shape_cast %16 : vector<1x384x128xf32> to vector<384x128xf32>
    %cst_19 = arith.constant dense<0.000000e+00> : vector<8x128xf32>
    %18 = tpu.matmul %15, %17, %cst_19 {dimension_numbers = #tpu.dot_dimension_numbers<[1], [0], [0], [1], [0, 0, 1, 1], [], []>} : vector<8x384xf32>, vector<384x128xf32>, vector<8x128xf32> -> vector<8x128xf32>
    %19 = arith.addf %14, %18 : vector<8x128xf32>
    %c24 = arith.constant 24 : index
    %c0_20 = arith.constant 0 : index
    %20 = vector.load %arg7[%c24, %c0_20] : memref<136x384xf32, #tpu.memory_space<vmem>>, vector<8x384xf32>
    %c3 = arith.constant 3 : index
    %c0_21 = arith.constant 0 : index
    %c0_22 = arith.constant 0 : index
    %21 = vector.load %arg3[%c3, %c0_21, %c0_22] : memref<17x384x128xf32, #tpu.memory_space<vmem>>, vector<1x384x128xf32>
    %22 = vector.shape_cast %21 : vector<1x384x128xf32> to vector<384x128xf32>
    %cst_23 = arith.constant dense<0.000000e+00> : vector<8x128xf32>
    %23 = tpu.matmul %20, %22, %cst_23 {dimension_numbers = #tpu.dot_dimension_numbers<[1], [0], [0], [1], [0, 0, 1, 1], [], []>} : vector<8x384xf32>, vector<384x128xf32>, vector<8x128xf32> -> vector<8x128xf32>
    %24 = arith.addf %19, %23 : vector<8x128xf32>
    %c32 = arith.constant 32 : index
    %c0_24 = arith.constant 0 : index
    %25 = vector.load %arg7[%c32, %c0_24] : memref<136x384xf32, #tpu.memory_space<vmem>>, vector<8x384xf32>
    %c4 = arith.constant 4 : index
    %c0_25 = arith.constant 0 : index
    %c0_26 = arith.constant 0 : index
    %26 = vector.load %arg3[%c4, %c0_25, %c0_26] : memref<17x384x128xf32, #tpu.memory_space<vmem>>, vector<1x384x128xf32>
    %27 = vector.shape_cast %26 : vector<1x384x128xf32> to vector<384x128xf32>
    %cst_27 = arith.constant dense<0.000000e+00> : vector<8x128xf32>
    %28 = tpu.matmul %25, %27, %cst_27 {dimension_numbers = #tpu.dot_dimension_numbers<[1], [0], [0], [1], [0, 0, 1, 1], [], []>} : vector<8x384xf32>, vector<384x128xf32>, vector<8x128xf32> -> vector<8x128xf32>
    %29 = arith.addf %24, %28 : vector<8x128xf32>
    %c40 = arith.constant 40 : index
    %c0_28 = arith.constant 0 : index
    %30 = vector.load %arg7[%c40, %c0_28] : memref<136x384xf32, #tpu.memory_space<vmem>>, vector<8x384xf32>
    %c5 = arith.constant 5 : index
    %c0_29 = arith.constant 0 : index
    %c0_30 = arith.constant 0 : index
    %31 = vector.load %arg3[%c5, %c0_29, %c0_30] : memref<17x384x128xf32, #tpu.memory_space<vmem>>, vector<1x384x128xf32>
    %32 = vector.shape_cast %31 : vector<1x384x128xf32> to vector<384x128xf32>
    %cst_31 = arith.constant dense<0.000000e+00> : vector<8x128xf32>
    %33 = tpu.matmul %30, %32, %cst_31 {dimension_numbers = #tpu.dot_dimension_numbers<[1], [0], [0], [1], [0, 0, 1, 1], [], []>} : vector<8x384xf32>, vector<384x128xf32>, vector<8x128xf32> -> vector<8x128xf32>
    %34 = arith.addf %29, %33 : vector<8x128xf32>
    %c48 = arith.constant 48 : index
    %c0_32 = arith.constant 0 : index
    %35 = vector.load %arg7[%c48, %c0_32] : memref<136x384xf32, #tpu.memory_space<vmem>>, vector<8x384xf32>
    %c6 = arith.constant 6 : index
    %c0_33 = arith.constant 0 : index
    %c0_34 = arith.constant 0 : index
    %36 = vector.load %arg3[%c6, %c0_33, %c0_34] : memref<17x384x128xf32, #tpu.memory_space<vmem>>, vector<1x384x128xf32>
    %37 = vector.shape_cast %36 : vector<1x384x128xf32> to vector<384x128xf32>
    %cst_35 = arith.constant dense<0.000000e+00> : vector<8x128xf32>
    %38 = tpu.matmul %35, %37, %cst_35 {dimension_numbers = #tpu.dot_dimension_numbers<[1], [0], [0], [1], [0, 0, 1, 1], [], []>} : vector<8x384xf32>, vector<384x128xf32>, vector<8x128xf32> -> vector<8x128xf32>
    %39 = arith.addf %34, %38 : vector<8x128xf32>
    %c56 = arith.constant 56 : index
    %c0_36 = arith.constant 0 : index
    %40 = vector.load %arg7[%c56, %c0_36] : memref<136x384xf32, #tpu.memory_space<vmem>>, vector<8x384xf32>
    %c7 = arith.constant 7 : index
    %c0_37 = arith.constant 0 : index
    %c0_38 = arith.constant 0 : index
    %41 = vector.load %arg3[%c7, %c0_37, %c0_38] : memref<17x384x128xf32, #tpu.memory_space<vmem>>, vector<1x384x128xf32>
    %42 = vector.shape_cast %41 : vector<1x384x128xf32> to vector<384x128xf32>
    %cst_39 = arith.constant dense<0.000000e+00> : vector<8x128xf32>
    %43 = tpu.matmul %40, %42, %cst_39 {dimension_numbers = #tpu.dot_dimension_numbers<[1], [0], [0], [1], [0, 0, 1, 1], [], []>} : vector<8x384xf32>, vector<384x128xf32>, vector<8x128xf32> -> vector<8x128xf32>
    %44 = arith.addf %39, %43 : vector<8x128xf32>
    %c64 = arith.constant 64 : index
    %c0_40 = arith.constant 0 : index
    %45 = vector.load %arg7[%c64, %c0_40] : memref<136x384xf32, #tpu.memory_space<vmem>>, vector<8x384xf32>
    %c8_41 = arith.constant 8 : index
    %c0_42 = arith.constant 0 : index
    %c0_43 = arith.constant 0 : index
    %46 = vector.load %arg3[%c8_41, %c0_42, %c0_43] : memref<17x384x128xf32, #tpu.memory_space<vmem>>, vector<1x384x128xf32>
    %47 = vector.shape_cast %46 : vector<1x384x128xf32> to vector<384x128xf32>
    %cst_44 = arith.constant dense<0.000000e+00> : vector<8x128xf32>
    %48 = tpu.matmul %45, %47, %cst_44 {dimension_numbers = #tpu.dot_dimension_numbers<[1], [0], [0], [1], [0, 0, 1, 1], [], []>} : vector<8x384xf32>, vector<384x128xf32>, vector<8x128xf32> -> vector<8x128xf32>
    %49 = arith.addf %44, %48 : vector<8x128xf32>
    %c72 = arith.constant 72 : index
    %c0_45 = arith.constant 0 : index
    %50 = vector.load %arg7[%c72, %c0_45] : memref<136x384xf32, #tpu.memory_space<vmem>>, vector<8x384xf32>
    %c9 = arith.constant 9 : index
    %c0_46 = arith.constant 0 : index
    %c0_47 = arith.constant 0 : index
    %51 = vector.load %arg3[%c9, %c0_46, %c0_47] : memref<17x384x128xf32, #tpu.memory_space<vmem>>, vector<1x384x128xf32>
    %52 = vector.shape_cast %51 : vector<1x384x128xf32> to vector<384x128xf32>
    %cst_48 = arith.constant dense<0.000000e+00> : vector<8x128xf32>
    %53 = tpu.matmul %50, %52, %cst_48 {dimension_numbers = #tpu.dot_dimension_numbers<[1], [0], [0], [1], [0, 0, 1, 1], [], []>} : vector<8x384xf32>, vector<384x128xf32>, vector<8x128xf32> -> vector<8x128xf32>
    %54 = arith.addf %49, %53 : vector<8x128xf32>
    %c80 = arith.constant 80 : index
    %c0_49 = arith.constant 0 : index
    %55 = vector.load %arg7[%c80, %c0_49] : memref<136x384xf32, #tpu.memory_space<vmem>>, vector<8x384xf32>
    %c10 = arith.constant 10 : index
    %c0_50 = arith.constant 0 : index
    %c0_51 = arith.constant 0 : index
    %56 = vector.load %arg3[%c10, %c0_50, %c0_51] : memref<17x384x128xf32, #tpu.memory_space<vmem>>, vector<1x384x128xf32>
    %57 = vector.shape_cast %56 : vector<1x384x128xf32> to vector<384x128xf32>
    %cst_52 = arith.constant dense<0.000000e+00> : vector<8x128xf32>
    %58 = tpu.matmul %55, %57, %cst_52 {dimension_numbers = #tpu.dot_dimension_numbers<[1], [0], [0], [1], [0, 0, 1, 1], [], []>} : vector<8x384xf32>, vector<384x128xf32>, vector<8x128xf32> -> vector<8x128xf32>
    %59 = arith.addf %54, %58 : vector<8x128xf32>
    %c88 = arith.constant 88 : index
    %c0_53 = arith.constant 0 : index
    %60 = vector.load %arg7[%c88, %c0_53] : memref<136x384xf32, #tpu.memory_space<vmem>>, vector<8x384xf32>
    %c11 = arith.constant 11 : index
    %c0_54 = arith.constant 0 : index
    %c0_55 = arith.constant 0 : index
    %61 = vector.load %arg3[%c11, %c0_54, %c0_55] : memref<17x384x128xf32, #tpu.memory_space<vmem>>, vector<1x384x128xf32>
    %62 = vector.shape_cast %61 : vector<1x384x128xf32> to vector<384x128xf32>
    %cst_56 = arith.constant dense<0.000000e+00> : vector<8x128xf32>
    %63 = tpu.matmul %60, %62, %cst_56 {dimension_numbers = #tpu.dot_dimension_numbers<[1], [0], [0], [1], [0, 0, 1, 1], [], []>} : vector<8x384xf32>, vector<384x128xf32>, vector<8x128xf32> -> vector<8x128xf32>
    %64 = arith.addf %59, %63 : vector<8x128xf32>
    %c96 = arith.constant 96 : index
    %c0_57 = arith.constant 0 : index
    %65 = vector.load %arg7[%c96, %c0_57] : memref<136x384xf32, #tpu.memory_space<vmem>>, vector<8x384xf32>
    %c12 = arith.constant 12 : index
    %c0_58 = arith.constant 0 : index
    %c0_59 = arith.constant 0 : index
    %66 = vector.load %arg3[%c12, %c0_58, %c0_59] : memref<17x384x128xf32, #tpu.memory_space<vmem>>, vector<1x384x128xf32>
    %67 = vector.shape_cast %66 : vector<1x384x128xf32> to vector<384x128xf32>
    %cst_60 = arith.constant dense<0.000000e+00> : vector<8x128xf32>
    %68 = tpu.matmul %65, %67, %cst_60 {dimension_numbers = #tpu.dot_dimension_numbers<[1], [0], [0], [1], [0, 0, 1, 1], [], []>} : vector<8x384xf32>, vector<384x128xf32>, vector<8x128xf32> -> vector<8x128xf32>
    %69 = arith.addf %64, %68 : vector<8x128xf32>
    %c104 = arith.constant 104 : index
    %c0_61 = arith.constant 0 : index
    %70 = vector.load %arg7[%c104, %c0_61] : memref<136x384xf32, #tpu.memory_space<vmem>>, vector<8x384xf32>
    %c13 = arith.constant 13 : index
    %c0_62 = arith.constant 0 : index
    %c0_63 = arith.constant 0 : index
    %71 = vector.load %arg3[%c13, %c0_62, %c0_63] : memref<17x384x128xf32, #tpu.memory_space<vmem>>, vector<1x384x128xf32>
    %72 = vector.shape_cast %71 : vector<1x384x128xf32> to vector<384x128xf32>
    %cst_64 = arith.constant dense<0.000000e+00> : vector<8x128xf32>
    %73 = tpu.matmul %70, %72, %cst_64 {dimension_numbers = #tpu.dot_dimension_numbers<[1], [0], [0], [1], [0, 0, 1, 1], [], []>} : vector<8x384xf32>, vector<384x128xf32>, vector<8x128xf32> -> vector<8x128xf32>
    %74 = arith.addf %69, %73 : vector<8x128xf32>
    %c112 = arith.constant 112 : index
    %c0_65 = arith.constant 0 : index
    %75 = vector.load %arg7[%c112, %c0_65] : memref<136x384xf32, #tpu.memory_space<vmem>>, vector<8x384xf32>
    %c14 = arith.constant 14 : index
    %c0_66 = arith.constant 0 : index
    %c0_67 = arith.constant 0 : index
    %76 = vector.load %arg3[%c14, %c0_66, %c0_67] : memref<17x384x128xf32, #tpu.memory_space<vmem>>, vector<1x384x128xf32>
    %77 = vector.shape_cast %76 : vector<1x384x128xf32> to vector<384x128xf32>
    %cst_68 = arith.constant dense<0.000000e+00> : vector<8x128xf32>
    %78 = tpu.matmul %75, %77, %cst_68 {dimension_numbers = #tpu.dot_dimension_numbers<[1], [0], [0], [1], [0, 0, 1, 1], [], []>} : vector<8x384xf32>, vector<384x128xf32>, vector<8x128xf32> -> vector<8x128xf32>
    %79 = arith.addf %74, %78 : vector<8x128xf32>
    %c120 = arith.constant 120 : index
    %c0_69 = arith.constant 0 : index
    %80 = vector.load %arg7[%c120, %c0_69] : memref<136x384xf32, #tpu.memory_space<vmem>>, vector<8x384xf32>
    %c15 = arith.constant 15 : index
    %c0_70 = arith.constant 0 : index
    %c0_71 = arith.constant 0 : index
    %81 = vector.load %arg3[%c15, %c0_70, %c0_71] : memref<17x384x128xf32, #tpu.memory_space<vmem>>, vector<1x384x128xf32>
    %82 = vector.shape_cast %81 : vector<1x384x128xf32> to vector<384x128xf32>
    %cst_72 = arith.constant dense<0.000000e+00> : vector<8x128xf32>
    %83 = tpu.matmul %80, %82, %cst_72 {dimension_numbers = #tpu.dot_dimension_numbers<[1], [0], [0], [1], [0, 0, 1, 1], [], []>} : vector<8x384xf32>, vector<384x128xf32>, vector<8x128xf32> -> vector<8x128xf32>
    %84 = arith.addf %79, %83 : vector<8x128xf32>
    %c128 = arith.constant 128 : index
    %c0_73 = arith.constant 0 : index
    %85 = vector.load %arg7[%c128, %c0_73] : memref<136x384xf32, #tpu.memory_space<vmem>>, vector<8x384xf32>
    %c16_74 = arith.constant 16 : index
    %c0_75 = arith.constant 0 : index
    %c0_76 = arith.constant 0 : index
    %86 = vector.load %arg3[%c16_74, %c0_75, %c0_76] : memref<17x384x128xf32, #tpu.memory_space<vmem>>, vector<1x384x128xf32>
    %87 = vector.shape_cast %86 : vector<1x384x128xf32> to vector<384x128xf32>
    %cst_77 = arith.constant dense<0.000000e+00> : vector<8x128xf32>
    %88 = tpu.matmul %85, %87, %cst_77 {dimension_numbers = #tpu.dot_dimension_numbers<[1], [0], [0], [1], [0, 0, 1, 1], [], []>} : vector<8x384xf32>, vector<384x128xf32>, vector<8x128xf32> -> vector<8x128xf32>
    %89 = arith.addf %84, %88 : vector<8x128xf32>
    %c0_78 = arith.constant 0 : index
    %c0_79 = arith.constant 0 : index
    %90 = vector.load %arg4[%c0_78, %c0_79] : memref<1x128xf32, #tpu.memory_space<vmem>>, vector<1x128xf32>
    %91 = vector.broadcast %90 : vector<1x128xf32> to vector<8x128xf32>
    %92 = arith.addf %89, %91 : vector<8x128xf32>
    %93 = math.tanh %92 : vector<8x128xf32>
    %c0_80 = arith.constant 0 : index
    %c0_81 = arith.constant 0 : index
    %94 = vector.load %arg5[%c0_80, %c0_81] : memref<128x10xf32, #tpu.memory_space<vmem>>, vector<128x10xf32>
    %cst_82 = arith.constant dense<0.000000e+00> : vector<8x10xf32>
    %95 = tpu.matmul %93, %94, %cst_82 {dimension_numbers = #tpu.dot_dimension_numbers<[1], [0], [0], [1], [0, 0, 1, 1], [], []>} : vector<8x128xf32>, vector<128x10xf32>, vector<8x10xf32> -> vector<8x10xf32>
    %cst_83 = arith.constant dense<0xFF800000> : vector<8xf32>
    %96 = vector.multi_reduction <maximumf>, %95, %cst_83 [1] : vector<8x10xf32> to vector<8xf32>
    %97 = vector.shape_cast %96 : vector<8xf32> to vector<8x1xf32>
    %98 = vector.broadcast %97 : vector<8x1xf32> to vector<8x10xf32>
    %99 = arith.subf %95, %98 : vector<8x10xf32>
    %100 = math.exp %99 : vector<8x10xf32>
    %cst_84 = arith.constant dense<0.000000e+00> : vector<8xf32>
    %101 = vector.multi_reduction <add>, %100, %cst_84 [1] : vector<8x10xf32> to vector<8xf32>
    %102 = vector.shape_cast %101 : vector<8xf32> to vector<8x1xf32>
    %103 = math.log %102 : vector<8x1xf32>
    %104 = arith.addf %103, %97 : vector<8x1xf32>
    %105 = vector.broadcast %104 : vector<8x1xf32> to vector<8x10xf32>
    %106 = arith.subf %95, %105 : vector<8x10xf32>
    %c0_85 = arith.constant 0 : index
    %c0_86 = arith.constant 0 : index
    %107 = vector.load %arg6[%c0_85, %c0_86] : memref<8x10xf32, #tpu.memory_space<vmem>>, vector<8x10xf32>
    tpu.vector_store %arg6[%c0_85, %c0_86], %106 {strides = array<i32>} : memref<8x10xf32, #tpu.memory_space<vmem>>, vector<8x10xf32>,
    return
  }
  func.func @transform_0(%arg0: i32) -> (i32, i32) {
    %c0_i32 = arith.constant 0 : i32
    %c0_i32_0 = arith.constant 0 : i32
    return %arg0, %c0_i32 : i32, i32
  }
  func.func @transform_1(%arg0: i32) -> (i32, i32) {
    %c0_i32 = arith.constant 0 : i32
    %c0_i32_0 = arith.constant 0 : i32
    %c0_i32_1 = arith.constant 0 : i32
    return %c0_i32, %c0_i32_0 : i32, i32
  }
  func.func @transform_2(%arg0: i32) -> (i32, i32, i32) {
    %c0_i32 = arith.constant 0 : i32
    %c0_i32_0 = arith.constant 0 : i32
    %c0_i32_1 = arith.constant 0 : i32
    %c0_i32_2 = arith.constant 0 : i32
    return %c0_i32, %c0_i32_0, %c0_i32_1 : i32, i32, i32
  }
  func.func @transform_3(%arg0: i32) -> (i32, i32) {
    %c0_i32 = arith.constant 0 : i32
    %c0_i32_0 = arith.constant 0 : i32
    %c0_i32_1 = arith.constant 0 : i32
    return %c0_i32, %c0_i32_0 : i32, i32
  }
  func.func @transform_4(%arg0: i32) -> (i32, i32) {
    %c0_i32 = arith.constant 0 : i32
    %c0_i32_0 = arith.constant 0 : i32
    %c0_i32_1 = arith.constant 0 : i32
    return %c0_i32, %c0_i32_0 : i32, i32
  }
  func.func @transform_5(%arg0: i32) -> (i32, i32) {
    %c0_i32 = arith.constant 0 : i32
    %c0_i32_0 = arith.constant 0 : i32
    return %arg0, %c0_i32 : i32, i32
  }
}

</mosaic_0001>

<llo_original>
// kernel: conv2dthenlinear_28_forward.1
$region0: #{conv2dthenlinear_28_forward.1}
  #allocation0 [shape = 'u32[]', space=smem, size = 0x4, offset = 0x4, fixed_abs, tag = 'smem constant byte address 0x4 - core index']
  #allocation1 [shape = 'u32[72,128]{1,0:T(1,128)}', space=vmem, size = 0x9000, scoped, tag = 'internal scratch']
  #allocation2 [shape = 'f32[136,384]{1,0:T(8,128)}', space=vmem, size = 0x33000, scoped, tag = 'scratch operand']
  %s0 = inlined_call_operand.vmem [shape: f32[800,384], index: 0, kind: input, shape index: {}]
  %s1 = inlined_call_operand.vmem [shape: f32[136,800], index: 1, kind: input, shape index: {}]
  %s2 = inlined_call_operand.vmem [shape: f32[17,384,128], index: 2, kind: input, shape index: {}]
  %s3 = inlined_call_operand.vmem [shape: f32[1,128], index: 3, kind: input, shape index: {}]
  %s4 = inlined_call_operand.vmem [shape: f32[128,10], index: 4, kind: input, shape index: {}]
  %s5 = inlined_call_operand.vmem [shape: f32[8,10], index: 5, kind: output, shape index: {}]
  %s6 = sld [smem:[#allocation0]]
  $region30: #{conv2dthenlinear_28_forward.1} parent=0
    _
  %s8 = ssub.s32 1, %s6
  %s9 = scalar_select 0, %s8, %s6
  // Predicated region
  $region2: #{conv2dthenlinear_28_forward.1} parent=0 // pred_check
    _
  $region3: #{conv2dthenlinear_28_forward.1} parent=0 // pred_check_branch
    %11 = sbr.rel (0) target = $region5
  $region4: #{conv2dthenlinear_28_forward.1} parent=0 // pred_region
    _
  $region5: #{conv2dthenlinear_28_forward.1} parent=0 // pred_fallthru
    _
  // Predicated region
  $region6: #{conv2dthenlinear_28_forward.1} parent=0 // pred_check
    _
  $region7: #{conv2dthenlinear_28_forward.1} parent=0 // pred_check_branch
    %13 = sbr.rel (0) target = $region9
  $region8: #{conv2dthenlinear_28_forward.1} parent=0 // pred_region
    _
  $region9: #{conv2dthenlinear_28_forward.1} parent=0 // pred_fallthru
    _
  // Predicated region
  $region10: #{conv2dthenlinear_28_forward.1} parent=0 // pred_check
    _
  $region11: #{conv2dthenlinear_28_forward.1} parent=0 // pred_check_branch
    %15 = sbr.rel (0) target = $region13
  $region12: #{conv2dthenlinear_28_forward.1} parent=0 // pred_region
    _
  $region13: #{conv2dthenlinear_28_forward.1} parent=0 // pred_fallthru
    _
  // Predicated region
  $region14: #{conv2dthenlinear_28_forward.1} parent=0 // pred_check
    _
  $region15: #{conv2dthenlinear_28_forward.1} parent=0 // pred_check_branch
    %17 = sbr.rel (0) target = $region17
  $region16: #{conv2dthenlinear_28_forward.1} parent=0 // pred_region
    _
  $region17: #{conv2dthenlinear_28_forward.1} parent=0 // pred_fallthru
    _
  // Predicated region
  $region18: #{conv2dthenlinear_28_forward.1} parent=0 // pred_check
    _
  $region19: #{conv2dthenlinear_28_forward.1} parent=0 // pred_check_branch
    %19 = sbr.rel (0) target = $region21
  $region20: #{conv2dthenlinear_28_forward.1} parent=0 // pred_region
    _
  $region21: #{conv2dthenlinear_28_forward.1} parent=0 // pred_fallthru
    _
  %v20 = vld [vmem:[%s1] sm:$0xff]
  %v21 = vld [vmem:[%s1 + $0x8] sm:$0xff]
  %v22 = vld [vmem:[%s1 + $0x10] sm:$0xff]
  %v23 = vld [vmem:[%s1 + $0x18] sm:$0xff]
  %v24 = vld [vmem:[%s1 + $0x20] sm:$0xff]
  %v25 = vld [vmem:[%s1 + $0x28] sm:$0xff]
  %v26 = vld [vmem:[%s1 + $0x30] sm:$0xff]
  %v27 = vld [vmem:[%s1 + $0x38] sm:$0xff]
  %v28 = vld [vmem:[%s1 + $0x40] sm:$0xff]
  %v29 = vld [vmem:[%s1 + $0x48] sm:$0xff]
  %v30 = vld [vmem:[%s1 + $0x50] sm:$0xff]
  %v31 = vld [vmem:[%s1 + $0x58] sm:$0xff]
  %v32 = vld [vmem:[%s1 + $0x60] sm:$0xff]
  %v33 = vld [vmem:[%s1 + $0x68] sm:$0xff]
  %v34 = vld [vmem:[%s1 + $0x70] sm:$0xff]
  %v35 = vld [vmem:[%s1 + $0x78] sm:$0xff]
  %v36 = vld [vmem:[%s1 + $0x80] sm:$0xff]
  %v37 = vld [vmem:[%s1 + $0x88] sm:$0xff]
  %v38 = vld [vmem:[%s1 + $0x90] sm:$0xff]
  %v39 = vld [vmem:[%s1 + $0x98] sm:$0xff]
  %v40 = vld [vmem:[%s1 + $0xa0] sm:$0xff]
  %v41 = vld [vmem:[%s1 + $0xa8] sm:$0xff]
  %v42 = vld [vmem:[%s1 + $0xb0] sm:$0xff]
  %v43 = vld [vmem:[%s1 + $0xb8] sm:$0xff]
  %v44 = vld [vmem:[%s1 + $0xc0] sm:$0xff]
  %v45 = vld [vmem:[%s1 + $0xc8] sm:$0xff]
  %v46 = vld [vmem:[%s1 + $0xd0] sm:$0xff]
  %v47 = vld [vmem:[%s1 + $0xd8] sm:$0xff]
  %v48 = vld [vmem:[%s1 + $0xe0] sm:$0xff]
  %v49 = vld [vmem:[%s1 + $0xe8] sm:$0xff]
  %v50 = vld [vmem:[%s1 + $0xf0] sm:$0xff]
  %v51 = vld [vmem:[%s1 + $0xf8] sm:$0xff]
  %v52 = vld [vmem:[%s1 + $0x100] sm:$0xff]
  %v53 = vld [vmem:[%s1 + $0x108] sm:$0xff]
  %v54 = vld [vmem:[%s1 + $0x110] sm:$0xff]
  %v55 = vld [vmem:[%s1 + $0x118] sm:$0xff]
  %v56 = vld [vmem:[%s1 + $0x120] sm:$0xff]
  %v57 = vld [vmem:[%s1 + $0x128] sm:$0xff]
  %v58 = vld [vmem:[%s1 + $0x130] sm:$0xff]
  %v59 = vld [vmem:[%s1 + $0x138] sm:$0xff]
  %v60 = vld [vmem:[%s1 + $0x140] sm:$0xff]
  %v61 = vld [vmem:[%s1 + $0x148] sm:$0xff]
  %v62 = vld [vmem:[%s1 + $0x150] sm:$0xff]
  %v63 = vld [vmem:[%s1 + $0x158] sm:$0xff]
  %v64 = vld [vmem:[%s1 + $0x160] sm:$0xff]
  %v65 = vld [vmem:[%s1 + $0x168] sm:$0xff]
  %v66 = vld [vmem:[%s1 + $0x170] sm:$0xff]
  %v67 = vld [vmem:[%s1 + $0x178] sm:$0xff]
  %v68 = vld [vmem:[%s1 + $0x180] sm:$0xff]
  %v69 = vld [vmem:[%s1 + $0x188] sm:$0xff]
  %v70 = vld [vmem:[%s1 + $0x190] sm:$0xff]
  %v71 = vld [vmem:[%s1 + $0x198] sm:$0xff]
  %v72 = vld [vmem:[%s1 + $0x1a0] sm:$0xff]
  %v73 = vld [vmem:[%s1 + $0x1a8] sm:$0xff]
  %v74 = vld [vmem:[%s1 + $0x1b0] sm:$0xff]
  %v75 = vld [vmem:[%s1 + $0x1b8] sm:$0xff]
  %v76 = vld [vmem:[%s1 + $0x1c0] sm:$0xff]
  %v77 = vld [vmem:[%s1 + $0x1c8] sm:$0xff]
  %v78 = vld [vmem:[%s1 + $0x1d0] sm:$0xff]
  %v79 = vld [vmem:[%s1 + $0x1d8] sm:$0xff]
  %v80 = vld [vmem:[%s1 + $0x1e0] sm:$0xff]
  %v81 = vld [vmem:[%s1 + $0x1e8] sm:$0xff]
  %v82 = vld [vmem:[%s1 + $0x1f0] sm:$0xff]
  %v83 = vld [vmem:[%s1 + $0x1f8] sm:$0xff]
  %v84 = vld [vmem:[%s1 + $0x200] sm:$0xff]
  %v85 = vld [vmem:[%s1 + $0x208] sm:$0xff]
  %v86 = vld [vmem:[%s1 + $0x210] sm:$0xff]
  %v87 = vld [vmem:[%s1 + $0x218] sm:$0xff]
  %v88 = vld [vmem:[%s1 + $0x220] sm:$0xff]
  %v89 = vld [vmem:[%s1 + $0x228] sm:$0xff]
  %v90 = vld [vmem:[%s1 + $0x230] sm:$0xff]
  %v91 = vld [vmem:[%s1 + $0x238] sm:$0xff]
  %v92 = vld [vmem:[%s1 + $0x240] sm:$0xff]
  %v93 = vld [vmem:[%s1 + $0x248] sm:$0xff]
  %v94 = vld [vmem:[%s1 + $0x250] sm:$0xff]
  %v95 = vld [vmem:[%s1 + $0x258] sm:$0xff]
  %v96 = vld [vmem:[%s1 + $0x260] sm:$0xff]
  %v97 = vld [vmem:[%s1 + $0x268] sm:$0xff]
  %v98 = vld [vmem:[%s1 + $0x270] sm:$0xff]
  %v99 = vld [vmem:[%s1 + $0x278] sm:$0xff]
  %v100 = vld [vmem:[%s1 + $0x280] sm:$0xff]
  %v101 = vld [vmem:[%s1 + $0x288] sm:$0xff]
  %v102 = vld [vmem:[%s1 + $0x290] sm:$0xff]
  %v103 = vld [vmem:[%s1 + $0x298] sm:$0xff]
  %v104 = vld [vmem:[%s1 + $0x2a0] sm:$0xff]
  %v105 = vld [vmem:[%s1 + $0x2a8] sm:$0xff]
  %v106 = vld [vmem:[%s1 + $0x2b0] sm:$0xff]
  %v107 = vld [vmem:[%s1 + $0x2b8] sm:$0xff]
  %v108 = vld [vmem:[%s1 + $0x2c0] sm:$0xff]
  %v109 = vld [vmem:[%s1 + $0x2c8] sm:$0xff]
  %v110 = vld [vmem:[%s1 + $0x2d0] sm:$0xff]
  %v111 = vld [vmem:[%s1 + $0x2d8] sm:$0xff]
  %v112 = vld [vmem:[%s1 + $0x2e0] sm:$0xff]
  %v113 = vld [vmem:[%s1 + $0x2e8] sm:$0xff]
  %v114 = vld [vmem:[%s1 + $0x2f0] sm:$0xff]
  %v115 = vld [vmem:[%s1 + $0x2f8] sm:$0xff]
  %v116 = vld [vmem:[%s1 + $0x300] sm:$0xff]
  %v117 = vld [vmem:[%s1 + $0x308] sm:$0xff]
  %v118 = vld [vmem:[%s1 + $0x310] sm:$0xff]
  %v119 = vld [vmem:[%s1 + $0x318] sm:$0xff]
  %v120 = vld [vmem:[%s1 + $0x320] sm:$0xff]
  %v121 = vld [vmem:[%s1 + $0x328] sm:$0xff]
  %v122 = vld [vmem:[%s1 + $0x330] sm:$0xff]
  %v123 = vld [vmem:[%s1 + $0x338] sm:$0xff]
  %v124 = vld [vmem:[%s1 + $0x340] sm:$0xff]
  %v125 = vld [vmem:[%s1 + $0x348] sm:$0xff]
  %v126 = vld [vmem:[%s1 + $0x350] sm:$0xff]
  %v127 = vld [vmem:[%s1 + $0x358] sm:$0xff]
  %v128 = vld [vmem:[%s1 + $0x360] sm:$0xff]
  %v129 = vld [vmem:[%s1 + $0x368] sm:$0xff]
  %v130 = vld [vmem:[%s1 + $0x370] sm:$0xff]
  %v131 = vld [vmem:[%s1 + $0x378] sm:$0xff]
  %v132 = vld [vmem:[%s1 + $0x380] sm:$0xff]
  %v133 = vld [vmem:[%s1 + $0x388] sm:$0xff]
  %v134 = vld [vmem:[%s1 + $0x390] sm:$0xff]
  %v135 = vld [vmem:[%s1 + $0x398] sm:$0xff]
  %v136 = vld [vmem:[%s1 + $0x3a0] sm:$0xff]
  %v137 = vld [vmem:[%s1 + $0x3a8] sm:$0xff]
  %v138 = vld [vmem:[%s1 + $0x3b0] sm:$0xff]
  %v139 = vld [vmem:[%s0] sm:$0xff]
  %v140 = vld [vmem:[%s0 + $0x8] sm:$0xff]
  %v141 = vld [vmem:[%s0 + $0x10] sm:$0xff]
  %v142 = vld [vmem:[%s0 + $0x18] sm:$0xff]
  %v143 = vld [vmem:[%s0 + $0x20] sm:$0xff]
  %v144 = vld [vmem:[%s0 + $0x28] sm:$0xff]
  %v145 = vld [vmem:[%s0 + $0x30] sm:$0xff]
  %v146 = vld [vmem:[%s0 + $0x38] sm:$0xff]
  %v147 = vld [vmem:[%s0 + $0x40] sm:$0xff]
  %v148 = vld [vmem:[%s0 + $0x48] sm:$0xff]
  %v149 = vld [vmem:[%s0 + $0x50] sm:$0xff]
  %v150 = vld [vmem:[%s0 + $0x58] sm:$0xff]
  %v151 = vld [vmem:[%s0 + $0x60] sm:$0xff]
  %v152 = vld [vmem:[%s0 + $0x68] sm:$0xff]
  %v153 = vld [vmem:[%s0 + $0x70] sm:$0xff]
  %v154 = vld [vmem:[%s0 + $0x78] sm:$0xff]
  %v155 = vld [vmem:[%s0 + $0x80] sm:$0xff]
  %v156 = vld [vmem:[%s0 + $0x88] sm:$0xff]
  %v157 = vld [vmem:[%s0 + $0x90] sm:$0xff]
  %v158 = vld [vmem:[%s0 + $0x98] sm:$0xff]
  %v159 = vld [vmem:[%s0 + $0xa0] sm:$0xff]
  %v160 = vld [vmem:[%s0 + $0xa8] sm:$0xff]
  %v161 = vld [vmem:[%s0 + $0xb0] sm:$0xff]
  %v162 = vld [vmem:[%s0 + $0xb8] sm:$0xff]
  %v163 = vld [vmem:[%s0 + $0xc0] sm:$0xff]
  %v164 = vld [vmem:[%s0 + $0xc8] sm:$0xff]
  %v165 = vld [vmem:[%s0 + $0xd0] sm:$0xff]
  %v166 = vld [vmem:[%s0 + $0xd8] sm:$0xff]
  %v167 = vld [vmem:[%s0 + $0xe0] sm:$0xff]
  %v168 = vld [vmem:[%s0 + $0xe8] sm:$0xff]
  %v169 = vld [vmem:[%s0 + $0xf0] sm:$0xff]
  %v170 = vld [vmem:[%s0 + $0xf8] sm:$0xff]
  %v171 = vld [vmem:[%s0 + $0x100] sm:$0xff]
  %v172 = vld [vmem:[%s0 + $0x108] sm:$0xff]
  %v173 = vld [vmem:[%s0 + $0x110] sm:$0xff]
  %v174 = vld [vmem:[%s0 + $0x118] sm:$0xff]
  %v175 = vld [vmem:[%s0 + $0x120] sm:$0xff]
  %v176 = vld [vmem:[%s0 + $0x128] sm:$0xff]
  %v177 = vld [vmem:[%s0 + $0x130] sm:$0xff]
  %v178 = vld [vmem:[%s0 + $0x138] sm:$0xff]
  %v179 = vld [vmem:[%s0 + $0x140] sm:$0xff]
  %v180 = vld [vmem:[%s0 + $0x148] sm:$0xff]
  %v181 = vld [vmem:[%s0 + $0x150] sm:$0xff]
  %v182 = vld [vmem:[%s0 + $0x158] sm:$0xff]
  %v183 = vld [vmem:[%s0 + $0x160] sm:$0xff]
  %v184 = vld [vmem:[%s0 + $0x168] sm:$0xff]
  %v185 = vld [vmem:[%s0 + $0x170] sm:$0xff]
  %v186 = vld [vmem:[%s0 + $0x178] sm:$0xff]
  %v187 = vld [vmem:[%s0 + $0x180] sm:$0xff]
  %v188 = vld [vmem:[%s0 + $0x188] sm:$0xff]
  %v189 = vld [vmem:[%s0 + $0x190] sm:$0xff]
  %v190 = vld [vmem:[%s0 + $0x198] sm:$0xff]
  %v191 = vld [vmem:[%s0 + $0x1a0] sm:$0xff]
  %v192 = vld [vmem:[%s0 + $0x1a8] sm:$0xff]
  %v193 = vld [vmem:[%s0 + $0x1b0] sm:$0xff]
  %v194 = vld [vmem:[%s0 + $0x1b8] sm:$0xff]
  %v195 = vld [vmem:[%s0 + $0x1c0] sm:$0xff]
  %v196 = vld [vmem:[%s0 + $0x1c8] sm:$0xff]
  %v197 = vld [vmem:[%s0 + $0x1d0] sm:$0xff]
  %v198 = vld [vmem:[%s0 + $0x1d8] sm:$0xff]
  %v199 = vld [vmem:[%s0 + $0x1e0] sm:$0xff]
  %v200 = vld [vmem:[%s0 + $0x1e8] sm:$0xff]
  %v201 = vld [vmem:[%s0 + $0x1f0] sm:$0xff]
  %v202 = vld [vmem:[%s0 + $0x1f8] sm:$0xff]
  %v203 = vld [vmem:[%s0 + $0x200] sm:$0xff]
  %v204 = vld [vmem:[%s0 + $0x208] sm:$0xff]
  %v205 = vld [vmem:[%s0 + $0x210] sm:$0xff]
  %v206 = vld [vmem:[%s0 + $0x218] sm:$0xff]
  %v207 = vld [vmem:[%s0 + $0x220] sm:$0xff]
  %v208 = vld [vmem:[%s0 + $0x228] sm:$0xff]
  %v209 = vld [vmem:[%s0 + $0x230] sm:$0xff]
  %v210 = vld [vmem:[%s0 + $0x238] sm:$0xff]
  %v211 = vld [vmem:[%s0 + $0x240] sm:$0xff]
  %v212 = vld [vmem:[%s0 + $0x248] sm:$0xff]
  %v213 = vld [vmem:[%s0 + $0x250] sm:$0xff]
  %v214 = vld [vmem:[%s0 + $0x258] sm:$0xff]
  %v215 = vld [vmem:[%s0 + $0x260] sm:$0xff]
  %v216 = vld [vmem:[%s0 + $0x268] sm:$0xff]
  %v217 = vld [vmem:[%s0 + $0x270] sm:$0xff]
  %v218 = vld [vmem:[%s0 + $0x278] sm:$0xff]
  %v219 = vld [vmem:[%s0 + $0x280] sm:$0xff]
  %v220 = vld [vmem:[%s0 + $0x288] sm:$0xff]
  %v221 = vld [vmem:[%s0 + $0x290] sm:$0xff]
  %v222 = vld [vmem:[%s0 + $0x298] sm:$0xff]
  %v223 = vld [vmem:[%s0 + $0x2a0] sm:$0xff]
  %v224 = vld [vmem:[%s0 + $0x2a8] sm:$0xff]
  %v225 = vld [vmem:[%s0 + $0x2b0] sm:$0xff]
  %v226 = vld [vmem:[%s0 + $0x2b8] sm:$0xff]
  %v227 = vld [vmem:[%s0 + $0x2c0] sm:$0xff]
  %v228 = vld [vmem:[%s0 + $0x2c8] sm:$0xff]
  %v229 = vld [vmem:[%s0 + $0x2d0] sm:$0xff]
  %v230 = vld [vmem:[%s0 + $0x2d8] sm:$0xff]
  %v231 = vld [vmem:[%s0 + $0x2e0] sm:$0xff]
  %v232 = vld [vmem:[%s0 + $0x2e8] sm:$0xff]
  %v233 = vld [vmem:[%s0 + $0x2f0] sm:$0xff]
  %v234 = vld [vmem:[%s0 + $0x2f8] sm:$0xff]
  %v235 = vld [vmem:[%s0 + $0x300] sm:$0xff]
  %v236 = vld [vmem:[%s0 + $0x308] sm:$0xff]
  %v237 = vld [vmem:[%s0 + $0x310] sm:$0xff]
  %v238 = vld [vmem:[%s0 + $0x318] sm:$0xff]
  %v239 = vld [vmem:[%s0 + $0x320] sm:$0xff]
  %v240 = vld [vmem:[%s0 + $0x328] sm:$0xff]
  %v241 = vld [vmem:[%s0 + $0x330] sm:$0xff]
  %v242 = vld [vmem:[%s0 + $0x338] sm:$0xff]
  %v243 = vld [vmem:[%s0 + $0x340] sm:$0xff]
  %v244 = vld [vmem:[%s0 + $0x348] sm:$0xff]
  %v245 = vld [vmem:[%s0 + $0x350] sm:$0xff]
  %v246 = vld [vmem:[%s0 + $0x358] sm:$0xff]
  %v247 = vld [vmem:[%s0 + $0x360] sm:$0xff]
  %v248 = vld [vmem:[%s0 + $0x368] sm:$0xff]
  %v249 = vld [vmem:[%s0 + $0x370] sm:$0xff]
  %v250 = vld [vmem:[%s0 + $0x378] sm:$0xff]
  %v251 = vld [vmem:[%s0 + $0x380] sm:$0xff]
  %v252 = vld [vmem:[%s0 + $0x388] sm:$0xff]
  %v253 = vld [vmem:[%s0 + $0x390] sm:$0xff]
  %v254 = vld [vmem:[%s0 + $0x398] sm:$0xff]
  %v255 = vld [vmem:[%s0 + $0x3a0] sm:$0xff]
  %v256 = vld [vmem:[%s0 + $0x3a8] sm:$0xff]
  %v257 = vld [vmem:[%s0 + $0x3b0] sm:$0xff]
  %v258 = vld [vmem:[%s0 + $0x3b8] sm:$0xff]
  %v259 = vld [vmem:[%s0 + $0x3c0] sm:$0xff]
  %v260 = vld [vmem:[%s0 + $0x3c8] sm:$0xff]
  %v261 = vld [vmem:[%s0 + $0x3d0] sm:$0xff]
  %v262 = vld [vmem:[%s0 + $0x3d8] sm:$0xff]
  %v263 = vld [vmem:[%s0 + $0x3e0] sm:$0xff]
  %v264 = vld [vmem:[%s0 + $0x3e8] sm:$0xff]
  %v265 = vld [vmem:[%s0 + $0x3f0] sm:$0xff]
  %v266 = vld [vmem:[%s0 + $0x3f8] sm:$0xff]
  %v267 = vld [vmem:[%s0 + $0x400] sm:$0xff]
  %v268 = vld [vmem:[%s0 + $0x408] sm:$0xff]
  %v269 = vld [vmem:[%s0 + $0x410] sm:$0xff]
  %v270 = vld [vmem:[%s0 + $0x418] sm:$0xff]
  %v271 = vld [vmem:[%s0 + $0x420] sm:$0xff]
  %v272 = vld [vmem:[%s0 + $0x428] sm:$0xff]
  %v273 = vld [vmem:[%s0 + $0x430] sm:$0xff]
  %v274 = vld [vmem:[%s0 + $0x438] sm:$0xff]
  %v275 = vld [vmem:[%s0 + $0x440] sm:$0xff]
  %v276 = vld [vmem:[%s0 + $0x448] sm:$0xff]
  %v277 = vld [vmem:[%s0 + $0x450] sm:$0xff]
  %v278 = vld [vmem:[%s0 + $0x458] sm:$0xff]
  %v279 = vld [vmem:[%s0 + $0x460] sm:$0xff]
  %v280 = vld [vmem:[%s0 + $0x468] sm:$0xff]
  %v281 = vld [vmem:[%s0 + $0x470] sm:$0xff]
  %v282 = vld [vmem:[%s0 + $0x478] sm:$0xff]
  %v283 = vld [vmem:[%s0 + $0x480] sm:$0xff]
  %v284 = vld [vmem:[%s0 + $0x488] sm:$0xff]
  %v285 = vld [vmem:[%s0 + $0x490] sm:$0xff]
  %v286 = vld [vmem:[%s0 + $0x498] sm:$0xff]
  %v287 = vld [vmem:[%s0 + $0x4a0] sm:$0xff]
  %v288 = vld [vmem:[%s0 + $0x4a8] sm:$0xff]
  %v289 = vld [vmem:[%s0 + $0x4b0] sm:$0xff]
  %v290 = vld [vmem:[%s0 + $0x4b8] sm:$0xff]
  %v291 = vld [vmem:[%s0 + $0x4c0] sm:$0xff]
  %v292 = vld [vmem:[%s0 + $0x4c8] sm:$0xff]
  %v293 = vld [vmem:[%s0 + $0x4d0] sm:$0xff]
  %v294 = vld [vmem:[%s0 + $0x4d8] sm:$0xff]
  %v295 = vld [vmem:[%s0 + $0x4e0] sm:$0xff]
  %v296 = vld [vmem:[%s0 + $0x4e8] sm:$0xff]
  %v297 = vld [vmem:[%s0 + $0x4f0] sm:$0xff]
  %v298 = vld [vmem:[%s0 + $0x4f8] sm:$0xff]
  %v299 = vld [vmem:[%s0 + $0x500] sm:$0xff]
  %v300 = vld [vmem:[%s0 + $0x508] sm:$0xff]
  %v301 = vld [vmem:[%s0 + $0x510] sm:$0xff]
  %v302 = vld [vmem:[%s0 + $0x518] sm:$0xff]
  %v303 = vld [vmem:[%s0 + $0x520] sm:$0xff]
  %v304 = vld [vmem:[%s0 + $0x528] sm:$0xff]
  %v305 = vld [vmem:[%s0 + $0x530] sm:$0xff]
  %v306 = vld [vmem:[%s0 + $0x538] sm:$0xff]
  %v307 = vld [vmem:[%s0 + $0x540] sm:$0xff]
  %v308 = vld [vmem:[%s0 + $0x548] sm:$0xff]
  %v309 = vld [vmem:[%s0 + $0x550] sm:$0xff]
  %v310 = vld [vmem:[%s0 + $0x558] sm:$0xff]
  %v311 = vld [vmem:[%s0 + $0x560] sm:$0xff]
  %v312 = vld [vmem:[%s0 + $0x568] sm:$0xff]
  %v313 = vld [vmem:[%s0 + $0x570] sm:$0xff]
  %v314 = vld [vmem:[%s0 + $0x578] sm:$0xff]
  %v315 = vld [vmem:[%s0 + $0x580] sm:$0xff]
  %v316 = vld [vmem:[%s0 + $0x588] sm:$0xff]
  %v317 = vld [vmem:[%s0 + $0x590] sm:$0xff]
  %v318 = vld [vmem:[%s0 + $0x598] sm:$0xff]
  %v319 = vld [vmem:[%s0 + $0x5a0] sm:$0xff]
  %v320 = vld [vmem:[%s0 + $0x5a8] sm:$0xff]
  %v321 = vld [vmem:[%s0 + $0x5b0] sm:$0xff]
  %v322 = vld [vmem:[%s0 + $0x5b8] sm:$0xff]
  %v323 = vld [vmem:[%s0 + $0x5c0] sm:$0xff]
  %v324 = vld [vmem:[%s0 + $0x5c8] sm:$0xff]
  %v325 = vld [vmem:[%s0 + $0x5d0] sm:$0xff]
  %v326 = vld [vmem:[%s0 + $0x5d8] sm:$0xff]
  %v327 = vld [vmem:[%s0 + $0x5e0] sm:$0xff]
  %v328 = vld [vmem:[%s0 + $0x5e8] sm:$0xff]
  %v329 = vld [vmem:[%s0 + $0x5f0] sm:$0xff]
  %v330 = vld [vmem:[%s0 + $0x5f8] sm:$0xff]
  %v331 = vld [vmem:[%s0 + $0x600] sm:$0xff]
  %v332 = vld [vmem:[%s0 + $0x608] sm:$0xff]
  %v333 = vld [vmem:[%s0 + $0x610] sm:$0xff]
  %v334 = vld [vmem:[%s0 + $0x618] sm:$0xff]
  %v335 = vld [vmem:[%s0 + $0x620] sm:$0xff]
  %v336 = vld [vmem:[%s0 + $0x628] sm:$0xff]
  %v337 = vld [vmem:[%s0 + $0x630] sm:$0xff]
  %v338 = vld [vmem:[%s0 + $0x638] sm:$0xff]
  %v339 = vld [vmem:[%s0 + $0x640] sm:$0xff]
  %v340 = vld [vmem:[%s0 + $0x648] sm:$0xff]
  %v341 = vld [vmem:[%s0 + $0x650] sm:$0xff]
  %v342 = vld [vmem:[%s0 + $0x658] sm:$0xff]
  %v343 = vld [vmem:[%s0 + $0x660] sm:$0xff]
  %v344 = vld [vmem:[%s0 + $0x668] sm:$0xff]
  %v345 = vld [vmem:[%s0 + $0x670] sm:$0xff]
  %v346 = vld [vmem:[%s0 + $0x678] sm:$0xff]
  %v347 = vld [vmem:[%s0 + $0x680] sm:$0xff]
  %v348 = vld [vmem:[%s0 + $0x688] sm:$0xff]
  %v349 = vld [vmem:[%s0 + $0x690] sm:$0xff]
  %v350 = vld [vmem:[%s0 + $0x698] sm:$0xff]
  %v351 = vld [vmem:[%s0 + $0x6a0] sm:$0xff]
  %v352 = vld [vmem:[%s0 + $0x6a8] sm:$0xff]
  %v353 = vld [vmem:[%s0 + $0x6b0] sm:$0xff]
  %v354 = vld [vmem:[%s0 + $0x6b8] sm:$0xff]
  %v355 = vld [vmem:[%s0 + $0x6c0] sm:$0xff]
  %v356 = vld [vmem:[%s0 + $0x6c8] sm:$0xff]
  %v357 = vld [vmem:[%s0 + $0x6d0] sm:$0xff]
  %v358 = vld [vmem:[%s0 + $0x6d8] sm:$0xff]
  %v359 = vld [vmem:[%s0 + $0x6e0] sm:$0xff]
  %v360 = vld [vmem:[%s0 + $0x6e8] sm:$0xff]
  %v361 = vld [vmem:[%s0 + $0x6f0] sm:$0xff]
  %v362 = vld [vmem:[%s0 + $0x6f8] sm:$0xff]
  %v363 = vld [vmem:[%s0 + $0x700] sm:$0xff]
  %v364 = vld [vmem:[%s0 + $0x708] sm:$0xff]
  %v365 = vld [vmem:[%s0 + $0x710] sm:$0xff]
  %v366 = vld [vmem:[%s0 + $0x718] sm:$0xff]
  %v367 = vld [vmem:[%s0 + $0x720] sm:$0xff]
  %v368 = vld [vmem:[%s0 + $0x728] sm:$0xff]
  %v369 = vld [vmem:[%s0 + $0x730] sm:$0xff]
  %v370 = vld [vmem:[%s0 + $0x738] sm:$0xff]
  %v371 = vld [vmem:[%s0 + $0x740] sm:$0xff]
  %v372 = vld [vmem:[%s0 + $0x748] sm:$0xff]
  %v373 = vld [vmem:[%s0 + $0x750] sm:$0xff]
  %v374 = vld [vmem:[%s0 + $0x758] sm:$0xff]
  %v375 = vld [vmem:[%s0 + $0x760] sm:$0xff]
  %v376 = vld [vmem:[%s0 + $0x768] sm:$0xff]
  %v377 = vld [vmem:[%s0 + $0x770] sm:$0xff]
  %v378 = vld [vmem:[%s0 + $0x778] sm:$0xff]
  %v379 = vld [vmem:[%s0 + $0x780] sm:$0xff]
  %v380 = vld [vmem:[%s0 + $0x788] sm:$0xff]
  %v381 = vld [vmem:[%s0 + $0x790] sm:$0xff]
  %v382 = vld [vmem:[%s0 + $0x798] sm:$0xff]
  %v383 = vld [vmem:[%s0 + $0x7a0] sm:$0xff]
  %v384 = vld [vmem:[%s0 + $0x7a8] sm:$0xff]
  %v385 = vld [vmem:[%s0 + $0x7b0] sm:$0xff]
  %v386 = vld [vmem:[%s0 + $0x7b8] sm:$0xff]
  %v387 = vld [vmem:[%s0 + $0x7c0] sm:$0xff]
  %v388 = vld [vmem:[%s0 + $0x7c8] sm:$0xff]
  %v389 = vld [vmem:[%s0 + $0x7d0] sm:$0xff]
  %v390 = vld [vmem:[%s0 + $0x7d8] sm:$0xff]
  %v391 = vld [vmem:[%s0 + $0x7e0] sm:$0xff]
  %v392 = vld [vmem:[%s0 + $0x7e8] sm:$0xff]
  %v393 = vld [vmem:[%s0 + $0x7f0] sm:$0xff]
  %v394 = vld [vmem:[%s0 + $0x7f8] sm:$0xff]
  %v395 = vld [vmem:[%s0 + $0x800] sm:$0xff]
  %v396 = vld [vmem:[%s0 + $0x808] sm:$0xff]
  %v397 = vld [vmem:[%s0 + $0x810] sm:$0xff]
  %v398 = vld [vmem:[%s0 + $0x818] sm:$0xff]
  %v399 = vld [vmem:[%s0 + $0x820] sm:$0xff]
  %v400 = vld [vmem:[%s0 + $0x828] sm:$0xff]
  %v401 = vld [vmem:[%s0 + $0x830] sm:$0xff]
  %v402 = vld [vmem:[%s0 + $0x838] sm:$0xff]
  %v403 = vld [vmem:[%s0 + $0x840] sm:$0xff]
  %v404 = vld [vmem:[%s0 + $0x848] sm:$0xff]
  %v405 = vld [vmem:[%s0 + $0x850] sm:$0xff]
  %v406 = vld [vmem:[%s0 + $0x858] sm:$0xff]
  %v407 = vld [vmem:[%s0 + $0x860] sm:$0xff]
  %v408 = vld [vmem:[%s0 + $0x868] sm:$0xff]
  %v409 = vld [vmem:[%s0 + $0x870] sm:$0xff]
  %v410 = vld [vmem:[%s0 + $0x878] sm:$0xff]
  %v411 = vld [vmem:[%s0 + $0x880] sm:$0xff]
  %v412 = vld [vmem:[%s0 + $0x888] sm:$0xff]
  %v413 = vld [vmem:[%s0 + $0x890] sm:$0xff]
  %v414 = vld [vmem:[%s0 + $0x898] sm:$0xff]
  %v415 = vld [vmem:[%s0 + $0x8a0] sm:$0xff]
  %v416 = vld [vmem:[%s0 + $0x8a8] sm:$0xff]
  %v417 = vld [vmem:[%s0 + $0x8b0] sm:$0xff]
  %v418 = vld [vmem:[%s0 + $0x8b8] sm:$0xff]
  %v419 = vld [vmem:[%s0 + $0x8c0] sm:$0xff]
  %v420 = vld [vmem:[%s0 + $0x8c8] sm:$0xff]
  %v421 = vld [vmem:[%s0 + $0x8d0] sm:$0xff]
  %v422 = vld [vmem:[%s0 + $0x8d8] sm:$0xff]
  %v423 = vld [vmem:[%s0 + $0x8e0] sm:$0xff]
  %v424 = vld [vmem:[%s0 + $0x8e8] sm:$0xff]
  %v425 = vld [vmem:[%s0 + $0x8f0] sm:$0xff]
  %v426 = vld [vmem:[%s0 + $0x8f8] sm:$0xff]
  %v427 = vld [vmem:[%s0 + $0x900] sm:$0xff]
  %v428 = vld [vmem:[%s0 + $0x908] sm:$0xff]
  %v429 = vld [vmem:[%s0 + $0x910] sm:$0xff]
  %v430 = vld [vmem:[%s0 + $0x918] sm:$0xff]
  %v431 = vld [vmem:[%s0 + $0x920] sm:$0xff]
  %v432 = vld [vmem:[%s0 + $0x928] sm:$0xff]
  %v433 = vld [vmem:[%s0 + $0x930] sm:$0xff]
  %v434 = vld [vmem:[%s0 + $0x938] sm:$0xff]
  %v435 = vld [vmem:[%s0 + $0x940] sm:$0xff]
  %v436 = vld [vmem:[%s0 + $0x948] sm:$0xff]
  %v437 = vld [vmem:[%s0 + $0x950] sm:$0xff]
  %v438 = vld [vmem:[%s0 + $0x958] sm:$0xff]
  %vm439 = vcmask 261120
  %v441 = vsel %vm439, %v26, 0
  %v444 = vsel %vm439, %v33, 0
  %v447 = vsel %vm439, %v40, 0
  %v450 = vsel %vm439, %v47, 0
  %v453 = vsel %vm439, %v54, 0
  %v456 = vsel %vm439, %v61, 0
  %v459 = vsel %vm439, %v68, 0
  %v462 = vsel %vm439, %v75, 0
  %v465 = vsel %vm439, %v82, 0
  %v468 = vsel %vm439, %v89, 0
  %v471 = vsel %vm439, %v96, 0
  %v474 = vsel %vm439, %v103, 0
  %v477 = vsel %vm439, %v110, 0
  %v480 = vsel %vm439, %v117, 0
  %v483 = vsel %vm439, %v124, 0
  %v486 = vsel %vm439, %v131, 0
  %v489 = vsel %vm439, %v138, 0
  %491 = vmatpush.msra.mxu0 %v184
  %492 = vmatpush.msra.mxu0 %v181
  %493 = vmatpush.msra.mxu0 %v178
  %494 = vmatpush.msra.mxu0 %v175
  %495 = vmatpush.msra.mxu0 %v172
  %496 = vmatpush.msra.mxu0 %v169
  %497 = vmatpush.msra.mxu0 %v166
  %498 = vmatpush.msra.mxu0 %v163
  %499 = vmatpush.msra.mxu0 %v160
  %500 = vmatpush.msra.mxu0 %v157
  %501 = vmatpush.msra.mxu0 %v154
  %502 = vmatpush.msra.mxu0 %v151
  %503 = vmatpush.msra.mxu0 %v148
  %504 = vmatpush.msra.mxu0 %v145
  %505 = vmatpush.msra.mxu0 %v142
  %506 = vmatpush.msra.mxu0 %v139
  %507 = vmatmul.f32.gmra.mxu0 %v20
  %v508 = vpop.f32.mrf.mxu0
  %v509 = vadd.f32 0.0, %v508
  %510 = vmatmul.f32.gmra.mxu0 %v27
  %v511 = vpop.f32.mrf.mxu0
  %v512 = vadd.f32 0.0, %v511
  %513 = vmatmul.f32.gmra.mxu0 %v34
  %v514 = vpop.f32.mrf.mxu0
  %v515 = vadd.f32 0.0, %v514
  %516 = vmatmul.f32.gmra.mxu0 %v41
  %v517 = vpop.f32.mrf.mxu0
  %v518 = vadd.f32 0.0, %v517
  %519 = vmatmul.f32.gmra.mxu0 %v48
  %v520 = vpop.f32.mrf.mxu0
  %v521 = vadd.f32 0.0, %v520
  %522 = vmatmul.f32.gmra.mxu0 %v55
  %v523 = vpop.f32.mrf.mxu0
  %v524 = vadd.f32 0.0, %v523
  %525 = vmatmul.f32.gmra.mxu0 %v62
  %v526 = vpop.f32.mrf.mxu0
  %v527 = vadd.f32 0.0, %v526
  %528 = vmatmul.f32.gmra.mxu0 %v69
  %v529 = vpop.f32.mrf.mxu0
  %v530 = vadd.f32 0.0, %v529
  %531 = vmatmul.f32.gmra.mxu0 %v76
  %v532 = vpop.f32.mrf.mxu0
  %v533 = vadd.f32 0.0, %v532
  %534 = vmatmul.f32.gmra.mxu0 %v83
  %v535 = vpop.f32.mrf.mxu0
  %v536 = vadd.f32 0.0, %v535
  %537 = vmatmul.f32.gmra.mxu0 %v90
  %v538 = vpop.f32.mrf.mxu0
  %v539 = vadd.f32 0.0, %v538
  %540 = vmatmul.f32.gmra.mxu0 %v97
  %v541 = vpop.f32.mrf.mxu0
  %v542 = vadd.f32 0.0, %v541
  %543 = vmatmul.f32.gmra.mxu0 %v104
  %v544 = vpop.f32.mrf.mxu0
  %v545 = vadd.f32 0.0, %v544
  %546 = vmatmul.f32.gmra.mxu0 %v111
  %v547 = vpop.f32.mrf.mxu0
  %v548 = vadd.f32 0.0, %v547
  %549 = vmatmul.f32.gmra.mxu0 %v118
  %v550 = vpop.f32.mrf.mxu0
  %v551 = vadd.f32 0.0, %v550
  %552 = vmatmul.f32.gmra.mxu0 %v125
  %v553 = vpop.f32.mrf.mxu0
  %v554 = vadd.f32 0.0, %v553
  %555 = vmatmul.f32.gmra.mxu0 %v132
  %v556 = vpop.f32.mrf.mxu0
  %v557 = vadd.f32 0.0, %v556
  %558 = vdwg.mxu0
  %559 = vmatpush.msra.mxu0 %v232
  %560 = vmatpush.msra.mxu0 %v229
  %561 = vmatpush.msra.mxu0 %v226
  %562 = vmatpush.msra.mxu0 %v223
  %563 = vmatpush.msra.mxu0 %v220
  %564 = vmatpush.msra.mxu0 %v217
  %565 = vmatpush.msra.mxu0 %v214
  %566 = vmatpush.msra.mxu0 %v211
  %567 = vmatpush.msra.mxu0 %v208
  %568 = vmatpush.msra.mxu0 %v205
  %569 = vmatpush.msra.mxu0 %v202
  %570 = vmatpush.msra.mxu0 %v199
  %571 = vmatpush.msra.mxu0 %v196
  %572 = vmatpush.msra.mxu0 %v193
  %573 = vmatpush.msra.mxu0 %v190
  %574 = vmatpush.msra.mxu0 %v187
  %575 = vmatmul.f32.gmra.mxu0 %v21
  %v576 = vpop.f32.mrf.mxu0
  %v577 = vadd.f32 %v509, %v576
  %578 = vmatmul.f32.gmra.mxu0 %v28
  %v579 = vpop.f32.mrf.mxu0
  %v580 = vadd.f32 %v512, %v579
  %581 = vmatmul.f32.gmra.mxu0 %v35
  %v582 = vpop.f32.mrf.mxu0
  %v583 = vadd.f32 %v515, %v582
  %584 = vmatmul.f32.gmra.mxu0 %v42
  %v585 = vpop.f32.mrf.mxu0
  %v586 = vadd.f32 %v518, %v585
  %587 = vmatmul.f32.gmra.mxu0 %v49
  %v588 = vpop.f32.mrf.mxu0
  %v589 = vadd.f32 %v521, %v588
  %590 = vmatmul.f32.gmra.mxu0 %v56
  %v591 = vpop.f32.mrf.mxu0
  %v592 = vadd.f32 %v524, %v591
  %593 = vmatmul.f32.gmra.mxu0 %v63
  %v594 = vpop.f32.mrf.mxu0
  %v595 = vadd.f32 %v527, %v594
  %596 = vmatmul.f32.gmra.mxu0 %v70
  %v597 = vpop.f32.mrf.mxu0
  %v598 = vadd.f32 %v530, %v597
  %599 = vmatmul.f32.gmra.mxu0 %v77
  %v600 = vpop.f32.mrf.mxu0
  %v601 = vadd.f32 %v533, %v600
  %602 = vmatmul.f32.gmra.mxu0 %v84
  %v603 = vpop.f32.mrf.mxu0
  %v604 = vadd.f32 %v536, %v603
  %605 = vmatmul.f32.gmra.mxu0 %v91
  %v606 = vpop.f32.mrf.mxu0
  %v607 = vadd.f32 %v539, %v606
  %608 = vmatmul.f32.gmra.mxu0 %v98
  %v609 = vpop.f32.mrf.mxu0
  %v610 = vadd.f32 %v542, %v609
  %611 = vmatmul.f32.gmra.mxu0 %v105
  %v612 = vpop.f32.mrf.mxu0
  %v613 = vadd.f32 %v545, %v612
  %614 = vmatmul.f32.gmra.mxu0 %v112
  %v615 = vpop.f32.mrf.mxu0
  %v616 = vadd.f32 %v548, %v615
  %617 = vmatmul.f32.gmra.mxu0 %v119
  %v618 = vpop.f32.mrf.mxu0
  %v619 = vadd.f32 %v551, %v618
  %620 = vmatmul.f32.gmra.mxu0 %v126
  %v621 = vpop.f32.mrf.mxu0
  %v622 = vadd.f32 %v554, %v621
  %623 = vmatmul.f32.gmra.mxu0 %v133
  %v624 = vpop.f32.mrf.mxu0
  %v625 = vadd.f32 %v557, %v624
  %626 = vdwg.mxu0
  %627 = vmatpush.msra.mxu0 %v280
  %628 = vmatpush.msra.mxu0 %v277
  %629 = vmatpush.msra.mxu0 %v274
  %630 = vmatpush.msra.mxu0 %v271
  %631 = vmatpush.msra.mxu0 %v268
  %632 = vmatpush.msra.mxu0 %v265
  %633 = vmatpush.msra.mxu0 %v262
  %634 = vmatpush.msra.mxu0 %v259
  %635 = vmatpush.msra.mxu0 %v256
  %636 = vmatpush.msra.mxu0 %v253
  %637 = vmatpush.msra.mxu0 %v250
  %638 = vmatpush.msra.mxu0 %v247
  %639 = vmatpush.msra.mxu0 %v244
  %640 = vmatpush.msra.mxu0 %v241
  %641 = vmatpush.msra.mxu0 %v238
  %642 = vmatpush.msra.mxu0 %v235
  %643 = vmatmul.f32.gmra.mxu0 %v22
  %v644 = vpop.f32.mrf.mxu0
  %v645 = vadd.f32 %v577, %v644
  %646 = vmatmul.f32.gmra.mxu0 %v29
  %v647 = vpop.f32.mrf.mxu0
  %v648 = vadd.f32 %v580, %v647
  %649 = vmatmul.f32.gmra.mxu0 %v36
  %v650 = vpop.f32.mrf.mxu0
  %v651 = vadd.f32 %v583, %v650
  %652 = vmatmul.f32.gmra.mxu0 %v43
  %v653 = vpop.f32.mrf.mxu0
  %v654 = vadd.f32 %v586, %v653
  %655 = vmatmul.f32.gmra.mxu0 %v50
  %v656 = vpop.f32.mrf.mxu0
  %v657 = vadd.f32 %v589, %v656
  %658 = vmatmul.f32.gmra.mxu0 %v57
  %v659 = vpop.f32.mrf.mxu0
  %v660 = vadd.f32 %v592, %v659
  %661 = vmatmul.f32.gmra.mxu0 %v64
  %v662 = vpop.f32.mrf.mxu0
  %v663 = vadd.f32 %v595, %v662
  %664 = vmatmul.f32.gmra.mxu0 %v71
  %v665 = vpop.f32.mrf.mxu0
  %v666 = vadd.f32 %v598, %v665
  %667 = vmatmul.f32.gmra.mxu0 %v78
  %v668 = vpop.f32.mrf.mxu0
  %v669 = vadd.f32 %v601, %v668
  %670 = vmatmul.f32.gmra.mxu0 %v85
  %v671 = vpop.f32.mrf.mxu0
  %v672 = vadd.f32 %v604, %v671
  %673 = vmatmul.f32.gmra.mxu0 %v92
  %v674 = vpop.f32.mrf.mxu0
  %v675 = vadd.f32 %v607, %v674
  %676 = vmatmul.f32.gmra.mxu0 %v99
  %v677 = vpop.f32.mrf.mxu0
  %v678 = vadd.f32 %v610, %v677
  %679 = vmatmul.f32.gmra.mxu0 %v106
  %v680 = vpop.f32.mrf.mxu0
  %v681 = vadd.f32 %v613, %v680
  %682 = vmatmul.f32.gmra.mxu0 %v113
  %v683 = vpop.f32.mrf.mxu0
  %v684 = vadd.f32 %v616, %v683
  %685 = vmatmul.f32.gmra.mxu0 %v120
  %v686 = vpop.f32.mrf.mxu0
  %v687 = vadd.f32 %v619, %v686
  %688 = vmatmul.f32.gmra.mxu0 %v127
  %v689 = vpop.f32.mrf.mxu0
  %v690 = vadd.f32 %v622, %v689
  %691 = vmatmul.f32.gmra.mxu0 %v134
  %v692 = vpop.f32.mrf.mxu0
  %v693 = vadd.f32 %v625, %v692
  %694 = vdwg.mxu0
  %695 = vmatpush.msra.mxu0 %v328
  %696 = vmatpush.msra.mxu0 %v325
  %697 = vmatpush.msra.mxu0 %v322
  %698 = vmatpush.msra.mxu0 %v319
  %699 = vmatpush.msra.mxu0 %v316
  %700 = vmatpush.msra.mxu0 %v313
  %701 = vmatpush.msra.mxu0 %v310
  %702 = vmatpush.msra.mxu0 %v307
  %703 = vmatpush.msra.mxu0 %v304
  %704 = vmatpush.msra.mxu0 %v301
  %705 = vmatpush.msra.mxu0 %v298
  %706 = vmatpush.msra.mxu0 %v295
  %707 = vmatpush.msra.mxu0 %v292
  %708 = vmatpush.msra.mxu0 %v289
  %709 = vmatpush.msra.mxu0 %v286
  %710 = vmatpush.msra.mxu0 %v283
  %711 = vmatmul.f32.gmra.mxu0 %v23
  %v712 = vpop.f32.mrf.mxu0
  %v713 = vadd.f32 %v645, %v712
  %714 = vmatmul.f32.gmra.mxu0 %v30
  %v715 = vpop.f32.mrf.mxu0
  %v716 = vadd.f32 %v648, %v715
  %717 = vmatmul.f32.gmra.mxu0 %v37
  %v718 = vpop.f32.mrf.mxu0
  %v719 = vadd.f32 %v651, %v718
  %720 = vmatmul.f32.gmra.mxu0 %v44
  %v721 = vpop.f32.mrf.mxu0
  %v722 = vadd.f32 %v654, %v721
  %723 = vmatmul.f32.gmra.mxu0 %v51
  %v724 = vpop.f32.mrf.mxu0
  %v725 = vadd.f32 %v657, %v724
  %726 = vmatmul.f32.gmra.mxu0 %v58
  %v727 = vpop.f32.mrf.mxu0
  %v728 = vadd.f32 %v660, %v727
  %729 = vmatmul.f32.gmra.mxu0 %v65
  %v730 = vpop.f32.mrf.mxu0
  %v731 = vadd.f32 %v663, %v730
  %732 = vmatmul.f32.gmra.mxu0 %v72
  %v733 = vpop.f32.mrf.mxu0
  %v734 = vadd.f32 %v666, %v733
  %735 = vmatmul.f32.gmra.mxu0 %v79
  %v736 = vpop.f32.mrf.mxu0
  %v737 = vadd.f32 %v669, %v736
  %738 = vmatmul.f32.gmra.mxu0 %v86
  %v739 = vpop.f32.mrf.mxu0
  %v740 = vadd.f32 %v672, %v739
  %741 = vmatmul.f32.gmra.mxu0 %v93
  %v742 = vpop.f32.mrf.mxu0
  %v743 = vadd.f32 %v675, %v742
  %744 = vmatmul.f32.gmra.mxu0 %v100
  %v745 = vpop.f32.mrf.mxu0
  %v746 = vadd.f32 %v678, %v745
  %747 = vmatmul.f32.gmra.mxu0 %v107
  %v748 = vpop.f32.mrf.mxu0
  %v749 = vadd.f32 %v681, %v748
  %750 = vmatmul.f32.gmra.mxu0 %v114
  %v751 = vpop.f32.mrf.mxu0
  %v752 = vadd.f32 %v684, %v751
  %753 = vmatmul.f32.gmra.mxu0 %v121
  %v754 = vpop.f32.mrf.mxu0
  %v755 = vadd.f32 %v687, %v754
  %756 = vmatmul.f32.gmra.mxu0 %v128
  %v757 = vpop.f32.mrf.mxu0
  %v758 = vadd.f32 %v690, %v757
  %759 = vmatmul.f32.gmra.mxu0 %v135
  %v760 = vpop.f32.mrf.mxu0
  %v761 = vadd.f32 %v693, %v760
  %762 = vdwg.mxu0
  %763 = vmatpush.msra.mxu0 %v376
  %764 = vmatpush.msra.mxu0 %v373
  %765 = vmatpush.msra.mxu0 %v370
  %766 = vmatpush.msra.mxu0 %v367
  %767 = vmatpush.msra.mxu0 %v364
  %768 = vmatpush.msra.mxu0 %v361
  %769 = vmatpush.msra.mxu0 %v358
  %770 = vmatpush.msra.mxu0 %v355
  %771 = vmatpush.msra.mxu0 %v352
  %772 = vmatpush.msra.mxu0 %v349
  %773 = vmatpush.msra.mxu0 %v346
  %774 = vmatpush.msra.mxu0 %v343
  %775 = vmatpush.msra.mxu0 %v340
  %776 = vmatpush.msra.mxu0 %v337
  %777 = vmatpush.msra.mxu0 %v334
  %778 = vmatpush.msra.mxu0 %v331
  %779 = vmatmul.f32.gmra.mxu0 %v24
  %v780 = vpop.f32.mrf.mxu0
  %v781 = vadd.f32 %v713, %v780
  %782 = vmatmul.f32.gmra.mxu0 %v31
  %v783 = vpop.f32.mrf.mxu0
  %v784 = vadd.f32 %v716, %v783
  %785 = vmatmul.f32.gmra.mxu0 %v38
  %v786 = vpop.f32.mrf.mxu0
  %v787 = vadd.f32 %v719, %v786
  %788 = vmatmul.f32.gmra.mxu0 %v45
  %v789 = vpop.f32.mrf.mxu0
  %v790 = vadd.f32 %v722, %v789
  %791 = vmatmul.f32.gmra.mxu0 %v52
  %v792 = vpop.f32.mrf.mxu0
  %v793 = vadd.f32 %v725, %v792
  %794 = vmatmul.f32.gmra.mxu0 %v59
  %v795 = vpop.f32.mrf.mxu0
  %v796 = vadd.f32 %v728, %v795
  %797 = vmatmul.f32.gmra.mxu0 %v66
  %v798 = vpop.f32.mrf.mxu0
  %v799 = vadd.f32 %v731, %v798
  %800 = vmatmul.f32.gmra.mxu0 %v73
  %v801 = vpop.f32.mrf.mxu0
  %v802 = vadd.f32 %v734, %v801
  %803 = vmatmul.f32.gmra.mxu0 %v80
  %v804 = vpop.f32.mrf.mxu0
  %v805 = vadd.f32 %v737, %v804
  %806 = vmatmul.f32.gmra.mxu0 %v87
  %v807 = vpop.f32.mrf.mxu0
  %v808 = vadd.f32 %v740, %v807
  %809 = vmatmul.f32.gmra.mxu0 %v94
  %v810 = vpop.f32.mrf.mxu0
  %v811 = vadd.f32 %v743, %v810
  %812 = vmatmul.f32.gmra.mxu0 %v101
  %v813 = vpop.f32.mrf.mxu0
  %v814 = vadd.f32 %v746, %v813
  %815 = vmatmul.f32.gmra.mxu0 %v108
  %v816 = vpop.f32.mrf.mxu0
  %v817 = vadd.f32 %v749, %v816
  %818 = vmatmul.f32.gmra.mxu0 %v115
  %v819 = vpop.f32.mrf.mxu0
  %v820 = vadd.f32 %v752, %v819
  %821 = vmatmul.f32.gmra.mxu0 %v122
  %v822 = vpop.f32.mrf.mxu0
  %v823 = vadd.f32 %v755, %v822
  %824 = vmatmul.f32.gmra.mxu0 %v129
  %v825 = vpop.f32.mrf.mxu0
  %v826 = vadd.f32 %v758, %v825
  %827 = vmatmul.f32.gmra.mxu0 %v136
  %v828 = vpop.f32.mrf.mxu0
  %v829 = vadd.f32 %v761, %v828
  %830 = vdwg.mxu0
  %831 = vmatpush.msra.mxu0 %v424
  %832 = vmatpush.msra.mxu0 %v421
  %833 = vmatpush.msra.mxu0 %v418
  %834 = vmatpush.msra.mxu0 %v415
  %835 = vmatpush.msra.mxu0 %v412
  %836 = vmatpush.msra.mxu0 %v409
  %837 = vmatpush.msra.mxu0 %v406
  %838 = vmatpush.msra.mxu0 %v403
  %839 = vmatpush.msra.mxu0 %v400
  %840 = vmatpush.msra.mxu0 %v397
  %841 = vmatpush.msra.mxu0 %v394
  %842 = vmatpush.msra.mxu0 %v391
  %843 = vmatpush.msra.mxu0 %v388
  %844 = vmatpush.msra.mxu0 %v385
  %845 = vmatpush.msra.mxu0 %v382
  %846 = vmatpush.msra.mxu0 %v379
  %847 = vmatmul.f32.gmra.mxu0 %v25
  %v848 = vpop.f32.mrf.mxu0
  %v849 = vadd.f32 %v781, %v848
  %850 = vmatmul.f32.gmra.mxu0 %v32
  %v851 = vpop.f32.mrf.mxu0
  %v852 = vadd.f32 %v784, %v851
  %853 = vmatmul.f32.gmra.mxu0 %v39
  %v854 = vpop.f32.mrf.mxu0
  %v855 = vadd.f32 %v787, %v854
  %856 = vmatmul.f32.gmra.mxu0 %v46
  %v857 = vpop.f32.mrf.mxu0
  %v858 = vadd.f32 %v790, %v857
  %859 = vmatmul.f32.gmra.mxu0 %v53
  %v860 = vpop.f32.mrf.mxu0
  %v861 = vadd.f32 %v793, %v860
  %862 = vmatmul.f32.gmra.mxu0 %v60
  %v863 = vpop.f32.mrf.mxu0
  %v864 = vadd.f32 %v796, %v863
  %865 = vmatmul.f32.gmra.mxu0 %v67
  %v866 = vpop.f32.mrf.mxu0
  %v867 = vadd.f32 %v799, %v866
  %868 = vmatmul.f32.gmra.mxu0 %v74
  %v869 = vpop.f32.mrf.mxu0
  %v870 = vadd.f32 %v802, %v869
  %871 = vmatmul.f32.gmra.mxu0 %v81
  %v872 = vpop.f32.mrf.mxu0
  %v873 = vadd.f32 %v805, %v872
  %874 = vmatmul.f32.gmra.mxu0 %v88
  %v875 = vpop.f32.mrf.mxu0
  %v876 = vadd.f32 %v808, %v875
  %877 = vmatmul.f32.gmra.mxu0 %v95
  %v878 = vpop.f32.mrf.mxu0
  %v879 = vadd.f32 %v811, %v878
  %880 = vmatmul.f32.gmra.mxu0 %v102
  %v881 = vpop.f32.mrf.mxu0
  %v882 = vadd.f32 %v814, %v881
  %883 = vmatmul.f32.gmra.mxu0 %v109
  %v884 = vpop.f32.mrf.mxu0
  %v885 = vadd.f32 %v817, %v884
  %886 = vmatmul.f32.gmra.mxu0 %v116
  %v887 = vpop.f32.mrf.mxu0
  %v888 = vadd.f32 %v820, %v887
  %889 = vmatmul.f32.gmra.mxu0 %v123
  %v890 = vpop.f32.mrf.mxu0
  %v891 = vadd.f32 %v823, %v890
  %892 = vmatmul.f32.gmra.mxu0 %v130
  %v893 = vpop.f32.mrf.mxu0
  %v894 = vadd.f32 %v826, %v893
  %895 = vmatmul.f32.gmra.mxu0 %v137
  %v896 = vpop.f32.mrf.mxu0
  %v897 = vadd.f32 %v829, %v896
  %898 = vdwg.mxu0
  %899 = vmatpush.msra.mxu0 0.0
  %900 = vmatpush.msra.mxu0 0.0
  %901 = vmatpush.msra.mxu0 0.0
  %902 = vmatpush.msra.mxu0 0.0
  %903 = vmatpush.msra.mxu0 0.0
  %904 = vmatpush.msra.mxu0 0.0
  %905 = vmatpush.msra.mxu0 0.0
  %906 = vmatpush.msra.mxu0 0.0
  %907 = vmatpush.msra.mxu0 0.0
  %908 = vmatpush.msra.mxu0 0.0
  %909 = vmatpush.msra.mxu0 0.0
  %910 = vmatpush.msra.mxu0 0.0
  %911 = vmatpush.msra.mxu0 %v436
  %912 = vmatpush.msra.mxu0 %v433
  %913 = vmatpush.msra.mxu0 %v430
  %914 = vmatpush.msra.mxu0 %v427
  %915 = vmatmul.f32.gmra.mxu0 %v441
  %v916 = vpop.f32.mrf.mxu0
  %v917 = vadd.f32 %v849, %v916
  %918 = vmatmul.f32.gmra.mxu0 %v444
  %v919 = vpop.f32.mrf.mxu0
  %v920 = vadd.f32 %v852, %v919
  %921 = vmatmul.f32.gmra.mxu0 %v447
  %v922 = vpop.f32.mrf.mxu0
  %v923 = vadd.f32 %v855, %v922
  %924 = vmatmul.f32.gmra.mxu0 %v450
  %v925 = vpop.f32.mrf.mxu0
  %v926 = vadd.f32 %v858, %v925
  %927 = vmatmul.f32.gmra.mxu0 %v453
  %v928 = vpop.f32.mrf.mxu0
  %v929 = vadd.f32 %v861, %v928
  %930 = vmatmul.f32.gmra.mxu0 %v456
  %v931 = vpop.f32.mrf.mxu0
  %v932 = vadd.f32 %v864, %v931
  %933 = vmatmul.f32.gmra.mxu0 %v459
  %v934 = vpop.f32.mrf.mxu0
  %v935 = vadd.f32 %v867, %v934
  %936 = vmatmul.f32.gmra.mxu0 %v462
  %v937 = vpop.f32.mrf.mxu0
  %v938 = vadd.f32 %v870, %v937
  %939 = vmatmul.f32.gmra.mxu0 %v465
  %v940 = vpop.f32.mrf.mxu0
  %v941 = vadd.f32 %v873, %v940
  %942 = vmatmul.f32.gmra.mxu0 %v468
  %v943 = vpop.f32.mrf.mxu0
  %v944 = vadd.f32 %v876, %v943
  %945 = vmatmul.f32.gmra.mxu0 %v471
  %v946 = vpop.f32.mrf.mxu0
  %v947 = vadd.f32 %v879, %v946
  %948 = vmatmul.f32.gmra.mxu0 %v474
  %v949 = vpop.f32.mrf.mxu0
  %v950 = vadd.f32 %v882, %v949
  %951 = vmatmul.f32.gmra.mxu0 %v477
  %v952 = vpop.f32.mrf.mxu0
  %v953 = vadd.f32 %v885, %v952
  %954 = vmatmul.f32.gmra.mxu0 %v480
  %v955 = vpop.f32.mrf.mxu0
  %v956 = vadd.f32 %v888, %v955
  %957 = vmatmul.f32.gmra.mxu0 %v483
  %v958 = vpop.f32.mrf.mxu0
  %v959 = vadd.f32 %v891, %v958
  %960 = vmatmul.f32.gmra.mxu0 %v486
  %v961 = vpop.f32.mrf.mxu0
  %v962 = vadd.f32 %v894, %v961
  %963 = vmatmul.f32.gmra.mxu0 %v489
  %v964 = vpop.f32.mrf.mxu0
  %v965 = vadd.f32 %v897, %v964
  %966 = vdwg.mxu0
  %967 = vmatpush.msra.mxu0 %v185
  %968 = vmatpush.msra.mxu0 %v182
  %969 = vmatpush.msra.mxu0 %v179
  %970 = vmatpush.msra.mxu0 %v176
  %971 = vmatpush.msra.mxu0 %v173
  %972 = vmatpush.msra.mxu0 %v170
  %973 = vmatpush.msra.mxu0 %v167
  %974 = vmatpush.msra.mxu0 %v164
  %975 = vmatpush.msra.mxu0 %v161
  %976 = vmatpush.msra.mxu0 %v158
  %977 = vmatpush.msra.mxu0 %v155
  %978 = vmatpush.msra.mxu0 %v152
  %979 = vmatpush.msra.mxu0 %v149
  %980 = vmatpush.msra.mxu0 %v146
  %981 = vmatpush.msra.mxu0 %v143
  %982 = vmatpush.msra.mxu0 %v140
  %983 = vmatmul.f32.gmra.mxu0 %v20
  %v984 = vpop.f32.mrf.mxu0
  %v985 = vadd.f32 0.0, %v984
  %986 = vmatmul.f32.gmra.mxu0 %v27
  %v987 = vpop.f32.mrf.mxu0
  %v988 = vadd.f32 0.0, %v987
  %989 = vmatmul.f32.gmra.mxu0 %v34
  %v990 = vpop.f32.mrf.mxu0
  %v991 = vadd.f32 0.0, %v990
  %992 = vmatmul.f32.gmra.mxu0 %v41
  %v993 = vpop.f32.mrf.mxu0
  %v994 = vadd.f32 0.0, %v993
  %995 = vmatmul.f32.gmra.mxu0 %v48
  %v996 = vpop.f32.mrf.mxu0
  %v997 = vadd.f32 0.0, %v996
  %998 = vmatmul.f32.gmra.mxu0 %v55
  %v999 = vpop.f32.mrf.mxu0
  %v1000 = vadd.f32 0.0, %v999
  %1001 = vmatmul.f32.gmra.mxu0 %v62
  %v1002 = vpop.f32.mrf.mxu0
  %v1003 = vadd.f32 0.0, %v1002
  %1004 = vmatmul.f32.gmra.mxu0 %v69
  %v1005 = vpop.f32.mrf.mxu0
  %v1006 = vadd.f32 0.0, %v1005
  %1007 = vmatmul.f32.gmra.mxu0 %v76
  %v1008 = vpop.f32.mrf.mxu0
  %v1009 = vadd.f32 0.0, %v1008
  %1010 = vmatmul.f32.gmra.mxu0 %v83
  %v1011 = vpop.f32.mrf.mxu0
  %v1012 = vadd.f32 0.0, %v1011
  %1013 = vmatmul.f32.gmra.mxu0 %v90
  %v1014 = vpop.f32.mrf.mxu0
  %v1015 = vadd.f32 0.0, %v1014
  %1016 = vmatmul.f32.gmra.mxu0 %v97
  %v1017 = vpop.f32.mrf.mxu0
  %v1018 = vadd.f32 0.0, %v1017
  %1019 = vmatmul.f32.gmra.mxu0 %v104
  %v1020 = vpop.f32.mrf.mxu0
  %v1021 = vadd.f32 0.0, %v1020
  %1022 = vmatmul.f32.gmra.mxu0 %v111
  %v1023 = vpop.f32.mrf.mxu0
  %v1024 = vadd.f32 0.0, %v1023
  %1025 = vmatmul.f32.gmra.mxu0 %v118
  %v1026 = vpop.f32.mrf.mxu0
  %v1027 = vadd.f32 0.0, %v1026
  %1028 = vmatmul.f32.gmra.mxu0 %v125
  %v1029 = vpop.f32.mrf.mxu0
  %v1030 = vadd.f32 0.0, %v1029
  %1031 = vmatmul.f32.gmra.mxu0 %v132
  %v1032 = vpop.f32.mrf.mxu0
  %v1033 = vadd.f32 0.0, %v1032
  %1034 = vdwg.mxu0
  %1035 = vmatpush.msra.mxu0 %v233
  %1036 = vmatpush.msra.mxu0 %v230
  %1037 = vmatpush.msra.mxu0 %v227
  %1038 = vmatpush.msra.mxu0 %v224
  %1039 = vmatpush.msra.mxu0 %v221
  %1040 = vmatpush.msra.mxu0 %v218
  %1041 = vmatpush.msra.mxu0 %v215
  %1042 = vmatpush.msra.mxu0 %v212
  %1043 = vmatpush.msra.mxu0 %v209
  %1044 = vmatpush.msra.mxu0 %v206
  %1045 = vmatpush.msra.mxu0 %v203
  %1046 = vmatpush.msra.mxu0 %v200
  %1047 = vmatpush.msra.mxu0 %v197
  %1048 = vmatpush.msra.mxu0 %v194
  %1049 = vmatpush.msra.mxu0 %v191
  %1050 = vmatpush.msra.mxu0 %v188
  %1051 = vmatmul.f32.gmra.mxu0 %v21
  %v1052 = vpop.f32.mrf.mxu0
  %v1053 = vadd.f32 %v985, %v1052
  %1054 = vmatmul.f32.gmra.mxu0 %v28
  %v1055 = vpop.f32.mrf.mxu0
  %v1056 = vadd.f32 %v988, %v1055
  %1057 = vmatmul.f32.gmra.mxu0 %v35
  %v1058 = vpop.f32.mrf.mxu0
  %v1059 = vadd.f32 %v991, %v1058
  %1060 = vmatmul.f32.gmra.mxu0 %v42
  %v1061 = vpop.f32.mrf.mxu0
  %v1062 = vadd.f32 %v994, %v1061
  %1063 = vmatmul.f32.gmra.mxu0 %v49
  %v1064 = vpop.f32.mrf.mxu0
  %v1065 = vadd.f32 %v997, %v1064
  %1066 = vmatmul.f32.gmra.mxu0 %v56
  %v1067 = vpop.f32.mrf.mxu0
  %v1068 = vadd.f32 %v1000, %v1067
  %1069 = vmatmul.f32.gmra.mxu0 %v63
  %v1070 = vpop.f32.mrf.mxu0
  %v1071 = vadd.f32 %v1003, %v1070
  %1072 = vmatmul.f32.gmra.mxu0 %v70
  %v1073 = vpop.f32.mrf.mxu0
  %v1074 = vadd.f32 %v1006, %v1073
  %1075 = vmatmul.f32.gmra.mxu0 %v77
  %v1076 = vpop.f32.mrf.mxu0
  %v1077 = vadd.f32 %v1009, %v1076
  %1078 = vmatmul.f32.gmra.mxu0 %v84
  %v1079 = vpop.f32.mrf.mxu0
  %v1080 = vadd.f32 %v1012, %v1079
  %1081 = vmatmul.f32.gmra.mxu0 %v91
  %v1082 = vpop.f32.mrf.mxu0
  %v1083 = vadd.f32 %v1015, %v1082
  %1084 = vmatmul.f32.gmra.mxu0 %v98
  %v1085 = vpop.f32.mrf.mxu0
  %v1086 = vadd.f32 %v1018, %v1085
  %1087 = vmatmul.f32.gmra.mxu0 %v105
  %v1088 = vpop.f32.mrf.mxu0
  %v1089 = vadd.f32 %v1021, %v1088
  %1090 = vmatmul.f32.gmra.mxu0 %v112
  %v1091 = vpop.f32.mrf.mxu0
  %v1092 = vadd.f32 %v1024, %v1091
  %1093 = vmatmul.f32.gmra.mxu0 %v119
  %v1094 = vpop.f32.mrf.mxu0
  %v1095 = vadd.f32 %v1027, %v1094
  %1096 = vmatmul.f32.gmra.mxu0 %v126
  %v1097 = vpop.f32.mrf.mxu0
  %v1098 = vadd.f32 %v1030, %v1097
  %1099 = vmatmul.f32.gmra.mxu0 %v133
  %v1100 = vpop.f32.mrf.mxu0
  %v1101 = vadd.f32 %v1033, %v1100
  %1102 = vdwg.mxu0
  %1103 = vmatpush.msra.mxu0 %v281
  %1104 = vmatpush.msra.mxu0 %v278
  %1105 = vmatpush.msra.mxu0 %v275
  %1106 = vmatpush.msra.mxu0 %v272
  %1107 = vmatpush.msra.mxu0 %v269
  %1108 = vmatpush.msra.mxu0 %v266
  %1109 = vmatpush.msra.mxu0 %v263
  %1110 = vmatpush.msra.mxu0 %v260
  %1111 = vmatpush.msra.mxu0 %v257
  %1112 = vmatpush.msra.mxu0 %v254
  %1113 = vmatpush.msra.mxu0 %v251
  %1114 = vmatpush.msra.mxu0 %v248
  %1115 = vmatpush.msra.mxu0 %v245
  %1116 = vmatpush.msra.mxu0 %v242
  %1117 = vmatpush.msra.mxu0 %v239
  %1118 = vmatpush.msra.mxu0 %v236
  %1119 = vmatmul.f32.gmra.mxu0 %v22
  %v1120 = vpop.f32.mrf.mxu0
  %v1121 = vadd.f32 %v1053, %v1120
  %1122 = vmatmul.f32.gmra.mxu0 %v29
  %v1123 = vpop.f32.mrf.mxu0
  %v1124 = vadd.f32 %v1056, %v1123
  %1125 = vmatmul.f32.gmra.mxu0 %v36
  %v1126 = vpop.f32.mrf.mxu0
  %v1127 = vadd.f32 %v1059, %v1126
  %1128 = vmatmul.f32.gmra.mxu0 %v43
  %v1129 = vpop.f32.mrf.mxu0
  %v1130 = vadd.f32 %v1062, %v1129
  %1131 = vmatmul.f32.gmra.mxu0 %v50
  %v1132 = vpop.f32.mrf.mxu0
  %v1133 = vadd.f32 %v1065, %v1132
  %1134 = vmatmul.f32.gmra.mxu0 %v57
  %v1135 = vpop.f32.mrf.mxu0
  %v1136 = vadd.f32 %v1068, %v1135
  %1137 = vmatmul.f32.gmra.mxu0 %v64
  %v1138 = vpop.f32.mrf.mxu0
  %v1139 = vadd.f32 %v1071, %v1138
  %1140 = vmatmul.f32.gmra.mxu0 %v71
  %v1141 = vpop.f32.mrf.mxu0
  %v1142 = vadd.f32 %v1074, %v1141
  %1143 = vmatmul.f32.gmra.mxu0 %v78
  %v1144 = vpop.f32.mrf.mxu0
  %v1145 = vadd.f32 %v1077, %v1144
  %1146 = vmatmul.f32.gmra.mxu0 %v85
  %v1147 = vpop.f32.mrf.mxu0
  %v1148 = vadd.f32 %v1080, %v1147
  %1149 = vmatmul.f32.gmra.mxu0 %v92
  %v1150 = vpop.f32.mrf.mxu0
  %v1151 = vadd.f32 %v1083, %v1150
  %1152 = vmatmul.f32.gmra.mxu0 %v99
  %v1153 = vpop.f32.mrf.mxu0
  %v1154 = vadd.f32 %v1086, %v1153
  %1155 = vmatmul.f32.gmra.mxu0 %v106
  %v1156 = vpop.f32.mrf.mxu0
  %v1157 = vadd.f32 %v1089, %v1156
  %1158 = vmatmul.f32.gmra.mxu0 %v113
  %v1159 = vpop.f32.mrf.mxu0
  %v1160 = vadd.f32 %v1092, %v1159
  %1161 = vmatmul.f32.gmra.mxu0 %v120
  %v1162 = vpop.f32.mrf.mxu0
  %v1163 = vadd.f32 %v1095, %v1162
  %1164 = vmatmul.f32.gmra.mxu0 %v127
  %v1165 = vpop.f32.mrf.mxu0
  %v1166 = vadd.f32 %v1098, %v1165
  %1167 = vmatmul.f32.gmra.mxu0 %v134
  %v1168 = vpop.f32.mrf.mxu0
  %v1169 = vadd.f32 %v1101, %v1168
  %1170 = vdwg.mxu0
  %1171 = vmatpush.msra.mxu0 %v329
  %1172 = vmatpush.msra.mxu0 %v326
  %1173 = vmatpush.msra.mxu0 %v323
  %1174 = vmatpush.msra.mxu0 %v320
  %1175 = vmatpush.msra.mxu0 %v317
  %1176 = vmatpush.msra.mxu0 %v314
  %1177 = vmatpush.msra.mxu0 %v311
  %1178 = vmatpush.msra.mxu0 %v308
  %1179 = vmatpush.msra.mxu0 %v305
  %1180 = vmatpush.msra.mxu0 %v302
  %1181 = vmatpush.msra.mxu0 %v299
  %1182 = vmatpush.msra.mxu0 %v296
  %1183 = vmatpush.msra.mxu0 %v293
  %1184 = vmatpush.msra.mxu0 %v290
  %1185 = vmatpush.msra.mxu0 %v287
  %1186 = vmatpush.msra.mxu0 %v284
  %1187 = vmatmul.f32.gmra.mxu0 %v23
  %v1188 = vpop.f32.mrf.mxu0
  %v1189 = vadd.f32 %v1121, %v1188
  %1190 = vmatmul.f32.gmra.mxu0 %v30
  %v1191 = vpop.f32.mrf.mxu0
  %v1192 = vadd.f32 %v1124, %v1191
  %1193 = vmatmul.f32.gmra.mxu0 %v37
  %v1194 = vpop.f32.mrf.mxu0
  %v1195 = vadd.f32 %v1127, %v1194
  %1196 = vmatmul.f32.gmra.mxu0 %v44
  %v1197 = vpop.f32.mrf.mxu0
  %v1198 = vadd.f32 %v1130, %v1197
  %1199 = vmatmul.f32.gmra.mxu0 %v51
  %v1200 = vpop.f32.mrf.mxu0
  %v1201 = vadd.f32 %v1133, %v1200
  %1202 = vmatmul.f32.gmra.mxu0 %v58
  %v1203 = vpop.f32.mrf.mxu0
  %v1204 = vadd.f32 %v1136, %v1203
  %1205 = vmatmul.f32.gmra.mxu0 %v65
  %v1206 = vpop.f32.mrf.mxu0
  %v1207 = vadd.f32 %v1139, %v1206
  %1208 = vmatmul.f32.gmra.mxu0 %v72
  %v1209 = vpop.f32.mrf.mxu0
  %v1210 = vadd.f32 %v1142, %v1209
  %1211 = vmatmul.f32.gmra.mxu0 %v79
  %v1212 = vpop.f32.mrf.mxu0
  %v1213 = vadd.f32 %v1145, %v1212
  %1214 = vmatmul.f32.gmra.mxu0 %v86
  %v1215 = vpop.f32.mrf.mxu0
  %v1216 = vadd.f32 %v1148, %v1215
  %1217 = vmatmul.f32.gmra.mxu0 %v93
  %v1218 = vpop.f32.mrf.mxu0
  %v1219 = vadd.f32 %v1151, %v1218
  %1220 = vmatmul.f32.gmra.mxu0 %v100
  %v1221 = vpop.f32.mrf.mxu0
  %v1222 = vadd.f32 %v1154, %v1221
  %1223 = vmatmul.f32.gmra.mxu0 %v107
  %v1224 = vpop.f32.mrf.mxu0
  %v1225 = vadd.f32 %v1157, %v1224
  %1226 = vmatmul.f32.gmra.mxu0 %v114
  %v1227 = vpop.f32.mrf.mxu0
  %v1228 = vadd.f32 %v1160, %v1227
  %1229 = vmatmul.f32.gmra.mxu0 %v121
  %v1230 = vpop.f32.mrf.mxu0
  %v1231 = vadd.f32 %v1163, %v1230
  %1232 = vmatmul.f32.gmra.mxu0 %v128
  %v1233 = vpop.f32.mrf.mxu0
  %v1234 = vadd.f32 %v1166, %v1233
  %1235 = vmatmul.f32.gmra.mxu0 %v135
  %v1236 = vpop.f32.mrf.mxu0
  %v1237 = vadd.f32 %v1169, %v1236
  %1238 = vdwg.mxu0
  %1239 = vmatpush.msra.mxu0 %v377
  %1240 = vmatpush.msra.mxu0 %v374
  %1241 = vmatpush.msra.mxu0 %v371
  %1242 = vmatpush.msra.mxu0 %v368
  %1243 = vmatpush.msra.mxu0 %v365
  %1244 = vmatpush.msra.mxu0 %v362
  %1245 = vmatpush.msra.mxu0 %v359
  %1246 = vmatpush.msra.mxu0 %v356
  %1247 = vmatpush.msra.mxu0 %v353
  %1248 = vmatpush.msra.mxu0 %v350
  %1249 = vmatpush.msra.mxu0 %v347
  %1250 = vmatpush.msra.mxu0 %v344
  %1251 = vmatpush.msra.mxu0 %v341
  %1252 = vmatpush.msra.mxu0 %v338
  %1253 = vmatpush.msra.mxu0 %v335
  %1254 = vmatpush.msra.mxu0 %v332
  %1255 = vmatmul.f32.gmra.mxu0 %v24
  %v1256 = vpop.f32.mrf.mxu0
  %v1257 = vadd.f32 %v1189, %v1256
  %1258 = vmatmul.f32.gmra.mxu0 %v31
  %v1259 = vpop.f32.mrf.mxu0
  %v1260 = vadd.f32 %v1192, %v1259
  %1261 = vmatmul.f32.gmra.mxu0 %v38
  %v1262 = vpop.f32.mrf.mxu0
  %v1263 = vadd.f32 %v1195, %v1262
  %1264 = vmatmul.f32.gmra.mxu0 %v45
  %v1265 = vpop.f32.mrf.mxu0
  %v1266 = vadd.f32 %v1198, %v1265
  %1267 = vmatmul.f32.gmra.mxu0 %v52
  %v1268 = vpop.f32.mrf.mxu0
  %v1269 = vadd.f32 %v1201, %v1268
  %1270 = vmatmul.f32.gmra.mxu0 %v59
  %v1271 = vpop.f32.mrf.mxu0
  %v1272 = vadd.f32 %v1204, %v1271
  %1273 = vmatmul.f32.gmra.mxu0 %v66
  %v1274 = vpop.f32.mrf.mxu0
  %v1275 = vadd.f32 %v1207, %v1274
  %1276 = vmatmul.f32.gmra.mxu0 %v73
  %v1277 = vpop.f32.mrf.mxu0
  %v1278 = vadd.f32 %v1210, %v1277
  %1279 = vmatmul.f32.gmra.mxu0 %v80
  %v1280 = vpop.f32.mrf.mxu0
  %v1281 = vadd.f32 %v1213, %v1280
  %1282 = vmatmul.f32.gmra.mxu0 %v87
  %v1283 = vpop.f32.mrf.mxu0
  %v1284 = vadd.f32 %v1216, %v1283
  %1285 = vmatmul.f32.gmra.mxu0 %v94
  %v1286 = vpop.f32.mrf.mxu0
  %v1287 = vadd.f32 %v1219, %v1286
  %1288 = vmatmul.f32.gmra.mxu0 %v101
  %v1289 = vpop.f32.mrf.mxu0
  %v1290 = vadd.f32 %v1222, %v1289
  %1291 = vmatmul.f32.gmra.mxu0 %v108
  %v1292 = vpop.f32.mrf.mxu0
  %v1293 = vadd.f32 %v1225, %v1292
  %1294 = vmatmul.f32.gmra.mxu0 %v115
  %v1295 = vpop.f32.mrf.mxu0
  %v1296 = vadd.f32 %v1228, %v1295
  %1297 = vmatmul.f32.gmra.mxu0 %v122
  %v1298 = vpop.f32.mrf.mxu0
  %v1299 = vadd.f32 %v1231, %v1298
  %1300 = vmatmul.f32.gmra.mxu0 %v129
  %v1301 = vpop.f32.mrf.mxu0
  %v1302 = vadd.f32 %v1234, %v1301
  %1303 = vmatmul.f32.gmra.mxu0 %v136
  %v1304 = vpop.f32.mrf.mxu0
  %v1305 = vadd.f32 %v1237, %v1304
  %1306 = vdwg.mxu0
  %1307 = vmatpush.msra.mxu0 %v425
  %1308 = vmatpush.msra.mxu0 %v422
  %1309 = vmatpush.msra.mxu0 %v419
  %1310 = vmatpush.msra.mxu0 %v416
  %1311 = vmatpush.msra.mxu0 %v413
  %1312 = vmatpush.msra.mxu0 %v410
  %1313 = vmatpush.msra.mxu0 %v407
  %1314 = vmatpush.msra.mxu0 %v404
  %1315 = vmatpush.msra.mxu0 %v401
  %1316 = vmatpush.msra.mxu0 %v398
  %1317 = vmatpush.msra.mxu0 %v395
  %1318 = vmatpush.msra.mxu0 %v392
  %1319 = vmatpush.msra.mxu0 %v389
  %1320 = vmatpush.msra.mxu0 %v386
  %1321 = vmatpush.msra.mxu0 %v383
  %1322 = vmatpush.msra.mxu0 %v380
  %1323 = vmatmul.f32.gmra.mxu0 %v25
  %v1324 = vpop.f32.mrf.mxu0
  %v1325 = vadd.f32 %v1257, %v1324
  %1326 = vmatmul.f32.gmra.mxu0 %v32
  %v1327 = vpop.f32.mrf.mxu0
  %v1328 = vadd.f32 %v1260, %v1327
  %1329 = vmatmul.f32.gmra.mxu0 %v39
  %v1330 = vpop.f32.mrf.mxu0
  %v1331 = vadd.f32 %v1263, %v1330
  %1332 = vmatmul.f32.gmra.mxu0 %v46
  %v1333 = vpop.f32.mrf.mxu0
  %v1334 = vadd.f32 %v1266, %v1333
  %1335 = vmatmul.f32.gmra.mxu0 %v53
  %v1336 = vpop.f32.mrf.mxu0
  %v1337 = vadd.f32 %v1269, %v1336
  %1338 = vmatmul.f32.gmra.mxu0 %v60
  %v1339 = vpop.f32.mrf.mxu0
  %v1340 = vadd.f32 %v1272, %v1339
  %1341 = vmatmul.f32.gmra.mxu0 %v67
  %v1342 = vpop.f32.mrf.mxu0
  %v1343 = vadd.f32 %v1275, %v1342
  %1344 = vmatmul.f32.gmra.mxu0 %v74
  %v1345 = vpop.f32.mrf.mxu0
  %v1346 = vadd.f32 %v1278, %v1345
  %1347 = vmatmul.f32.gmra.mxu0 %v81
  %v1348 = vpop.f32.mrf.mxu0
  %v1349 = vadd.f32 %v1281, %v1348
  %1350 = vmatmul.f32.gmra.mxu0 %v88
  %v1351 = vpop.f32.mrf.mxu0
  %v1352 = vadd.f32 %v1284, %v1351
  %1353 = vmatmul.f32.gmra.mxu0 %v95
  %v1354 = vpop.f32.mrf.mxu0
  %v1355 = vadd.f32 %v1287, %v1354
  %1356 = vmatmul.f32.gmra.mxu0 %v102
  %v1357 = vpop.f32.mrf.mxu0
  %v1358 = vadd.f32 %v1290, %v1357
  %1359 = vmatmul.f32.gmra.mxu0 %v109
  %v1360 = vpop.f32.mrf.mxu0
  %v1361 = vadd.f32 %v1293, %v1360
  %1362 = vmatmul.f32.gmra.mxu0 %v116
  %v1363 = vpop.f32.mrf.mxu0
  %v1364 = vadd.f32 %v1296, %v1363
  %1365 = vmatmul.f32.gmra.mxu0 %v123
  %v1366 = vpop.f32.mrf.mxu0
  %v1367 = vadd.f32 %v1299, %v1366
  %1368 = vmatmul.f32.gmra.mxu0 %v130
  %v1369 = vpop.f32.mrf.mxu0
  %v1370 = vadd.f32 %v1302, %v1369
  %1371 = vmatmul.f32.gmra.mxu0 %v137
  %v1372 = vpop.f32.mrf.mxu0
  %v1373 = vadd.f32 %v1305, %v1372
  %1374 = vdwg.mxu0
  %1375 = vmatpush.msra.mxu0 0.0
  %1376 = vmatpush.msra.mxu0 0.0
  %1377 = vmatpush.msra.mxu0 0.0
  %1378 = vmatpush.msra.mxu0 0.0
  %1379 = vmatpush.msra.mxu0 0.0
  %1380 = vmatpush.msra.mxu0 0.0
  %1381 = vmatpush.msra.mxu0 0.0
  %1382 = vmatpush.msra.mxu0 0.0
  %1383 = vmatpush.msra.mxu0 0.0
  %1384 = vmatpush.msra.mxu0 0.0
  %1385 = vmatpush.msra.mxu0 0.0
  %1386 = vmatpush.msra.mxu0 0.0
  %1387 = vmatpush.msra.mxu0 %v437
  %1388 = vmatpush.msra.mxu0 %v434
  %1389 = vmatpush.msra.mxu0 %v431
  %1390 = vmatpush.msra.mxu0 %v428
  %1391 = vmatmul.f32.gmra.mxu0 %v441
  %v1392 = vpop.f32.mrf.mxu0
  %v1393 = vadd.f32 %v1325, %v1392
  %1394 = vmatmul.f32.gmra.mxu0 %v444
  %v1395 = vpop.f32.mrf.mxu0
  %v1396 = vadd.f32 %v1328, %v1395
  %1397 = vmatmul.f32.gmra.mxu0 %v447
  %v1398 = vpop.f32.mrf.mxu0
  %v1399 = vadd.f32 %v1331, %v1398
  %1400 = vmatmul.f32.gmra.mxu0 %v450
  %v1401 = vpop.f32.mrf.mxu0
  %v1402 = vadd.f32 %v1334, %v1401
  %1403 = vmatmul.f32.gmra.mxu0 %v453
  %v1404 = vpop.f32.mrf.mxu0
  %v1405 = vadd.f32 %v1337, %v1404
  %1406 = vmatmul.f32.gmra.mxu0 %v456
  %v1407 = vpop.f32.mrf.mxu0
  %v1408 = vadd.f32 %v1340, %v1407
  %1409 = vmatmul.f32.gmra.mxu0 %v459
  %v1410 = vpop.f32.mrf.mxu0
  %v1411 = vadd.f32 %v1343, %v1410
  %1412 = vmatmul.f32.gmra.mxu0 %v462
  %v1413 = vpop.f32.mrf.mxu0
  %v1414 = vadd.f32 %v1346, %v1413
  %1415 = vmatmul.f32.gmra.mxu0 %v465
  %v1416 = vpop.f32.mrf.mxu0
  %v1417 = vadd.f32 %v1349, %v1416
  %1418 = vmatmul.f32.gmra.mxu0 %v468
  %v1419 = vpop.f32.mrf.mxu0
  %v1420 = vadd.f32 %v1352, %v1419
  %1421 = vmatmul.f32.gmra.mxu0 %v471
  %v1422 = vpop.f32.mrf.mxu0
  %v1423 = vadd.f32 %v1355, %v1422
  %1424 = vmatmul.f32.gmra.mxu0 %v474
  %v1425 = vpop.f32.mrf.mxu0
  %v1426 = vadd.f32 %v1358, %v1425
  %1427 = vmatmul.f32.gmra.mxu0 %v477
  %v1428 = vpop.f32.mrf.mxu0
  %v1429 = vadd.f32 %v1361, %v1428
  %1430 = vmatmul.f32.gmra.mxu0 %v480
  %v1431 = vpop.f32.mrf.mxu0
  %v1432 = vadd.f32 %v1364, %v1431
  %1433 = vmatmul.f32.gmra.mxu0 %v483
  %v1434 = vpop.f32.mrf.mxu0
  %v1435 = vadd.f32 %v1367, %v1434
  %1436 = vmatmul.f32.gmra.mxu0 %v486
  %v1437 = vpop.f32.mrf.mxu0
  %v1438 = vadd.f32 %v1370, %v1437
  %1439 = vmatmul.f32.gmra.mxu0 %v489
  %v1440 = vpop.f32.mrf.mxu0
  %v1441 = vadd.f32 %v1373, %v1440
  %1442 = vdwg.mxu0
  %1443 = vmatpush.msra.mxu0 %v186
  %1444 = vmatpush.msra.mxu0 %v183
  %1445 = vmatpush.msra.mxu0 %v180
  %1446 = vmatpush.msra.mxu0 %v177
  %1447 = vmatpush.msra.mxu0 %v174
  %1448 = vmatpush.msra.mxu0 %v171
  %1449 = vmatpush.msra.mxu0 %v168
  %1450 = vmatpush.msra.mxu0 %v165
  %1451 = vmatpush.msra.mxu0 %v162
  %1452 = vmatpush.msra.mxu0 %v159
  %1453 = vmatpush.msra.mxu0 %v156
  %1454 = vmatpush.msra.mxu0 %v153
  %1455 = vmatpush.msra.mxu0 %v150
  %1456 = vmatpush.msra.mxu0 %v147
  %1457 = vmatpush.msra.mxu0 %v144
  %1458 = vmatpush.msra.mxu0 %v141
  %1459 = vmatmul.f32.gmra.mxu0 %v20
  %v1460 = vpop.f32.mrf.mxu0
  %v1461 = vadd.f32 0.0, %v1460
  %1462 = vmatmul.f32.gmra.mxu0 %v27
  %v1463 = vpop.f32.mrf.mxu0
  %v1464 = vadd.f32 0.0, %v1463
  %1465 = vmatmul.f32.gmra.mxu0 %v34
  %v1466 = vpop.f32.mrf.mxu0
  %v1467 = vadd.f32 0.0, %v1466
  %1468 = vmatmul.f32.gmra.mxu0 %v41
  %v1469 = vpop.f32.mrf.mxu0
  %v1470 = vadd.f32 0.0, %v1469
  %1471 = vmatmul.f32.gmra.mxu0 %v48
  %v1472 = vpop.f32.mrf.mxu0
  %v1473 = vadd.f32 0.0, %v1472
  %1474 = vmatmul.f32.gmra.mxu0 %v55
  %v1475 = vpop.f32.mrf.mxu0
  %v1476 = vadd.f32 0.0, %v1475
  %1477 = vmatmul.f32.gmra.mxu0 %v62
  %v1478 = vpop.f32.mrf.mxu0
  %v1479 = vadd.f32 0.0, %v1478
  %1480 = vmatmul.f32.gmra.mxu0 %v69
  %v1481 = vpop.f32.mrf.mxu0
  %v1482 = vadd.f32 0.0, %v1481
  %1483 = vmatmul.f32.gmra.mxu0 %v76
  %v1484 = vpop.f32.mrf.mxu0
  %v1485 = vadd.f32 0.0, %v1484
  %1486 = vmatmul.f32.gmra.mxu0 %v83
  %v1487 = vpop.f32.mrf.mxu0
  %v1488 = vadd.f32 0.0, %v1487
  %1489 = vmatmul.f32.gmra.mxu0 %v90
  %v1490 = vpop.f32.mrf.mxu0
  %v1491 = vadd.f32 0.0, %v1490
  %1492 = vmatmul.f32.gmra.mxu0 %v97
  %v1493 = vpop.f32.mrf.mxu0
  %v1494 = vadd.f32 0.0, %v1493
  %1495 = vmatmul.f32.gmra.mxu0 %v104
  %v1496 = vpop.f32.mrf.mxu0
  %v1497 = vadd.f32 0.0, %v1496
  %1498 = vmatmul.f32.gmra.mxu0 %v111
  %v1499 = vpop.f32.mrf.mxu0
  %v1500 = vadd.f32 0.0, %v1499
  %1501 = vmatmul.f32.gmra.mxu0 %v118
  %v1502 = vpop.f32.mrf.mxu0
  %v1503 = vadd.f32 0.0, %v1502
  %1504 = vmatmul.f32.gmra.mxu0 %v125
  %v1505 = vpop.f32.mrf.mxu0
  %v1506 = vadd.f32 0.0, %v1505
  %1507 = vmatmul.f32.gmra.mxu0 %v132
  %v1508 = vpop.f32.mrf.mxu0
  %v1509 = vadd.f32 0.0, %v1508
  %1510 = vdwg.mxu0
  %1511 = vmatpush.msra.mxu0 %v234
  %1512 = vmatpush.msra.mxu0 %v231
  %1513 = vmatpush.msra.mxu0 %v228
  %1514 = vmatpush.msra.mxu0 %v225
  %1515 = vmatpush.msra.mxu0 %v222
  %1516 = vmatpush.msra.mxu0 %v219
  %1517 = vmatpush.msra.mxu0 %v216
  %1518 = vmatpush.msra.mxu0 %v213
  %1519 = vmatpush.msra.mxu0 %v210
  %1520 = vmatpush.msra.mxu0 %v207
  %1521 = vmatpush.msra.mxu0 %v204
  %1522 = vmatpush.msra.mxu0 %v201
  %1523 = vmatpush.msra.mxu0 %v198
  %1524 = vmatpush.msra.mxu0 %v195
  %1525 = vmatpush.msra.mxu0 %v192
  %1526 = vmatpush.msra.mxu0 %v189
  %1527 = vmatmul.f32.gmra.mxu0 %v21
  %v1528 = vpop.f32.mrf.mxu0
  %v1529 = vadd.f32 %v1461, %v1528
  %1530 = vmatmul.f32.gmra.mxu0 %v28
  %v1531 = vpop.f32.mrf.mxu0
  %v1532 = vadd.f32 %v1464, %v1531
  %1533 = vmatmul.f32.gmra.mxu0 %v35
  %v1534 = vpop.f32.mrf.mxu0
  %v1535 = vadd.f32 %v1467, %v1534
  %1536 = vmatmul.f32.gmra.mxu0 %v42
  %v1537 = vpop.f32.mrf.mxu0
  %v1538 = vadd.f32 %v1470, %v1537
  %1539 = vmatmul.f32.gmra.mxu0 %v49
  %v1540 = vpop.f32.mrf.mxu0
  %v1541 = vadd.f32 %v1473, %v1540
  %1542 = vmatmul.f32.gmra.mxu0 %v56
  %v1543 = vpop.f32.mrf.mxu0
  %v1544 = vadd.f32 %v1476, %v1543
  %1545 = vmatmul.f32.gmra.mxu0 %v63
  %v1546 = vpop.f32.mrf.mxu0
  %v1547 = vadd.f32 %v1479, %v1546
  %1548 = vmatmul.f32.gmra.mxu0 %v70
  %v1549 = vpop.f32.mrf.mxu0
  %v1550 = vadd.f32 %v1482, %v1549
  %1551 = vmatmul.f32.gmra.mxu0 %v77
  %v1552 = vpop.f32.mrf.mxu0
  %v1553 = vadd.f32 %v1485, %v1552
  %1554 = vmatmul.f32.gmra.mxu0 %v84
  %v1555 = vpop.f32.mrf.mxu0
  %v1556 = vadd.f32 %v1488, %v1555
  %1557 = vmatmul.f32.gmra.mxu0 %v91
  %v1558 = vpop.f32.mrf.mxu0
  %v1559 = vadd.f32 %v1491, %v1558
  %1560 = vmatmul.f32.gmra.mxu0 %v98
  %v1561 = vpop.f32.mrf.mxu0
  %v1562 = vadd.f32 %v1494, %v1561
  %1563 = vmatmul.f32.gmra.mxu0 %v105
  %v1564 = vpop.f32.mrf.mxu0
  %v1565 = vadd.f32 %v1497, %v1564
  %1566 = vmatmul.f32.gmra.mxu0 %v112
  %v1567 = vpop.f32.mrf.mxu0
  %v1568 = vadd.f32 %v1500, %v1567
  %1569 = vmatmul.f32.gmra.mxu0 %v119
  %v1570 = vpop.f32.mrf.mxu0
  %v1571 = vadd.f32 %v1503, %v1570
  %1572 = vmatmul.f32.gmra.mxu0 %v126
  %v1573 = vpop.f32.mrf.mxu0
  %v1574 = vadd.f32 %v1506, %v1573
  %1575 = vmatmul.f32.gmra.mxu0 %v133
  %v1576 = vpop.f32.mrf.mxu0
  %v1577 = vadd.f32 %v1509, %v1576
  %1578 = vdwg.mxu0
  %1579 = vmatpush.msra.mxu0 %v282
  %1580 = vmatpush.msra.mxu0 %v279
  %1581 = vmatpush.msra.mxu0 %v276
  %1582 = vmatpush.msra.mxu0 %v273
  %1583 = vmatpush.msra.mxu0 %v270
  %1584 = vmatpush.msra.mxu0 %v267
  %1585 = vmatpush.msra.mxu0 %v264
  %1586 = vmatpush.msra.mxu0 %v261
  %1587 = vmatpush.msra.mxu0 %v258
  %1588 = vmatpush.msra.mxu0 %v255
  %1589 = vmatpush.msra.mxu0 %v252
  %1590 = vmatpush.msra.mxu0 %v249
  %1591 = vmatpush.msra.mxu0 %v246
  %1592 = vmatpush.msra.mxu0 %v243
  %1593 = vmatpush.msra.mxu0 %v240
  %1594 = vmatpush.msra.mxu0 %v237
  %1595 = vmatmul.f32.gmra.mxu0 %v22
  %v1596 = vpop.f32.mrf.mxu0
  %v1597 = vadd.f32 %v1529, %v1596
  %1598 = vmatmul.f32.gmra.mxu0 %v29
  %v1599 = vpop.f32.mrf.mxu0
  %v1600 = vadd.f32 %v1532, %v1599
  %1601 = vmatmul.f32.gmra.mxu0 %v36
  %v1602 = vpop.f32.mrf.mxu0
  %v1603 = vadd.f32 %v1535, %v1602
  %1604 = vmatmul.f32.gmra.mxu0 %v43
  %v1605 = vpop.f32.mrf.mxu0
  %v1606 = vadd.f32 %v1538, %v1605
  %1607 = vmatmul.f32.gmra.mxu0 %v50
  %v1608 = vpop.f32.mrf.mxu0
  %v1609 = vadd.f32 %v1541, %v1608
  %1610 = vmatmul.f32.gmra.mxu0 %v57
  %v1611 = vpop.f32.mrf.mxu0
  %v1612 = vadd.f32 %v1544, %v1611
  %1613 = vmatmul.f32.gmra.mxu0 %v64
  %v1614 = vpop.f32.mrf.mxu0
  %v1615 = vadd.f32 %v1547, %v1614
  %1616 = vmatmul.f32.gmra.mxu0 %v71
  %v1617 = vpop.f32.mrf.mxu0
  %v1618 = vadd.f32 %v1550, %v1617
  %1619 = vmatmul.f32.gmra.mxu0 %v78
  %v1620 = vpop.f32.mrf.mxu0
  %v1621 = vadd.f32 %v1553, %v1620
  %1622 = vmatmul.f32.gmra.mxu0 %v85
  %v1623 = vpop.f32.mrf.mxu0
  %v1624 = vadd.f32 %v1556, %v1623
  %1625 = vmatmul.f32.gmra.mxu0 %v92
  %v1626 = vpop.f32.mrf.mxu0
  %v1627 = vadd.f32 %v1559, %v1626
  %1628 = vmatmul.f32.gmra.mxu0 %v99
  %v1629 = vpop.f32.mrf.mxu0
  %v1630 = vadd.f32 %v1562, %v1629
  %1631 = vmatmul.f32.gmra.mxu0 %v106
  %v1632 = vpop.f32.mrf.mxu0
  %v1633 = vadd.f32 %v1565, %v1632
  %1634 = vmatmul.f32.gmra.mxu0 %v113
  %v1635 = vpop.f32.mrf.mxu0
  %v1636 = vadd.f32 %v1568, %v1635
  %1637 = vmatmul.f32.gmra.mxu0 %v120
  %v1638 = vpop.f32.mrf.mxu0
  %v1639 = vadd.f32 %v1571, %v1638
  %1640 = vmatmul.f32.gmra.mxu0 %v127
  %v1641 = vpop.f32.mrf.mxu0
  %v1642 = vadd.f32 %v1574, %v1641
  %1643 = vmatmul.f32.gmra.mxu0 %v134
  %v1644 = vpop.f32.mrf.mxu0
  %v1645 = vadd.f32 %v1577, %v1644
  %1646 = vdwg.mxu0
  %1647 = vmatpush.msra.mxu0 %v330
  %1648 = vmatpush.msra.mxu0 %v327
  %1649 = vmatpush.msra.mxu0 %v324
  %1650 = vmatpush.msra.mxu0 %v321
  %1651 = vmatpush.msra.mxu0 %v318
  %1652 = vmatpush.msra.mxu0 %v315
  %1653 = vmatpush.msra.mxu0 %v312
  %1654 = vmatpush.msra.mxu0 %v309
  %1655 = vmatpush.msra.mxu0 %v306
  %1656 = vmatpush.msra.mxu0 %v303
  %1657 = vmatpush.msra.mxu0 %v300
  %1658 = vmatpush.msra.mxu0 %v297
  %1659 = vmatpush.msra.mxu0 %v294
  %1660 = vmatpush.msra.mxu0 %v291
  %1661 = vmatpush.msra.mxu0 %v288
  %1662 = vmatpush.msra.mxu0 %v285
  %1663 = vmatmul.f32.gmra.mxu0 %v23
  %v1664 = vpop.f32.mrf.mxu0
  %v1665 = vadd.f32 %v1597, %v1664
  %1666 = vmatmul.f32.gmra.mxu0 %v30
  %v1667 = vpop.f32.mrf.mxu0
  %v1668 = vadd.f32 %v1600, %v1667
  %1669 = vmatmul.f32.gmra.mxu0 %v37
  %v1670 = vpop.f32.mrf.mxu0
  %v1671 = vadd.f32 %v1603, %v1670
  %1672 = vmatmul.f32.gmra.mxu0 %v44
  %v1673 = vpop.f32.mrf.mxu0
  %v1674 = vadd.f32 %v1606, %v1673
  %1675 = vmatmul.f32.gmra.mxu0 %v51
  %v1676 = vpop.f32.mrf.mxu0
  %v1677 = vadd.f32 %v1609, %v1676
  %1678 = vmatmul.f32.gmra.mxu0 %v58
  %v1679 = vpop.f32.mrf.mxu0
  %v1680 = vadd.f32 %v1612, %v1679
  %1681 = vmatmul.f32.gmra.mxu0 %v65
  %v1682 = vpop.f32.mrf.mxu0
  %v1683 = vadd.f32 %v1615, %v1682
  %1684 = vmatmul.f32.gmra.mxu0 %v72
  %v1685 = vpop.f32.mrf.mxu0
  %v1686 = vadd.f32 %v1618, %v1685
  %1687 = vmatmul.f32.gmra.mxu0 %v79
  %v1688 = vpop.f32.mrf.mxu0
  %v1689 = vadd.f32 %v1621, %v1688
  %1690 = vmatmul.f32.gmra.mxu0 %v86
  %v1691 = vpop.f32.mrf.mxu0
  %v1692 = vadd.f32 %v1624, %v1691
  %1693 = vmatmul.f32.gmra.mxu0 %v93
  %v1694 = vpop.f32.mrf.mxu0
  %v1695 = vadd.f32 %v1627, %v1694
  %1696 = vmatmul.f32.gmra.mxu0 %v100
  %v1697 = vpop.f32.mrf.mxu0
  %v1698 = vadd.f32 %v1630, %v1697
  %1699 = vmatmul.f32.gmra.mxu0 %v107
  %v1700 = vpop.f32.mrf.mxu0
  %v1701 = vadd.f32 %v1633, %v1700
  %1702 = vmatmul.f32.gmra.mxu0 %v114
  %v1703 = vpop.f32.mrf.mxu0
  %v1704 = vadd.f32 %v1636, %v1703
  %1705 = vmatmul.f32.gmra.mxu0 %v121
  %v1706 = vpop.f32.mrf.mxu0
  %v1707 = vadd.f32 %v1639, %v1706
  %1708 = vmatmul.f32.gmra.mxu0 %v128
  %v1709 = vpop.f32.mrf.mxu0
  %v1710 = vadd.f32 %v1642, %v1709
  %1711 = vmatmul.f32.gmra.mxu0 %v135
  %v1712 = vpop.f32.mrf.mxu0
  %v1713 = vadd.f32 %v1645, %v1712
  %1714 = vdwg.mxu0
  %1715 = vmatpush.msra.mxu0 %v378
  %1716 = vmatpush.msra.mxu0 %v375
  %1717 = vmatpush.msra.mxu0 %v372
  %1718 = vmatpush.msra.mxu0 %v369
  %1719 = vmatpush.msra.mxu0 %v366
  %1720 = vmatpush.msra.mxu0 %v363
  %1721 = vmatpush.msra.mxu0 %v360
  %1722 = vmatpush.msra.mxu0 %v357
  %1723 = vmatpush.msra.mxu0 %v354
  %1724 = vmatpush.msra.mxu0 %v351
  %1725 = vmatpush.msra.mxu0 %v348
  %1726 = vmatpush.msra.mxu0 %v345
  %1727 = vmatpush.msra.mxu0 %v342
  %1728 = vmatpush.msra.mxu0 %v339
  %1729 = vmatpush.msra.mxu0 %v336
  %1730 = vmatpush.msra.mxu0 %v333
  %1731 = vmatmul.f32.gmra.mxu0 %v24
  %v1732 = vpop.f32.mrf.mxu0
  %v1733 = vadd.f32 %v1665, %v1732
  %1734 = vmatmul.f32.gmra.mxu0 %v31
  %v1735 = vpop.f32.mrf.mxu0
  %v1736 = vadd.f32 %v1668, %v1735
  %1737 = vmatmul.f32.gmra.mxu0 %v38
  %v1738 = vpop.f32.mrf.mxu0
  %v1739 = vadd.f32 %v1671, %v1738
  %1740 = vmatmul.f32.gmra.mxu0 %v45
  %v1741 = vpop.f32.mrf.mxu0
  %v1742 = vadd.f32 %v1674, %v1741
  %1743 = vmatmul.f32.gmra.mxu0 %v52
  %v1744 = vpop.f32.mrf.mxu0
  %v1745 = vadd.f32 %v1677, %v1744
  %1746 = vmatmul.f32.gmra.mxu0 %v59
  %v1747 = vpop.f32.mrf.mxu0
  %v1748 = vadd.f32 %v1680, %v1747
  %1749 = vmatmul.f32.gmra.mxu0 %v66
  %v1750 = vpop.f32.mrf.mxu0
  %v1751 = vadd.f32 %v1683, %v1750
  %1752 = vmatmul.f32.gmra.mxu0 %v73
  %v1753 = vpop.f32.mrf.mxu0
  %v1754 = vadd.f32 %v1686, %v1753
  %1755 = vmatmul.f32.gmra.mxu0 %v80
  %v1756 = vpop.f32.mrf.mxu0
  %v1757 = vadd.f32 %v1689, %v1756
  %1758 = vmatmul.f32.gmra.mxu0 %v87
  %v1759 = vpop.f32.mrf.mxu0
  %v1760 = vadd.f32 %v1692, %v1759
  %1761 = vmatmul.f32.gmra.mxu0 %v94
  %v1762 = vpop.f32.mrf.mxu0
  %v1763 = vadd.f32 %v1695, %v1762
  %1764 = vmatmul.f32.gmra.mxu0 %v101
  %v1765 = vpop.f32.mrf.mxu0
  %v1766 = vadd.f32 %v1698, %v1765
  %1767 = vmatmul.f32.gmra.mxu0 %v108
  %v1768 = vpop.f32.mrf.mxu0
  %v1769 = vadd.f32 %v1701, %v1768
  %1770 = vmatmul.f32.gmra.mxu0 %v115
  %v1771 = vpop.f32.mrf.mxu0
  %v1772 = vadd.f32 %v1704, %v1771
  %1773 = vmatmul.f32.gmra.mxu0 %v122
  %v1774 = vpop.f32.mrf.mxu0
  %v1775 = vadd.f32 %v1707, %v1774
  %1776 = vmatmul.f32.gmra.mxu0 %v129
  %v1777 = vpop.f32.mrf.mxu0
  %v1778 = vadd.f32 %v1710, %v1777
  %1779 = vmatmul.f32.gmra.mxu0 %v136
  %v1780 = vpop.f32.mrf.mxu0
  %v1781 = vadd.f32 %v1713, %v1780
  %1782 = vdwg.mxu0
  %1783 = vmatpush.msra.mxu0 %v426
  %1784 = vmatpush.msra.mxu0 %v423
  %1785 = vmatpush.msra.mxu0 %v420
  %1786 = vmatpush.msra.mxu0 %v417
  %1787 = vmatpush.msra.mxu0 %v414
  %1788 = vmatpush.msra.mxu0 %v411
  %1789 = vmatpush.msra.mxu0 %v408
  %1790 = vmatpush.msra.mxu0 %v405
  %1791 = vmatpush.msra.mxu0 %v402
  %1792 = vmatpush.msra.mxu0 %v399
  %1793 = vmatpush.msra.mxu0 %v396
  %1794 = vmatpush.msra.mxu0 %v393
  %1795 = vmatpush.msra.mxu0 %v390
  %1796 = vmatpush.msra.mxu0 %v387
  %1797 = vmatpush.msra.mxu0 %v384
  %1798 = vmatpush.msra.mxu0 %v381
  %1799 = vmatmul.f32.gmra.mxu0 %v25
  %v1800 = vpop.f32.mrf.mxu0
  %v1801 = vadd.f32 %v1733, %v1800
  %1802 = vmatmul.f32.gmra.mxu0 %v32
  %v1803 = vpop.f32.mrf.mxu0
  %v1804 = vadd.f32 %v1736, %v1803
  %1805 = vmatmul.f32.gmra.mxu0 %v39
  %v1806 = vpop.f32.mrf.mxu0
  %v1807 = vadd.f32 %v1739, %v1806
  %1808 = vmatmul.f32.gmra.mxu0 %v46
  %v1809 = vpop.f32.mrf.mxu0
  %v1810 = vadd.f32 %v1742, %v1809
  %1811 = vmatmul.f32.gmra.mxu0 %v53
  %v1812 = vpop.f32.mrf.mxu0
  %v1813 = vadd.f32 %v1745, %v1812
  %1814 = vmatmul.f32.gmra.mxu0 %v60
  %v1815 = vpop.f32.mrf.mxu0
  %v1816 = vadd.f32 %v1748, %v1815
  %1817 = vmatmul.f32.gmra.mxu0 %v67
  %v1818 = vpop.f32.mrf.mxu0
  %v1819 = vadd.f32 %v1751, %v1818
  %1820 = vmatmul.f32.gmra.mxu0 %v74
  %v1821 = vpop.f32.mrf.mxu0
  %v1822 = vadd.f32 %v1754, %v1821
  %1823 = vmatmul.f32.gmra.mxu0 %v81
  %v1824 = vpop.f32.mrf.mxu0
  %v1825 = vadd.f32 %v1757, %v1824
  %1826 = vmatmul.f32.gmra.mxu0 %v88
  %v1827 = vpop.f32.mrf.mxu0
  %v1828 = vadd.f32 %v1760, %v1827
  %1829 = vmatmul.f32.gmra.mxu0 %v95
  %v1830 = vpop.f32.mrf.mxu0
  %v1831 = vadd.f32 %v1763, %v1830
  %1832 = vmatmul.f32.gmra.mxu0 %v102
  %v1833 = vpop.f32.mrf.mxu0
  %v1834 = vadd.f32 %v1766, %v1833
  %1835 = vmatmul.f32.gmra.mxu0 %v109
  %v1836 = vpop.f32.mrf.mxu0
  %v1837 = vadd.f32 %v1769, %v1836
  %1838 = vmatmul.f32.gmra.mxu0 %v116
  %v1839 = vpop.f32.mrf.mxu0
  %v1840 = vadd.f32 %v1772, %v1839
  %1841 = vmatmul.f32.gmra.mxu0 %v123
  %v1842 = vpop.f32.mrf.mxu0
  %v1843 = vadd.f32 %v1775, %v1842
  %1844 = vmatmul.f32.gmra.mxu0 %v130
  %v1845 = vpop.f32.mrf.mxu0
  %v1846 = vadd.f32 %v1778, %v1845
  %1847 = vmatmul.f32.gmra.mxu0 %v137
  %v1848 = vpop.f32.mrf.mxu0
  %v1849 = vadd.f32 %v1781, %v1848
  %1850 = vdwg.mxu0
  %1851 = vmatpush.msra.mxu0 0.0
  %1852 = vmatpush.msra.mxu0 0.0
  %1853 = vmatpush.msra.mxu0 0.0
  %1854 = vmatpush.msra.mxu0 0.0
  %1855 = vmatpush.msra.mxu0 0.0
  %1856 = vmatpush.msra.mxu0 0.0
  %1857 = vmatpush.msra.mxu0 0.0
  %1858 = vmatpush.msra.mxu0 0.0
  %1859 = vmatpush.msra.mxu0 0.0
  %1860 = vmatpush.msra.mxu0 0.0
  %1861 = vmatpush.msra.mxu0 0.0
  %1862 = vmatpush.msra.mxu0 0.0
  %1863 = vmatpush.msra.mxu0 %v438
  %1864 = vmatpush.msra.mxu0 %v435
  %1865 = vmatpush.msra.mxu0 %v432
  %1866 = vmatpush.msra.mxu0 %v429
  %1867 = vmatmul.f32.gmra.mxu0 %v441
  %v1868 = vpop.f32.mrf.mxu0
  %v1869 = vadd.f32 %v1801, %v1868
  %1870 = vmatmul.f32.gmra.mxu0 %v444
  %v1871 = vpop.f32.mrf.mxu0
  %v1872 = vadd.f32 %v1804, %v1871
  %1873 = vmatmul.f32.gmra.mxu0 %v447
  %v1874 = vpop.f32.mrf.mxu0
  %v1875 = vadd.f32 %v1807, %v1874
  %1876 = vmatmul.f32.gmra.mxu0 %v450
  %v1877 = vpop.f32.mrf.mxu0
  %v1878 = vadd.f32 %v1810, %v1877
  %1879 = vmatmul.f32.gmra.mxu0 %v453
  %v1880 = vpop.f32.mrf.mxu0
  %v1881 = vadd.f32 %v1813, %v1880
  %1882 = vmatmul.f32.gmra.mxu0 %v456
  %v1883 = vpop.f32.mrf.mxu0
  %v1884 = vadd.f32 %v1816, %v1883
  %1885 = vmatmul.f32.gmra.mxu0 %v459
  %v1886 = vpop.f32.mrf.mxu0
  %v1887 = vadd.f32 %v1819, %v1886
  %1888 = vmatmul.f32.gmra.mxu0 %v462
  %v1889 = vpop.f32.mrf.mxu0
  %v1890 = vadd.f32 %v1822, %v1889
  %1891 = vmatmul.f32.gmra.mxu0 %v465
  %v1892 = vpop.f32.mrf.mxu0
  %v1893 = vadd.f32 %v1825, %v1892
  %1894 = vmatmul.f32.gmra.mxu0 %v468
  %v1895 = vpop.f32.mrf.mxu0
  %v1896 = vadd.f32 %v1828, %v1895
  %1897 = vmatmul.f32.gmra.mxu0 %v471
  %v1898 = vpop.f32.mrf.mxu0
  %v1899 = vadd.f32 %v1831, %v1898
  %1900 = vmatmul.f32.gmra.mxu0 %v474
  %v1901 = vpop.f32.mrf.mxu0
  %v1902 = vadd.f32 %v1834, %v1901
  %1903 = vmatmul.f32.gmra.mxu0 %v477
  %v1904 = vpop.f32.mrf.mxu0
  %v1905 = vadd.f32 %v1837, %v1904
  %1906 = vmatmul.f32.gmra.mxu0 %v480
  %v1907 = vpop.f32.mrf.mxu0
  %v1908 = vadd.f32 %v1840, %v1907
  %1909 = vmatmul.f32.gmra.mxu0 %v483
  %v1910 = vpop.f32.mrf.mxu0
  %v1911 = vadd.f32 %v1843, %v1910
  %1912 = vmatmul.f32.gmra.mxu0 %v486
  %v1913 = vpop.f32.mrf.mxu0
  %v1914 = vadd.f32 %v1846, %v1913
  %1915 = vmatmul.f32.gmra.mxu0 %v489
  %v1916 = vpop.f32.mrf.mxu0
  %v1917 = vadd.f32 %v1849, %v1916
  %1918 = vdwg.mxu0
  %1919 = vst [vmem:[#allocation2] sm:$0xff] %v917
  %1920 = vst [vmem:[#allocation2 + $0x8] sm:$0xff] %v1393
  %1921 = vst [vmem:[#allocation2 + $0x10] sm:$0xff] %v1869
  %1922 = vst [vmem:[#allocation2 + $0x18] sm:$0xff] %v920
  %1923 = vst [vmem:[#allocation2 + $0x20] sm:$0xff] %v1396
  %1924 = vst [vmem:[#allocation2 + $0x28] sm:$0xff] %v1872
  %1925 = vst [vmem:[#allocation2 + $0x30] sm:$0xff] %v923
  %1926 = vst [vmem:[#allocation2 + $0x38] sm:$0xff] %v1399
  %1927 = vst [vmem:[#allocation2 + $0x40] sm:$0xff] %v1875
  %1928 = vst [vmem:[#allocation2 + $0x48] sm:$0xff] %v926
  %1929 = vst [vmem:[#allocation2 + $0x50] sm:$0xff] %v1402
  %1930 = vst [vmem:[#allocation2 + $0x58] sm:$0xff] %v1878
  %1931 = vst [vmem:[#allocation2 + $0x60] sm:$0xff] %v929
  %1932 = vst [vmem:[#allocation2 + $0x68] sm:$0xff] %v1405
  %1933 = vst [vmem:[#allocation2 + $0x70] sm:$0xff] %v1881
  %1934 = vst [vmem:[#allocation2 + $0x78] sm:$0xff] %v932
  %1935 = vst [vmem:[#allocation2 + $0x80] sm:$0xff] %v1408
  %1936 = vst [vmem:[#allocation2 + $0x88] sm:$0xff] %v1884
  %1937 = vst [vmem:[#allocation2 + $0x90] sm:$0xff] %v935
  %1938 = vst [vmem:[#allocation2 + $0x98] sm:$0xff] %v1411
  %1939 = vst [vmem:[#allocation2 + $0xa0] sm:$0xff] %v1887
  %1940 = vst [vmem:[#allocation2 + $0xa8] sm:$0xff] %v938
  %1941 = vst [vmem:[#allocation2 + $0xb0] sm:$0xff] %v1414
  %1942 = vst [vmem:[#allocation2 + $0xb8] sm:$0xff] %v1890
  %1943 = vst [vmem:[#allocation2 + $0xc0] sm:$0xff] %v941
  %1944 = vst [vmem:[#allocation2 + $0xc8] sm:$0xff] %v1417
  %1945 = vst [vmem:[#allocation2 + $0xd0] sm:$0xff] %v1893
  %1946 = vst [vmem:[#allocation2 + $0xd8] sm:$0xff] %v944
  %1947 = vst [vmem:[#allocation2 + $0xe0] sm:$0xff] %v1420
  %1948 = vst [vmem:[#allocation2 + $0xe8] sm:$0xff] %v1896
  %1949 = vst [vmem:[#allocation2 + $0xf0] sm:$0xff] %v947
  %1950 = vst [vmem:[#allocation2 + $0xf8] sm:$0xff] %v1423
  %1951 = vst [vmem:[#allocation2 + $0x100] sm:$0xff] %v1899
  %1952 = vst [vmem:[#allocation2 + $0x108] sm:$0xff] %v950
  %1953 = vst [vmem:[#allocation2 + $0x110] sm:$0xff] %v1426
  %1954 = vst [vmem:[#allocation2 + $0x118] sm:$0xff] %v1902
  %1955 = vst [vmem:[#allocation2 + $0x120] sm:$0xff] %v953
  %1956 = vst [vmem:[#allocation2 + $0x128] sm:$0xff] %v1429
  %1957 = vst [vmem:[#allocation2 + $0x130] sm:$0xff] %v1905
  %1958 = vst [vmem:[#allocation2 + $0x138] sm:$0xff] %v956
  %1959 = vst [vmem:[#allocation2 + $0x140] sm:$0xff] %v1432
  %1960 = vst [vmem:[#allocation2 + $0x148] sm:$0xff] %v1908
  %1961 = vst [vmem:[#allocation2 + $0x150] sm:$0xff] %v959
  %1962 = vst [vmem:[#allocation2 + $0x158] sm:$0xff] %v1435
  %1963 = vst [vmem:[#allocation2 + $0x160] sm:$0xff] %v1911
  %1964 = vst [vmem:[#allocation2 + $0x168] sm:$0xff] %v962
  %1965 = vst [vmem:[#allocation2 + $0x170] sm:$0xff] %v1438
  %1966 = vst [vmem:[#allocation2 + $0x178] sm:$0xff] %v1914
  %1967 = vst [vmem:[#allocation2 + $0x180] sm:$0xff] %v965
  %1968 = vst [vmem:[#allocation2 + $0x188] sm:$0xff] %v1441
  %1969 = vst [vmem:[#allocation2 + $0x190] sm:$0xff] %v1917
  %v1970 = vld [vmem:[#allocation2] sm:$0xff]
  %v1971 = vld [vmem:[#allocation2 + $0x8] sm:$0xff]
  %v1972 = vld [vmem:[#allocation2 + $0x10] sm:$0xff]
  %v1973 = vld [vmem:[%s2] sm:$0xff]
  %v1974 = vld [vmem:[%s2 + $0x8] sm:$0xff]
  %v1975 = vld [vmem:[%s2 + $0x10] sm:$0xff]
  %v1976 = vld [vmem:[%s2 + $0x18] sm:$0xff]
  %v1977 = vld [vmem:[%s2 + $0x20] sm:$0xff]
  %v1978 = vld [vmem:[%s2 + $0x28] sm:$0xff]
  %v1979 = vld [vmem:[%s2 + $0x30] sm:$0xff]
  %v1980 = vld [vmem:[%s2 + $0x38] sm:$0xff]
  %v1981 = vld [vmem:[%s2 + $0x40] sm:$0xff]
  %v1982 = vld [vmem:[%s2 + $0x48] sm:$0xff]
  %v1983 = vld [vmem:[%s2 + $0x50] sm:$0xff]
  %v1984 = vld [vmem:[%s2 + $0x58] sm:$0xff]
  %v1985 = vld [vmem:[%s2 + $0x60] sm:$0xff]
  %v1986 = vld [vmem:[%s2 + $0x68] sm:$0xff]
  %v1987 = vld [vmem:[%s2 + $0x70] sm:$0xff]
  %v1988 = vld [vmem:[%s2 + $0x78] sm:$0xff]
  %v1989 = vld [vmem:[%s2 + $0x80] sm:$0xff]
  %v1990 = vld [vmem:[%s2 + $0x88] sm:$0xff]
  %v1991 = vld [vmem:[%s2 + $0x90] sm:$0xff]
  %v1992 = vld [vmem:[%s2 + $0x98] sm:$0xff]
  %v1993 = vld [vmem:[%s2 + $0xa0] sm:$0xff]
  %v1994 = vld [vmem:[%s2 + $0xa8] sm:$0xff]
  %v1995 = vld [vmem:[%s2 + $0xb0] sm:$0xff]
  %v1996 = vld [vmem:[%s2 + $0xb8] sm:$0xff]
  %v1997 = vld [vmem:[%s2 + $0xc0] sm:$0xff]
  %v1998 = vld [vmem:[%s2 + $0xc8] sm:$0xff]
  %v1999 = vld [vmem:[%s2 + $0xd0] sm:$0xff]
  %v2000 = vld [vmem:[%s2 + $0xd8] sm:$0xff]
  %v2001 = vld [vmem:[%s2 + $0xe0] sm:$0xff]
  %v2002 = vld [vmem:[%s2 + $0xe8] sm:$0xff]
  %v2003 = vld [vmem:[%s2 + $0xf0] sm:$0xff]
  %v2004 = vld [vmem:[%s2 + $0xf8] sm:$0xff]
  %v2005 = vld [vmem:[%s2 + $0x100] sm:$0xff]
  %v2006 = vld [vmem:[%s2 + $0x108] sm:$0xff]
  %v2007 = vld [vmem:[%s2 + $0x110] sm:$0xff]
  %v2008 = vld [vmem:[%s2 + $0x118] sm:$0xff]
  %v2009 = vld [vmem:[%s2 + $0x120] sm:$0xff]
  %v2010 = vld [vmem:[%s2 + $0x128] sm:$0xff]
  %v2011 = vld [vmem:[%s2 + $0x130] sm:$0xff]
  %v2012 = vld [vmem:[%s2 + $0x138] sm:$0xff]
  %v2013 = vld [vmem:[%s2 + $0x140] sm:$0xff]
  %v2014 = vld [vmem:[%s2 + $0x148] sm:$0xff]
  %v2015 = vld [vmem:[%s2 + $0x150] sm:$0xff]
  %v2016 = vld [vmem:[%s2 + $0x158] sm:$0xff]
  %v2017 = vld [vmem:[%s2 + $0x160] sm:$0xff]
  %v2018 = vld [vmem:[%s2 + $0x168] sm:$0xff]
  %v2019 = vld [vmem:[%s2 + $0x170] sm:$0xff]
  %v2020 = vld [vmem:[%s2 + $0x178] sm:$0xff]
  %v2021 = vld [vmem:[#allocation2 + $0x18] sm:$0xff]
  %v2022 = vld [vmem:[#allocation2 + $0x20] sm:$0xff]
  %v2023 = vld [vmem:[#allocation2 + $0x28] sm:$0xff]
  %s2024 = scalar_lea.vmem %s2, 384
  %v2025 = vld [vmem:[%s2024] sm:$0xff]
  %v2026 = vld [vmem:[%s2024 + $0x8] sm:$0xff]
  %v2027 = vld [vmem:[%s2024 + $0x10] sm:$0xff]
  %v2028 = vld [vmem:[%s2024 + $0x18] sm:$0xff]
  %v2029 = vld [vmem:[%s2024 + $0x20] sm:$0xff]
  %v2030 = vld [vmem:[%s2024 + $0x28] sm:$0xff]
  %v2031 = vld [vmem:[%s2024 + $0x30] sm:$0xff]
  %v2032 = vld [vmem:[%s2024 + $0x38] sm:$0xff]
  %v2033 = vld [vmem:[%s2024 + $0x40] sm:$0xff]
  %v2034 = vld [vmem:[%s2024 + $0x48] sm:$0xff]
  %v2035 = vld [vmem:[%s2024 + $0x50] sm:$0xff]
  %v2036 = vld [vmem:[%s2024 + $0x58] sm:$0xff]
  %v2037 = vld [vmem:[%s2024 + $0x60] sm:$0xff]
  %v2038 = vld [vmem:[%s2024 + $0x68] sm:$0xff]
  %v2039 = vld [vmem:[%s2024 + $0x70] sm:$0xff]
  %v2040 = vld [vmem:[%s2024 + $0x78] sm:$0xff]
  %v2041 = vld [vmem:[%s2024 + $0x80] sm:$0xff]
  %v2042 = vld [vmem:[%s2024 + $0x88] sm:$0xff]
  %v2043 = vld [vmem:[%s2024 + $0x90] sm:$0xff]
  %v2044 = vld [vmem:[%s2024 + $0x98] sm:$0xff]
  %v2045 = vld [vmem:[%s2024 + $0xa0] sm:$0xff]
  %v2046 = vld [vmem:[%s2024 + $0xa8] sm:$0xff]
  %v2047 = vld [vmem:[%s2024 + $0xb0] sm:$0xff]
  %v2048 = vld [vmem:[%s2024 + $0xb8] sm:$0xff]
  %v2049 = vld [vmem:[%s2024 + $0xc0] sm:$0xff]
  %v2050 = vld [vmem:[%s2024 + $0xc8] sm:$0xff]
  %v2051 = vld [vmem:[%s2024 + $0xd0] sm:$0xff]
  %v2052 = vld [vmem:[%s2024 + $0xd8] sm:$0xff]
  %v2053 = vld [vmem:[%s2024 + $0xe0] sm:$0xff]
  %v2054 = vld [vmem:[%s2024 + $0xe8] sm:$0xff]
  %v2055 = vld [vmem:[%s2024 + $0xf0] sm:$0xff]
  %v2056 = vld [vmem:[%s2024 + $0xf8] sm:$0xff]
  %v2057 = vld [vmem:[%s2024 + $0x100] sm:$0xff]
  %v2058 = vld [vmem:[%s2024 + $0x108] sm:$0xff]
  %v2059 = vld [vmem:[%s2024 + $0x110] sm:$0xff]
  %v2060 = vld [vmem:[%s2024 + $0x118] sm:$0xff]
  %v2061 = vld [vmem:[%s2024 + $0x120] sm:$0xff]
  %v2062 = vld [vmem:[%s2024 + $0x128] sm:$0xff]
  %v2063 = vld [vmem:[%s2024 + $0x130] sm:$0xff]
  %v2064 = vld [vmem:[%s2024 + $0x138] sm:$0xff]
  %v2065 = vld [vmem:[%s2024 + $0x140] sm:$0xff]
  %v2066 = vld [vmem:[%s2024 + $0x148] sm:$0xff]
  %v2067 = vld [vmem:[%s2024 + $0x150] sm:$0xff]
  %v2068 = vld [vmem:[%s2024 + $0x158] sm:$0xff]
  %v2069 = vld [vmem:[%s2024 + $0x160] sm:$0xff]
  %v2070 = vld [vmem:[%s2024 + $0x168] sm:$0xff]
  %v2071 = vld [vmem:[%s2024 + $0x170] sm:$0xff]
  %v2072 = vld [vmem:[%s2024 + $0x178] sm:$0xff]
  %2073 = vmatpush.msra.mxu0 %v2040
  %2074 = vmatpush.msra.mxu0 %v2039
  %2075 = vmatpush.msra.mxu0 %v2038
  %2076 = vmatpush.msra.mxu0 %v2037
  %2077 = vmatpush.msra.mxu0 %v2036
  %2078 = vmatpush.msra.mxu0 %v2035
  %2079 = vmatpush.msra.mxu0 %v2034
  %2080 = vmatpush.msra.mxu0 %v2033
  %2081 = vmatpush.msra.mxu0 %v2032
  %2082 = vmatpush.msra.mxu0 %v2031
  %2083 = vmatpush.msra.mxu0 %v2030
  %2084 = vmatpush.msra.mxu0 %v2029
  %2085 = vmatpush.msra.mxu0 %v2028
  %2086 = vmatpush.msra.mxu0 %v2027
  %2087 = vmatpush.msra.mxu0 %v2026
  %2088 = vmatpush.msra.mxu0 %v2025
  %2089 = vmatmul.f32.gmra.mxu0 %v2021
  %v2090 = vpop.f32.mrf.mxu0
  %v2091 = vadd.f32 0.0, %v2090
  %2092 = vdwg.mxu0
  %2093 = vmatpush.msra.mxu0 %v2056
  %2094 = vmatpush.msra.mxu0 %v2055
  %2095 = vmatpush.msra.mxu0 %v2054
  %2096 = vmatpush.msra.mxu0 %v2053
  %2097 = vmatpush.msra.mxu0 %v2052
  %2098 = vmatpush.msra.mxu0 %v2051
  %2099 = vmatpush.msra.mxu0 %v2050
  %2100 = vmatpush.msra.mxu0 %v2049
  %2101 = vmatpush.msra.mxu0 %v2048
  %2102 = vmatpush.msra.mxu0 %v2047
  %2103 = vmatpush.msra.mxu0 %v2046
  %2104 = vmatpush.msra.mxu0 %v2045
  %2105 = vmatpush.msra.mxu0 %v2044
  %2106 = vmatpush.msra.mxu0 %v2043
  %2107 = vmatpush.msra.mxu0 %v2042
  %2108 = vmatpush.msra.mxu0 %v2041
  %2109 = vmatmul.f32.gmra.mxu0 %v2022
  %v2110 = vpop.f32.mrf.mxu0
  %v2111 = vadd.f32 %v2091, %v2110
  %2112 = vdwg.mxu0
  %2113 = vmatpush.msra.mxu0 %v2072
  %2114 = vmatpush.msra.mxu0 %v2071
  %2115 = vmatpush.msra.mxu0 %v2070
  %2116 = vmatpush.msra.mxu0 %v2069
  %2117 = vmatpush.msra.mxu0 %v2068
  %2118 = vmatpush.msra.mxu0 %v2067
  %2119 = vmatpush.msra.mxu0 %v2066
  %2120 = vmatpush.msra.mxu0 %v2065
  %2121 = vmatpush.msra.mxu0 %v2064
  %2122 = vmatpush.msra.mxu0 %v2063
  %2123 = vmatpush.msra.mxu0 %v2062
  %2124 = vmatpush.msra.mxu0 %v2061
  %2125 = vmatpush.msra.mxu0 %v2060
  %2126 = vmatpush.msra.mxu0 %v2059
  %2127 = vmatpush.msra.mxu0 %v2058
  %2128 = vmatpush.msra.mxu0 %v2057
  %2129 = vmatmul.f32.gmra.mxu0 %v2023
  %v2130 = vpop.f32.mrf.mxu0
  %v2131 = vadd.f32 %v2111, %v2130
  %2132 = vdwg.mxu0
  %2133 = vmatpush.msra.mxu0 %v1988
  %2134 = vmatpush.msra.mxu0 %v1987
  %2135 = vmatpush.msra.mxu0 %v1986
  %2136 = vmatpush.msra.mxu0 %v1985
  %2137 = vmatpush.msra.mxu0 %v1984
  %2138 = vmatpush.msra.mxu0 %v1983
  %2139 = vmatpush.msra.mxu0 %v1982
  %2140 = vmatpush.msra.mxu0 %v1981
  %2141 = vmatpush.msra.mxu0 %v1980
  %2142 = vmatpush.msra.mxu0 %v1979
  %2143 = vmatpush.msra.mxu0 %v1978
  %2144 = vmatpush.msra.mxu0 %v1977
  %2145 = vmatpush.msra.mxu0 %v1976
  %2146 = vmatpush.msra.mxu0 %v1975
  %2147 = vmatpush.msra.mxu0 %v1974
  %2148 = vmatpush.msra.mxu0 %v1973
  %2149 = vmatmul.f32.gmra.mxu0 %v1970
  %v2150 = vpop.f32.mrf.mxu0
  %v2151 = vadd.f32 %v2131, %v2150
  %2152 = vdwg.mxu0
  %2153 = vmatpush.msra.mxu0 %v2004
  %2154 = vmatpush.msra.mxu0 %v2003
  %2155 = vmatpush.msra.mxu0 %v2002
  %2156 = vmatpush.msra.mxu0 %v2001
  %2157 = vmatpush.msra.mxu0 %v2000
  %2158 = vmatpush.msra.mxu0 %v1999
  %2159 = vmatpush.msra.mxu0 %v1998
  %2160 = vmatpush.msra.mxu0 %v1997
  %2161 = vmatpush.msra.mxu0 %v1996
  %2162 = vmatpush.msra.mxu0 %v1995
  %2163 = vmatpush.msra.mxu0 %v1994
  %2164 = vmatpush.msra.mxu0 %v1993
  %2165 = vmatpush.msra.mxu0 %v1992
  %2166 = vmatpush.msra.mxu0 %v1991
  %2167 = vmatpush.msra.mxu0 %v1990
  %2168 = vmatpush.msra.mxu0 %v1989
  %2169 = vmatmul.f32.gmra.mxu0 %v1971
  %v2170 = vpop.f32.mrf.mxu0
  %v2171 = vadd.f32 %v2151, %v2170
  %2172 = vdwg.mxu0
  %2173 = vmatpush.msra.mxu0 %v2020
  %2174 = vmatpush.msra.mxu0 %v2019
  %2175 = vmatpush.msra.mxu0 %v2018
  %2176 = vmatpush.msra.mxu0 %v2017
  %2177 = vmatpush.msra.mxu0 %v2016
  %2178 = vmatpush.msra.mxu0 %v2015
  %2179 = vmatpush.msra.mxu0 %v2014
  %2180 = vmatpush.msra.mxu0 %v2013
  %2181 = vmatpush.msra.mxu0 %v2012
  %2182 = vmatpush.msra.mxu0 %v2011
  %2183 = vmatpush.msra.mxu0 %v2010
  %2184 = vmatpush.msra.mxu0 %v2009
  %2185 = vmatpush.msra.mxu0 %v2008
  %2186 = vmatpush.msra.mxu0 %v2007
  %2187 = vmatpush.msra.mxu0 %v2006
  %2188 = vmatpush.msra.mxu0 %v2005
  %2189 = vmatmul.f32.gmra.mxu0 %v1972
  %v2190 = vpop.f32.mrf.mxu0
  %v2191 = vadd.f32 %v2171, %v2190
  %2192 = vdwg.mxu0
  %v2193 = vld [vmem:[#allocation2 + $0x30] sm:$0xff]
  %v2194 = vld [vmem:[#allocation2 + $0x38] sm:$0xff]
  %v2195 = vld [vmem:[#allocation2 + $0x40] sm:$0xff]
  %s2196 = scalar_lea.vmem %s2, 768
  %v2197 = vld [vmem:[%s2196] sm:$0xff]
  %v2198 = vld [vmem:[%s2196 + $0x8] sm:$0xff]
  %v2199 = vld [vmem:[%s2196 + $0x10] sm:$0xff]
  %v2200 = vld [vmem:[%s2196 + $0x18] sm:$0xff]
  %v2201 = vld [vmem:[%s2196 + $0x20] sm:$0xff]
  %v2202 = vld [vmem:[%s2196 + $0x28] sm:$0xff]
  %v2203 = vld [vmem:[%s2196 + $0x30] sm:$0xff]
  %v2204 = vld [vmem:[%s2196 + $0x38] sm:$0xff]
  %v2205 = vld [vmem:[%s2196 + $0x40] sm:$0xff]
  %v2206 = vld [vmem:[%s2196 + $0x48] sm:$0xff]
  %v2207 = vld [vmem:[%s2196 + $0x50] sm:$0xff]
  %v2208 = vld [vmem:[%s2196 + $0x58] sm:$0xff]
  %v2209 = vld [vmem:[%s2196 + $0x60] sm:$0xff]
  %v2210 = vld [vmem:[%s2196 + $0x68] sm:$0xff]
  %v2211 = vld [vmem:[%s2196 + $0x70] sm:$0xff]
  %v2212 = vld [vmem:[%s2196 + $0x78] sm:$0xff]
  %v2213 = vld [vmem:[%s2196 + $0x80] sm:$0xff]
  %v2214 = vld [vmem:[%s2196 + $0x88] sm:$0xff]
  %v2215 = vld [vmem:[%s2196 + $0x90] sm:$0xff]
  %v2216 = vld [vmem:[%s2196 + $0x98] sm:$0xff]
  %v2217 = vld [vmem:[%s2196 + $0xa0] sm:$0xff]
  %v2218 = vld [vmem:[%s2196 + $0xa8] sm:$0xff]
  %v2219 = vld [vmem:[%s2196 + $0xb0] sm:$0xff]
  %v2220 = vld [vmem:[%s2196 + $0xb8] sm:$0xff]
  %v2221 = vld [vmem:[%s2196 + $0xc0] sm:$0xff]
  %v2222 = vld [vmem:[%s2196 + $0xc8] sm:$0xff]
  %v2223 = vld [vmem:[%s2196 + $0xd0] sm:$0xff]
  %v2224 = vld [vmem:[%s2196 + $0xd8] sm:$0xff]
  %v2225 = vld [vmem:[%s2196 + $0xe0] sm:$0xff]
  %v2226 = vld [vmem:[%s2196 + $0xe8] sm:$0xff]
  %v2227 = vld [vmem:[%s2196 + $0xf0] sm:$0xff]
  %v2228 = vld [vmem:[%s2196 + $0xf8] sm:$0xff]
  %v2229 = vld [vmem:[%s2196 + $0x100] sm:$0xff]
  %v2230 = vld [vmem:[%s2196 + $0x108] sm:$0xff]
  %v2231 = vld [vmem:[%s2196 + $0x110] sm:$0xff]
  %v2232 = vld [vmem:[%s2196 + $0x118] sm:$0xff]
  %v2233 = vld [vmem:[%s2196 + $0x120] sm:$0xff]
  %v2234 = vld [vmem:[%s2196 + $0x128] sm:$0xff]
  %v2235 = vld [vmem:[%s2196 + $0x130] sm:$0xff]
  %v2236 = vld [vmem:[%s2196 + $0x138] sm:$0xff]
  %v2237 = vld [vmem:[%s2196 + $0x140] sm:$0xff]
  %v2238 = vld [vmem:[%s2196 + $0x148] sm:$0xff]
  %v2239 = vld [vmem:[%s2196 + $0x150] sm:$0xff]
  %v2240 = vld [vmem:[%s2196 + $0x158] sm:$0xff]
  %v2241 = vld [vmem:[%s2196 + $0x160] sm:$0xff]
  %v2242 = vld [vmem:[%s2196 + $0x168] sm:$0xff]
  %v2243 = vld [vmem:[%s2196 + $0x170] sm:$0xff]
  %v2244 = vld [vmem:[%s2196 + $0x178] sm:$0xff]
  %2245 = vmatpush.msra.mxu0 %v2212
  %2246 = vmatpush.msra.mxu0 %v2211
  %2247 = vmatpush.msra.mxu0 %v2210
  %2248 = vmatpush.msra.mxu0 %v2209
  %2249 = vmatpush.msra.mxu0 %v2208
  %2250 = vmatpush.msra.mxu0 %v2207
  %2251 = vmatpush.msra.mxu0 %v2206
  %2252 = vmatpush.msra.mxu0 %v2205
  %2253 = vmatpush.msra.mxu0 %v2204
  %2254 = vmatpush.msra.mxu0 %v2203
  %2255 = vmatpush.msra.mxu0 %v2202
  %2256 = vmatpush.msra.mxu0 %v2201
  %2257 = vmatpush.msra.mxu0 %v2200
  %2258 = vmatpush.msra.mxu0 %v2199
  %2259 = vmatpush.msra.mxu0 %v2198
  %2260 = vmatpush.msra.mxu0 %v2197
  %2261 = vmatmul.f32.gmra.mxu0 %v2193
  %v2262 = vpop.f32.mrf.mxu0
  %v2263 = vadd.f32 0.0, %v2262
  %2264 = vdwg.mxu0
  %2265 = vmatpush.msra.mxu0 %v2228
  %2266 = vmatpush.msra.mxu0 %v2227
  %2267 = vmatpush.msra.mxu0 %v2226
  %2268 = vmatpush.msra.mxu0 %v2225
  %2269 = vmatpush.msra.mxu0 %v2224
  %2270 = vmatpush.msra.mxu0 %v2223
  %2271 = vmatpush.msra.mxu0 %v2222
  %2272 = vmatpush.msra.mxu0 %v2221
  %2273 = vmatpush.msra.mxu0 %v2220
  %2274 = vmatpush.msra.mxu0 %v2219
  %2275 = vmatpush.msra.mxu0 %v2218
  %2276 = vmatpush.msra.mxu0 %v2217
  %2277 = vmatpush.msra.mxu0 %v2216
  %2278 = vmatpush.msra.mxu0 %v2215
  %2279 = vmatpush.msra.mxu0 %v2214
  %2280 = vmatpush.msra.mxu0 %v2213
  %2281 = vmatmul.f32.gmra.mxu0 %v2194
  %v2282 = vpop.f32.mrf.mxu0
  %v2283 = vadd.f32 %v2263, %v2282
  %2284 = vdwg.mxu0
  %2285 = vmatpush.msra.mxu0 %v2244
  %2286 = vmatpush.msra.mxu0 %v2243
  %2287 = vmatpush.msra.mxu0 %v2242
  %2288 = vmatpush.msra.mxu0 %v2241
  %2289 = vmatpush.msra.mxu0 %v2240
  %2290 = vmatpush.msra.mxu0 %v2239
  %2291 = vmatpush.msra.mxu0 %v2238
  %2292 = vmatpush.msra.mxu0 %v2237
  %2293 = vmatpush.msra.mxu0 %v2236
  %2294 = vmatpush.msra.mxu0 %v2235
  %2295 = vmatpush.msra.mxu0 %v2234
  %2296 = vmatpush.msra.mxu0 %v2233
  %2297 = vmatpush.msra.mxu0 %v2232
  %2298 = vmatpush.msra.mxu0 %v2231
  %2299 = vmatpush.msra.mxu0 %v2230
  %2300 = vmatpush.msra.mxu0 %v2229
  %2301 = vmatmul.f32.gmra.mxu0 %v2195
  %v2302 = vpop.f32.mrf.mxu0
  %v2303 = vadd.f32 %v2283, %v2302
  %2304 = vdwg.mxu0
  %v2305 = vadd.f32 %v2191, %v2303
  %v2306 = vld [vmem:[#allocation2 + $0x48] sm:$0xff]
  %v2307 = vld [vmem:[#allocation2 + $0x50] sm:$0xff]
  %v2308 = vld [vmem:[#allocation2 + $0x58] sm:$0xff]
  %s2309 = scalar_lea.vmem %s2, 1152
  %v2310 = vld [vmem:[%s2309] sm:$0xff]
  %v2311 = vld [vmem:[%s2309 + $0x8] sm:$0xff]
  %v2312 = vld [vmem:[%s2309 + $0x10] sm:$0xff]
  %v2313 = vld [vmem:[%s2309 + $0x18] sm:$0xff]
  %v2314 = vld [vmem:[%s2309 + $0x20] sm:$0xff]
  %v2315 = vld [vmem:[%s2309 + $0x28] sm:$0xff]
  %v2316 = vld [vmem:[%s2309 + $0x30] sm:$0xff]
  %v2317 = vld [vmem:[%s2309 + $0x38] sm:$0xff]
  %v2318 = vld [vmem:[%s2309 + $0x40] sm:$0xff]
  %v2319 = vld [vmem:[%s2309 + $0x48] sm:$0xff]
  %v2320 = vld [vmem:[%s2309 + $0x50] sm:$0xff]
  %v2321 = vld [vmem:[%s2309 + $0x58] sm:$0xff]
  %v2322 = vld [vmem:[%s2309 + $0x60] sm:$0xff]
  %v2323 = vld [vmem:[%s2309 + $0x68] sm:$0xff]
  %v2324 = vld [vmem:[%s2309 + $0x70] sm:$0xff]
  %v2325 = vld [vmem:[%s2309 + $0x78] sm:$0xff]
  %v2326 = vld [vmem:[%s2309 + $0x80] sm:$0xff]
  %v2327 = vld [vmem:[%s2309 + $0x88] sm:$0xff]
  %v2328 = vld [vmem:[%s2309 + $0x90] sm:$0xff]
  %v2329 = vld [vmem:[%s2309 + $0x98] sm:$0xff]
  %v2330 = vld [vmem:[%s2309 + $0xa0] sm:$0xff]
  %v2331 = vld [vmem:[%s2309 + $0xa8] sm:$0xff]
  %v2332 = vld [vmem:[%s2309 + $0xb0] sm:$0xff]
  %v2333 = vld [vmem:[%s2309 + $0xb8] sm:$0xff]
  %v2334 = vld [vmem:[%s2309 + $0xc0] sm:$0xff]
  %v2335 = vld [vmem:[%s2309 + $0xc8] sm:$0xff]
  %v2336 = vld [vmem:[%s2309 + $0xd0] sm:$0xff]
  %v2337 = vld [vmem:[%s2309 + $0xd8] sm:$0xff]
  %v2338 = vld [vmem:[%s2309 + $0xe0] sm:$0xff]
  %v2339 = vld [vmem:[%s2309 + $0xe8] sm:$0xff]
  %v2340 = vld [vmem:[%s2309 + $0xf0] sm:$0xff]
  %v2341 = vld [vmem:[%s2309 + $0xf8] sm:$0xff]
  %v2342 = vld [vmem:[%s2309 + $0x100] sm:$0xff]
  %v2343 = vld [vmem:[%s2309 + $0x108] sm:$0xff]
  %v2344 = vld [vmem:[%s2309 + $0x110] sm:$0xff]
  %v2345 = vld [vmem:[%s2309 + $0x118] sm:$0xff]
  %v2346 = vld [vmem:[%s2309 + $0x120] sm:$0xff]
  %v2347 = vld [vmem:[%s2309 + $0x128] sm:$0xff]
  %v2348 = vld [vmem:[%s2309 + $0x130] sm:$0xff]
  %v2349 = vld [vmem:[%s2309 + $0x138] sm:$0xff]
  %v2350 = vld [vmem:[%s2309 + $0x140] sm:$0xff]
  %v2351 = vld [vmem:[%s2309 + $0x148] sm:$0xff]
  %v2352 = vld [vmem:[%s2309 + $0x150] sm:$0xff]
  %v2353 = vld [vmem:[%s2309 + $0x158] sm:$0xff]
  %v2354 = vld [vmem:[%s2309 + $0x160] sm:$0xff]
  %v2355 = vld [vmem:[%s2309 + $0x168] sm:$0xff]
  %v2356 = vld [vmem:[%s2309 + $0x170] sm:$0xff]
  %v2357 = vld [vmem:[%s2309 + $0x178] sm:$0xff]
  %2358 = vmatpush.msra.mxu0 %v2325
  %2359 = vmatpush.msra.mxu0 %v2324
  %2360 = vmatpush.msra.mxu0 %v2323
  %2361 = vmatpush.msra.mxu0 %v2322
  %2362 = vmatpush.msra.mxu0 %v2321
  %2363 = vmatpush.msra.mxu0 %v2320
  %2364 = vmatpush.msra.mxu0 %v2319
  %2365 = vmatpush.msra.mxu0 %v2318
  %2366 = vmatpush.msra.mxu0 %v2317
  %2367 = vmatpush.msra.mxu0 %v2316
  %2368 = vmatpush.msra.mxu0 %v2315
  %2369 = vmatpush.msra.mxu0 %v2314
  %2370 = vmatpush.msra.mxu0 %v2313
  %2371 = vmatpush.msra.mxu0 %v2312
  %2372 = vmatpush.msra.mxu0 %v2311
  %2373 = vmatpush.msra.mxu0 %v2310
  %2374 = vmatmul.f32.gmra.mxu0 %v2306
  %v2375 = vpop.f32.mrf.mxu0
  %v2376 = vadd.f32 0.0, %v2375
  %2377 = vdwg.mxu0
  %2378 = vmatpush.msra.mxu0 %v2341
  %2379 = vmatpush.msra.mxu0 %v2340
  %2380 = vmatpush.msra.mxu0 %v2339
  %2381 = vmatpush.msra.mxu0 %v2338
  %2382 = vmatpush.msra.mxu0 %v2337
  %2383 = vmatpush.msra.mxu0 %v2336
  %2384 = vmatpush.msra.mxu0 %v2335
  %2385 = vmatpush.msra.mxu0 %v2334
  %2386 = vmatpush.msra.mxu0 %v2333
  %2387 = vmatpush.msra.mxu0 %v2332
  %2388 = vmatpush.msra.mxu0 %v2331
  %2389 = vmatpush.msra.mxu0 %v2330
  %2390 = vmatpush.msra.mxu0 %v2329
  %2391 = vmatpush.msra.mxu0 %v2328
  %2392 = vmatpush.msra.mxu0 %v2327
  %2393 = vmatpush.msra.mxu0 %v2326
  %2394 = vmatmul.f32.gmra.mxu0 %v2307
  %v2395 = vpop.f32.mrf.mxu0
  %v2396 = vadd.f32 %v2376, %v2395
  %2397 = vdwg.mxu0
  %2398 = vmatpush.msra.mxu0 %v2357
  %2399 = vmatpush.msra.mxu0 %v2356
  %2400 = vmatpush.msra.mxu0 %v2355
  %2401 = vmatpush.msra.mxu0 %v2354
  %2402 = vmatpush.msra.mxu0 %v2353
  %2403 = vmatpush.msra.mxu0 %v2352
  %2404 = vmatpush.msra.mxu0 %v2351
  %2405 = vmatpush.msra.mxu0 %v2350
  %2406 = vmatpush.msra.mxu0 %v2349
  %2407 = vmatpush.msra.mxu0 %v2348
  %2408 = vmatpush.msra.mxu0 %v2347
  %2409 = vmatpush.msra.mxu0 %v2346
  %2410 = vmatpush.msra.mxu0 %v2345
  %2411 = vmatpush.msra.mxu0 %v2344
  %2412 = vmatpush.msra.mxu0 %v2343
  %2413 = vmatpush.msra.mxu0 %v2342
  %2414 = vmatmul.f32.gmra.mxu0 %v2308
  %v2415 = vpop.f32.mrf.mxu0
  %v2416 = vadd.f32 %v2396, %v2415
  %2417 = vdwg.mxu0
  %v2418 = vadd.f32 %v2305, %v2416
  %v2419 = vld [vmem:[#allocation2 + $0x60] sm:$0xff]
  %v2420 = vld [vmem:[#allocation2 + $0x68] sm:$0xff]
  %v2421 = vld [vmem:[#allocation2 + $0x70] sm:$0xff]
  %s2422 = scalar_lea.vmem %s2, 1536
  %v2423 = vld [vmem:[%s2422] sm:$0xff]
  %v2424 = vld [vmem:[%s2422 + $0x8] sm:$0xff]
  %v2425 = vld [vmem:[%s2422 + $0x10] sm:$0xff]
  %v2426 = vld [vmem:[%s2422 + $0x18] sm:$0xff]
  %v2427 = vld [vmem:[%s2422 + $0x20] sm:$0xff]
  %v2428 = vld [vmem:[%s2422 + $0x28] sm:$0xff]
  %v2429 = vld [vmem:[%s2422 + $0x30] sm:$0xff]
  %v2430 = vld [vmem:[%s2422 + $0x38] sm:$0xff]
  %v2431 = vld [vmem:[%s2422 + $0x40] sm:$0xff]
  %v2432 = vld [vmem:[%s2422 + $0x48] sm:$0xff]
  %v2433 = vld [vmem:[%s2422 + $0x50] sm:$0xff]
  %v2434 = vld [vmem:[%s2422 + $0x58] sm:$0xff]
  %v2435 = vld [vmem:[%s2422 + $0x60] sm:$0xff]
  %v2436 = vld [vmem:[%s2422 + $0x68] sm:$0xff]
  %v2437 = vld [vmem:[%s2422 + $0x70] sm:$0xff]
  %v2438 = vld [vmem:[%s2422 + $0x78] sm:$0xff]
  %v2439 = vld [vmem:[%s2422 + $0x80] sm:$0xff]
  %v2440 = vld [vmem:[%s2422 + $0x88] sm:$0xff]
  %v2441 = vld [vmem:[%s2422 + $0x90] sm:$0xff]
  %v2442 = vld [vmem:[%s2422 + $0x98] sm:$0xff]
  %v2443 = vld [vmem:[%s2422 + $0xa0] sm:$0xff]
  %v2444 = vld [vmem:[%s2422 + $0xa8] sm:$0xff]
  %v2445 = vld [vmem:[%s2422 + $0xb0] sm:$0xff]
  %v2446 = vld [vmem:[%s2422 + $0xb8] sm:$0xff]
  %v2447 = vld [vmem:[%s2422 + $0xc0] sm:$0xff]
  %v2448 = vld [vmem:[%s2422 + $0xc8] sm:$0xff]
  %v2449 = vld [vmem:[%s2422 + $0xd0] sm:$0xff]
  %v2450 = vld [vmem:[%s2422 + $0xd8] sm:$0xff]
  %v2451 = vld [vmem:[%s2422 + $0xe0] sm:$0xff]
  %v2452 = vld [vmem:[%s2422 + $0xe8] sm:$0xff]
  %v2453 = vld [vmem:[%s2422 + $0xf0] sm:$0xff]
  %v2454 = vld [vmem:[%s2422 + $0xf8] sm:$0xff]
  %v2455 = vld [vmem:[%s2422 + $0x100] sm:$0xff]
  %v2456 = vld [vmem:[%s2422 + $0x108] sm:$0xff]
  %v2457 = vld [vmem:[%s2422 + $0x110] sm:$0xff]
  %v2458 = vld [vmem:[%s2422 + $0x118] sm:$0xff]
  %v2459 = vld [vmem:[%s2422 + $0x120] sm:$0xff]
  %v2460 = vld [vmem:[%s2422 + $0x128] sm:$0xff]
  %v2461 = vld [vmem:[%s2422 + $0x130] sm:$0xff]
  %v2462 = vld [vmem:[%s2422 + $0x138] sm:$0xff]
  %v2463 = vld [vmem:[%s2422 + $0x140] sm:$0xff]
  %v2464 = vld [vmem:[%s2422 + $0x148] sm:$0xff]
  %v2465 = vld [vmem:[%s2422 + $0x150] sm:$0xff]
  %v2466 = vld [vmem:[%s2422 + $0x158] sm:$0xff]
  %v2467 = vld [vmem:[%s2422 + $0x160] sm:$0xff]
  %v2468 = vld [vmem:[%s2422 + $0x168] sm:$0xff]
  %v2469 = vld [vmem:[%s2422 + $0x170] sm:$0xff]
  %v2470 = vld [vmem:[%s2422 + $0x178] sm:$0xff]
  %2471 = vmatpush.msra.mxu0 %v2438
  %2472 = vmatpush.msra.mxu0 %v2437
  %2473 = vmatpush.msra.mxu0 %v2436
  %2474 = vmatpush.msra.mxu0 %v2435
  %2475 = vmatpush.msra.mxu0 %v2434
  %2476 = vmatpush.msra.mxu0 %v2433
  %2477 = vmatpush.msra.mxu0 %v2432
  %2478 = vmatpush.msra.mxu0 %v2431
  %2479 = vmatpush.msra.mxu0 %v2430
  %2480 = vmatpush.msra.mxu0 %v2429
  %2481 = vmatpush.msra.mxu0 %v2428
  %2482 = vmatpush.msra.mxu0 %v2427
  %2483 = vmatpush.msra.mxu0 %v2426
  %2484 = vmatpush.msra.mxu0 %v2425
  %2485 = vmatpush.msra.mxu0 %v2424
  %2486 = vmatpush.msra.mxu0 %v2423
  %2487 = vmatmul.f32.gmra.mxu0 %v2419
  %v2488 = vpop.f32.mrf.mxu0
  %v2489 = vadd.f32 0.0, %v2488
  %2490 = vdwg.mxu0
  %2491 = vmatpush.msra.mxu0 %v2454
  %2492 = vmatpush.msra.mxu0 %v2453
  %2493 = vmatpush.msra.mxu0 %v2452
  %2494 = vmatpush.msra.mxu0 %v2451
  %2495 = vmatpush.msra.mxu0 %v2450
  %2496 = vmatpush.msra.mxu0 %v2449
  %2497 = vmatpush.msra.mxu0 %v2448
  %2498 = vmatpush.msra.mxu0 %v2447
  %2499 = vmatpush.msra.mxu0 %v2446
  %2500 = vmatpush.msra.mxu0 %v2445
  %2501 = vmatpush.msra.mxu0 %v2444
  %2502 = vmatpush.msra.mxu0 %v2443
  %2503 = vmatpush.msra.mxu0 %v2442
  %2504 = vmatpush.msra.mxu0 %v2441
  %2505 = vmatpush.msra.mxu0 %v2440
  %2506 = vmatpush.msra.mxu0 %v2439
  %2507 = vmatmul.f32.gmra.mxu0 %v2420
  %v2508 = vpop.f32.mrf.mxu0
  %v2509 = vadd.f32 %v2489, %v2508
  %2510 = vdwg.mxu0
  %2511 = vmatpush.msra.mxu0 %v2470
  %2512 = vmatpush.msra.mxu0 %v2469
  %2513 = vmatpush.msra.mxu0 %v2468
  %2514 = vmatpush.msra.mxu0 %v2467
  %2515 = vmatpush.msra.mxu0 %v2466
  %2516 = vmatpush.msra.mxu0 %v2465
  %2517 = vmatpush.msra.mxu0 %v2464
  %2518 = vmatpush.msra.mxu0 %v2463
  %2519 = vmatpush.msra.mxu0 %v2462
  %2520 = vmatpush.msra.mxu0 %v2461
  %2521 = vmatpush.msra.mxu0 %v2460
  %2522 = vmatpush.msra.mxu0 %v2459
  %2523 = vmatpush.msra.mxu0 %v2458
  %2524 = vmatpush.msra.mxu0 %v2457
  %2525 = vmatpush.msra.mxu0 %v2456
  %2526 = vmatpush.msra.mxu0 %v2455
  %2527 = vmatmul.f32.gmra.mxu0 %v2421
  %v2528 = vpop.f32.mrf.mxu0
  %v2529 = vadd.f32 %v2509, %v2528
  %2530 = vdwg.mxu0
  %v2531 = vadd.f32 %v2418, %v2529
  %v2532 = vld [vmem:[#allocation2 + $0x78] sm:$0xff]
  %v2533 = vld [vmem:[#allocation2 + $0x80] sm:$0xff]
  %v2534 = vld [vmem:[#allocation2 + $0x88] sm:$0xff]
  %s2535 = scalar_lea.vmem %s2, 1920
  %v2536 = vld [vmem:[%s2535] sm:$0xff]
  %v2537 = vld [vmem:[%s2535 + $0x8] sm:$0xff]
  %v2538 = vld [vmem:[%s2535 + $0x10] sm:$0xff]
  %v2539 = vld [vmem:[%s2535 + $0x18] sm:$0xff]
  %v2540 = vld [vmem:[%s2535 + $0x20] sm:$0xff]
  %v2541 = vld [vmem:[%s2535 + $0x28] sm:$0xff]
  %v2542 = vld [vmem:[%s2535 + $0x30] sm:$0xff]
  %v2543 = vld [vmem:[%s2535 + $0x38] sm:$0xff]
  %v2544 = vld [vmem:[%s2535 + $0x40] sm:$0xff]
  %v2545 = vld [vmem:[%s2535 + $0x48] sm:$0xff]
  %v2546 = vld [vmem:[%s2535 + $0x50] sm:$0xff]
  %v2547 = vld [vmem:[%s2535 + $0x58] sm:$0xff]
  %v2548 = vld [vmem:[%s2535 + $0x60] sm:$0xff]
  %v2549 = vld [vmem:[%s2535 + $0x68] sm:$0xff]
  %v2550 = vld [vmem:[%s2535 + $0x70] sm:$0xff]
  %v2551 = vld [vmem:[%s2535 + $0x78] sm:$0xff]
  %v2552 = vld [vmem:[%s2535 + $0x80] sm:$0xff]
  %v2553 = vld [vmem:[%s2535 + $0x88] sm:$0xff]
  %v2554 = vld [vmem:[%s2535 + $0x90] sm:$0xff]
  %v2555 = vld [vmem:[%s2535 + $0x98] sm:$0xff]
  %v2556 = vld [vmem:[%s2535 + $0xa0] sm:$0xff]
  %v2557 = vld [vmem:[%s2535 + $0xa8] sm:$0xff]
  %v2558 = vld [vmem:[%s2535 + $0xb0] sm:$0xff]
  %v2559 = vld [vmem:[%s2535 + $0xb8] sm:$0xff]
  %v2560 = vld [vmem:[%s2535 + $0xc0] sm:$0xff]
  %v2561 = vld [vmem:[%s2535 + $0xc8] sm:$0xff]
  %v2562 = vld [vmem:[%s2535 + $0xd0] sm:$0xff]
  %v2563 = vld [vmem:[%s2535 + $0xd8] sm:$0xff]
  %v2564 = vld [vmem:[%s2535 + $0xe0] sm:$0xff]
  %v2565 = vld [vmem:[%s2535 + $0xe8] sm:$0xff]
  %v2566 = vld [vmem:[%s2535 + $0xf0] sm:$0xff]
  %v2567 = vld [vmem:[%s2535 + $0xf8] sm:$0xff]
  %v2568 = vld [vmem:[%s2535 + $0x100] sm:$0xff]
  %v2569 = vld [vmem:[%s2535 + $0x108] sm:$0xff]
  %v2570 = vld [vmem:[%s2535 + $0x110] sm:$0xff]
  %v2571 = vld [vmem:[%s2535 + $0x118] sm:$0xff]
  %v2572 = vld [vmem:[%s2535 + $0x120] sm:$0xff]
  %v2573 = vld [vmem:[%s2535 + $0x128] sm:$0xff]
  %v2574 = vld [vmem:[%s2535 + $0x130] sm:$0xff]
  %v2575 = vld [vmem:[%s2535 + $0x138] sm:$0xff]
  %v2576 = vld [vmem:[%s2535 + $0x140] sm:$0xff]
  %v2577 = vld [vmem:[%s2535 + $0x148] sm:$0xff]
  %v2578 = vld [vmem:[%s2535 + $0x150] sm:$0xff]
  %v2579 = vld [vmem:[%s2535 + $0x158] sm:$0xff]
  %v2580 = vld [vmem:[%s2535 + $0x160] sm:$0xff]
  %v2581 = vld [vmem:[%s2535 + $0x168] sm:$0xff]
  %v2582 = vld [vmem:[%s2535 + $0x170] sm:$0xff]
  %v2583 = vld [vmem:[%s2535 + $0x178] sm:$0xff]
  %2584 = vmatpush.msra.mxu0 %v2551
  %2585 = vmatpush.msra.mxu0 %v2550
  %2586 = vmatpush.msra.mxu0 %v2549
  %2587 = vmatpush.msra.mxu0 %v2548
  %2588 = vmatpush.msra.mxu0 %v2547
  %2589 = vmatpush.msra.mxu0 %v2546
  %2590 = vmatpush.msra.mxu0 %v2545
  %2591 = vmatpush.msra.mxu0 %v2544
  %2592 = vmatpush.msra.mxu0 %v2543
  %2593 = vmatpush.msra.mxu0 %v2542
  %2594 = vmatpush.msra.mxu0 %v2541
  %2595 = vmatpush.msra.mxu0 %v2540
  %2596 = vmatpush.msra.mxu0 %v2539
  %2597 = vmatpush.msra.mxu0 %v2538
  %2598 = vmatpush.msra.mxu0 %v2537
  %2599 = vmatpush.msra.mxu0 %v2536
  %2600 = vmatmul.f32.gmra.mxu0 %v2532
  %v2601 = vpop.f32.mrf.mxu0
  %v2602 = vadd.f32 0.0, %v2601
  %2603 = vdwg.mxu0
  %2604 = vmatpush.msra.mxu0 %v2567
  %2605 = vmatpush.msra.mxu0 %v2566
  %2606 = vmatpush.msra.mxu0 %v2565
  %2607 = vmatpush.msra.mxu0 %v2564
  %2608 = vmatpush.msra.mxu0 %v2563
  %2609 = vmatpush.msra.mxu0 %v2562
  %2610 = vmatpush.msra.mxu0 %v2561
  %2611 = vmatpush.msra.mxu0 %v2560
  %2612 = vmatpush.msra.mxu0 %v2559
  %2613 = vmatpush.msra.mxu0 %v2558
  %2614 = vmatpush.msra.mxu0 %v2557
  %2615 = vmatpush.msra.mxu0 %v2556
  %2616 = vmatpush.msra.mxu0 %v2555
  %2617 = vmatpush.msra.mxu0 %v2554
  %2618 = vmatpush.msra.mxu0 %v2553
  %2619 = vmatpush.msra.mxu0 %v2552
  %2620 = vmatmul.f32.gmra.mxu0 %v2533
  %v2621 = vpop.f32.mrf.mxu0
  %v2622 = vadd.f32 %v2602, %v2621
  %2623 = vdwg.mxu0
  %2624 = vmatpush.msra.mxu0 %v2583
  %2625 = vmatpush.msra.mxu0 %v2582
  %2626 = vmatpush.msra.mxu0 %v2581
  %2627 = vmatpush.msra.mxu0 %v2580
  %2628 = vmatpush.msra.mxu0 %v2579
  %2629 = vmatpush.msra.mxu0 %v2578
  %2630 = vmatpush.msra.mxu0 %v2577
  %2631 = vmatpush.msra.mxu0 %v2576
  %2632 = vmatpush.msra.mxu0 %v2575
  %2633 = vmatpush.msra.mxu0 %v2574
  %2634 = vmatpush.msra.mxu0 %v2573
  %2635 = vmatpush.msra.mxu0 %v2572
  %2636 = vmatpush.msra.mxu0 %v2571
  %2637 = vmatpush.msra.mxu0 %v2570
  %2638 = vmatpush.msra.mxu0 %v2569
  %2639 = vmatpush.msra.mxu0 %v2568
  %2640 = vmatmul.f32.gmra.mxu0 %v2534
  %v2641 = vpop.f32.mrf.mxu0
  %v2642 = vadd.f32 %v2622, %v2641
  %2643 = vdwg.mxu0
  %v2644 = vadd.f32 %v2531, %v2642
  %v2645 = vld [vmem:[#allocation2 + $0x90] sm:$0xff]
  %v2646 = vld [vmem:[#allocation2 + $0x98] sm:$0xff]
  %v2647 = vld [vmem:[#allocation2 + $0xa0] sm:$0xff]
  %s2648 = scalar_lea.vmem %s2, 2304
  %v2649 = vld [vmem:[%s2648] sm:$0xff]
  %v2650 = vld [vmem:[%s2648 + $0x8] sm:$0xff]
  %v2651 = vld [vmem:[%s2648 + $0x10] sm:$0xff]
  %v2652 = vld [vmem:[%s2648 + $0x18] sm:$0xff]
  %v2653 = vld [vmem:[%s2648 + $0x20] sm:$0xff]
  %v2654 = vld [vmem:[%s2648 + $0x28] sm:$0xff]
  %v2655 = vld [vmem:[%s2648 + $0x30] sm:$0xff]
  %v2656 = vld [vmem:[%s2648 + $0x38] sm:$0xff]
  %v2657 = vld [vmem:[%s2648 + $0x40] sm:$0xff]
  %v2658 = vld [vmem:[%s2648 + $0x48] sm:$0xff]
  %v2659 = vld [vmem:[%s2648 + $0x50] sm:$0xff]
  %v2660 = vld [vmem:[%s2648 + $0x58] sm:$0xff]
  %v2661 = vld [vmem:[%s2648 + $0x60] sm:$0xff]
  %v2662 = vld [vmem:[%s2648 + $0x68] sm:$0xff]
  %v2663 = vld [vmem:[%s2648 + $0x70] sm:$0xff]
  %v2664 = vld [vmem:[%s2648 + $0x78] sm:$0xff]
  %v2665 = vld [vmem:[%s2648 + $0x80] sm:$0xff]
  %v2666 = vld [vmem:[%s2648 + $0x88] sm:$0xff]
  %v2667 = vld [vmem:[%s2648 + $0x90] sm:$0xff]
  %v2668 = vld [vmem:[%s2648 + $0x98] sm:$0xff]
  %v2669 = vld [vmem:[%s2648 + $0xa0] sm:$0xff]
  %v2670 = vld [vmem:[%s2648 + $0xa8] sm:$0xff]
  %v2671 = vld [vmem:[%s2648 + $0xb0] sm:$0xff]
  %v2672 = vld [vmem:[%s2648 + $0xb8] sm:$0xff]
  %v2673 = vld [vmem:[%s2648 + $0xc0] sm:$0xff]
  %v2674 = vld [vmem:[%s2648 + $0xc8] sm:$0xff]
  %v2675 = vld [vmem:[%s2648 + $0xd0] sm:$0xff]
  %v2676 = vld [vmem:[%s2648 + $0xd8] sm:$0xff]
  %v2677 = vld [vmem:[%s2648 + $0xe0] sm:$0xff]
  %v2678 = vld [vmem:[%s2648 + $0xe8] sm:$0xff]
  %v2679 = vld [vmem:[%s2648 + $0xf0] sm:$0xff]
  %v2680 = vld [vmem:[%s2648 + $0xf8] sm:$0xff]
  %v2681 = vld [vmem:[%s2648 + $0x100] sm:$0xff]
  %v2682 = vld [vmem:[%s2648 + $0x108] sm:$0xff]
  %v2683 = vld [vmem:[%s2648 + $0x110] sm:$0xff]
  %v2684 = vld [vmem:[%s2648 + $0x118] sm:$0xff]
  %v2685 = vld [vmem:[%s2648 + $0x120] sm:$0xff]
  %v2686 = vld [vmem:[%s2648 + $0x128] sm:$0xff]
  %v2687 = vld [vmem:[%s2648 + $0x130] sm:$0xff]
  %v2688 = vld [vmem:[%s2648 + $0x138] sm:$0xff]
  %v2689 = vld [vmem:[%s2648 + $0x140] sm:$0xff]
  %v2690 = vld [vmem:[%s2648 + $0x148] sm:$0xff]
  %v2691 = vld [vmem:[%s2648 + $0x150] sm:$0xff]
  %v2692 = vld [vmem:[%s2648 + $0x158] sm:$0xff]
  %v2693 = vld [vmem:[%s2648 + $0x160] sm:$0xff]
  %v2694 = vld [vmem:[%s2648 + $0x168] sm:$0xff]
  %v2695 = vld [vmem:[%s2648 + $0x170] sm:$0xff]
  %v2696 = vld [vmem:[%s2648 + $0x178] sm:$0xff]
  %2697 = vmatpush.msra.mxu0 %v2664
  %2698 = vmatpush.msra.mxu0 %v2663
  %2699 = vmatpush.msra.mxu0 %v2662
  %2700 = vmatpush.msra.mxu0 %v2661
  %2701 = vmatpush.msra.mxu0 %v2660
  %2702 = vmatpush.msra.mxu0 %v2659
  %2703 = vmatpush.msra.mxu0 %v2658
  %2704 = vmatpush.msra.mxu0 %v2657
  %2705 = vmatpush.msra.mxu0 %v2656
  %2706 = vmatpush.msra.mxu0 %v2655
  %2707 = vmatpush.msra.mxu0 %v2654
  %2708 = vmatpush.msra.mxu0 %v2653
  %2709 = vmatpush.msra.mxu0 %v2652
  %2710 = vmatpush.msra.mxu0 %v2651
  %2711 = vmatpush.msra.mxu0 %v2650
  %2712 = vmatpush.msra.mxu0 %v2649
  %2713 = vmatmul.f32.gmra.mxu0 %v2645
  %v2714 = vpop.f32.mrf.mxu0
  %v2715 = vadd.f32 0.0, %v2714
  %2716 = vdwg.mxu0
  %2717 = vmatpush.msra.mxu0 %v2680
  %2718 = vmatpush.msra.mxu0 %v2679
  %2719 = vmatpush.msra.mxu0 %v2678
  %2720 = vmatpush.msra.mxu0 %v2677
  %2721 = vmatpush.msra.mxu0 %v2676
  %2722 = vmatpush.msra.mxu0 %v2675
  %2723 = vmatpush.msra.mxu0 %v2674
  %2724 = vmatpush.msra.mxu0 %v2673
  %2725 = vmatpush.msra.mxu0 %v2672
  %2726 = vmatpush.msra.mxu0 %v2671
  %2727 = vmatpush.msra.mxu0 %v2670
  %2728 = vmatpush.msra.mxu0 %v2669
  %2729 = vmatpush.msra.mxu0 %v2668
  %2730 = vmatpush.msra.mxu0 %v2667
  %2731 = vmatpush.msra.mxu0 %v2666
  %2732 = vmatpush.msra.mxu0 %v2665
  %2733 = vmatmul.f32.gmra.mxu0 %v2646
  %v2734 = vpop.f32.mrf.mxu0
  %v2735 = vadd.f32 %v2715, %v2734
  %2736 = vdwg.mxu0
  %2737 = vmatpush.msra.mxu0 %v2696
  %2738 = vmatpush.msra.mxu0 %v2695
  %2739 = vmatpush.msra.mxu0 %v2694
  %2740 = vmatpush.msra.mxu0 %v2693
  %2741 = vmatpush.msra.mxu0 %v2692
  %2742 = vmatpush.msra.mxu0 %v2691
  %2743 = vmatpush.msra.mxu0 %v2690
  %2744 = vmatpush.msra.mxu0 %v2689
  %2745 = vmatpush.msra.mxu0 %v2688
  %2746 = vmatpush.msra.mxu0 %v2687
  %2747 = vmatpush.msra.mxu0 %v2686
  %2748 = vmatpush.msra.mxu0 %v2685
  %2749 = vmatpush.msra.mxu0 %v2684
  %2750 = vmatpush.msra.mxu0 %v2683
  %2751 = vmatpush.msra.mxu0 %v2682
  %2752 = vmatpush.msra.mxu0 %v2681
  %2753 = vmatmul.f32.gmra.mxu0 %v2647
  %v2754 = vpop.f32.mrf.mxu0
  %v2755 = vadd.f32 %v2735, %v2754
  %2756 = vdwg.mxu0
  %v2757 = vadd.f32 %v2644, %v2755
  %v2758 = vld [vmem:[#allocation2 + $0xa8] sm:$0xff]
  %v2759 = vld [vmem:[#allocation2 + $0xb0] sm:$0xff]
  %v2760 = vld [vmem:[#allocation2 + $0xb8] sm:$0xff]
  %s2761 = scalar_lea.vmem %s2, 2688
  %v2762 = vld [vmem:[%s2761] sm:$0xff]
  %v2763 = vld [vmem:[%s2761 + $0x8] sm:$0xff]
  %v2764 = vld [vmem:[%s2761 + $0x10] sm:$0xff]
  %v2765 = vld [vmem:[%s2761 + $0x18] sm:$0xff]
  %v2766 = vld [vmem:[%s2761 + $0x20] sm:$0xff]
  %v2767 = vld [vmem:[%s2761 + $0x28] sm:$0xff]
  %v2768 = vld [vmem:[%s2761 + $0x30] sm:$0xff]
  %v2769 = vld [vmem:[%s2761 + $0x38] sm:$0xff]
  %v2770 = vld [vmem:[%s2761 + $0x40] sm:$0xff]
  %v2771 = vld [vmem:[%s2761 + $0x48] sm:$0xff]
  %v2772 = vld [vmem:[%s2761 + $0x50] sm:$0xff]
  %v2773 = vld [vmem:[%s2761 + $0x58] sm:$0xff]
  %v2774 = vld [vmem:[%s2761 + $0x60] sm:$0xff]
  %v2775 = vld [vmem:[%s2761 + $0x68] sm:$0xff]
  %v2776 = vld [vmem:[%s2761 + $0x70] sm:$0xff]
  %v2777 = vld [vmem:[%s2761 + $0x78] sm:$0xff]
  %v2778 = vld [vmem:[%s2761 + $0x80] sm:$0xff]
  %v2779 = vld [vmem:[%s2761 + $0x88] sm:$0xff]
  %v2780 = vld [vmem:[%s2761 + $0x90] sm:$0xff]
  %v2781 = vld [vmem:[%s2761 + $0x98] sm:$0xff]
  %v2782 = vld [vmem:[%s2761 + $0xa0] sm:$0xff]
  %v2783 = vld [vmem:[%s2761 + $0xa8] sm:$0xff]
  %v2784 = vld [vmem:[%s2761 + $0xb0] sm:$0xff]
  %v2785 = vld [vmem:[%s2761 + $0xb8] sm:$0xff]
  %v2786 = vld [vmem:[%s2761 + $0xc0] sm:$0xff]
  %v2787 = vld [vmem:[%s2761 + $0xc8] sm:$0xff]
  %v2788 = vld [vmem:[%s2761 + $0xd0] sm:$0xff]
  %v2789 = vld [vmem:[%s2761 + $0xd8] sm:$0xff]
  %v2790 = vld [vmem:[%s2761 + $0xe0] sm:$0xff]
  %v2791 = vld [vmem:[%s2761 + $0xe8] sm:$0xff]
  %v2792 = vld [vmem:[%s2761 + $0xf0] sm:$0xff]
  %v2793 = vld [vmem:[%s2761 + $0xf8] sm:$0xff]
  %v2794 = vld [vmem:[%s2761 + $0x100] sm:$0xff]
  %v2795 = vld [vmem:[%s2761 + $0x108] sm:$0xff]
  %v2796 = vld [vmem:[%s2761 + $0x110] sm:$0xff]
  %v2797 = vld [vmem:[%s2761 + $0x118] sm:$0xff]
  %v2798 = vld [vmem:[%s2761 + $0x120] sm:$0xff]
  %v2799 = vld [vmem:[%s2761 + $0x128] sm:$0xff]
  %v2800 = vld [vmem:[%s2761 + $0x130] sm:$0xff]
  %v2801 = vld [vmem:[%s2761 + $0x138] sm:$0xff]
  %v2802 = vld [vmem:[%s2761 + $0x140] sm:$0xff]
  %v2803 = vld [vmem:[%s2761 + $0x148] sm:$0xff]
  %v2804 = vld [vmem:[%s2761 + $0x150] sm:$0xff]
  %v2805 = vld [vmem:[%s2761 + $0x158] sm:$0xff]
  %v2806 = vld [vmem:[%s2761 + $0x160] sm:$0xff]
  %v2807 = vld [vmem:[%s2761 + $0x168] sm:$0xff]
  %v2808 = vld [vmem:[%s2761 + $0x170] sm:$0xff]
  %v2809 = vld [vmem:[%s2761 + $0x178] sm:$0xff]
  %2810 = vmatpush.msra.mxu0 %v2777
  %2811 = vmatpush.msra.mxu0 %v2776
  %2812 = vmatpush.msra.mxu0 %v2775
  %2813 = vmatpush.msra.mxu0 %v2774
  %2814 = vmatpush.msra.mxu0 %v2773
  %2815 = vmatpush.msra.mxu0 %v2772
  %2816 = vmatpush.msra.mxu0 %v2771
  %2817 = vmatpush.msra.mxu0 %v2770
  %2818 = vmatpush.msra.mxu0 %v2769
  %2819 = vmatpush.msra.mxu0 %v2768
  %2820 = vmatpush.msra.mxu0 %v2767
  %2821 = vmatpush.msra.mxu0 %v2766
  %2822 = vmatpush.msra.mxu0 %v2765
  %2823 = vmatpush.msra.mxu0 %v2764
  %2824 = vmatpush.msra.mxu0 %v2763
  %2825 = vmatpush.msra.mxu0 %v2762
  %2826 = vmatmul.f32.gmra.mxu0 %v2758
  %v2827 = vpop.f32.mrf.mxu0
  %v2828 = vadd.f32 0.0, %v2827
  %2829 = vdwg.mxu0
  %2830 = vmatpush.msra.mxu0 %v2793
  %2831 = vmatpush.msra.mxu0 %v2792
  %2832 = vmatpush.msra.mxu0 %v2791
  %2833 = vmatpush.msra.mxu0 %v2790
  %2834 = vmatpush.msra.mxu0 %v2789
  %2835 = vmatpush.msra.mxu0 %v2788
  %2836 = vmatpush.msra.mxu0 %v2787
  %2837 = vmatpush.msra.mxu0 %v2786
  %2838 = vmatpush.msra.mxu0 %v2785
  %2839 = vmatpush.msra.mxu0 %v2784
  %2840 = vmatpush.msra.mxu0 %v2783
  %2841 = vmatpush.msra.mxu0 %v2782
  %2842 = vmatpush.msra.mxu0 %v2781
  %2843 = vmatpush.msra.mxu0 %v2780
  %2844 = vmatpush.msra.mxu0 %v2779
  %2845 = vmatpush.msra.mxu0 %v2778
  %2846 = vmatmul.f32.gmra.mxu0 %v2759
  %v2847 = vpop.f32.mrf.mxu0
  %v2848 = vadd.f32 %v2828, %v2847
  %2849 = vdwg.mxu0
  %2850 = vmatpush.msra.mxu0 %v2809
  %2851 = vmatpush.msra.mxu0 %v2808
  %2852 = vmatpush.msra.mxu0 %v2807
  %2853 = vmatpush.msra.mxu0 %v2806
  %2854 = vmatpush.msra.mxu0 %v2805
  %2855 = vmatpush.msra.mxu0 %v2804
  %2856 = vmatpush.msra.mxu0 %v2803
  %2857 = vmatpush.msra.mxu0 %v2802
  %2858 = vmatpush.msra.mxu0 %v2801
  %2859 = vmatpush.msra.mxu0 %v2800
  %2860 = vmatpush.msra.mxu0 %v2799
  %2861 = vmatpush.msra.mxu0 %v2798
  %2862 = vmatpush.msra.mxu0 %v2797
  %2863 = vmatpush.msra.mxu0 %v2796
  %2864 = vmatpush.msra.mxu0 %v2795
  %2865 = vmatpush.msra.mxu0 %v2794
  %2866 = vmatmul.f32.gmra.mxu0 %v2760
  %v2867 = vpop.f32.mrf.mxu0
  %v2868 = vadd.f32 %v2848, %v2867
  %2869 = vdwg.mxu0
  %v2870 = vadd.f32 %v2757, %v2868
  %v2871 = vld [vmem:[#allocation2 + $0xc0] sm:$0xff]
  %v2872 = vld [vmem:[#allocation2 + $0xc8] sm:$0xff]
  %v2873 = vld [vmem:[#allocation2 + $0xd0] sm:$0xff]
  %s2874 = scalar_lea.vmem %s2, 3072
  %v2875 = vld [vmem:[%s2874] sm:$0xff]
  %v2876 = vld [vmem:[%s2874 + $0x8] sm:$0xff]
  %v2877 = vld [vmem:[%s2874 + $0x10] sm:$0xff]
  %v2878 = vld [vmem:[%s2874 + $0x18] sm:$0xff]
  %v2879 = vld [vmem:[%s2874 + $0x20] sm:$0xff]
  %v2880 = vld [vmem:[%s2874 + $0x28] sm:$0xff]
  %v2881 = vld [vmem:[%s2874 + $0x30] sm:$0xff]
  %v2882 = vld [vmem:[%s2874 + $0x38] sm:$0xff]
  %v2883 = vld [vmem:[%s2874 + $0x40] sm:$0xff]
  %v2884 = vld [vmem:[%s2874 + $0x48] sm:$0xff]
  %v2885 = vld [vmem:[%s2874 + $0x50] sm:$0xff]
  %v2886 = vld [vmem:[%s2874 + $0x58] sm:$0xff]
  %v2887 = vld [vmem:[%s2874 + $0x60] sm:$0xff]
  %v2888 = vld [vmem:[%s2874 + $0x68] sm:$0xff]
  %v2889 = vld [vmem:[%s2874 + $0x70] sm:$0xff]
  %v2890 = vld [vmem:[%s2874 + $0x78] sm:$0xff]
  %v2891 = vld [vmem:[%s2874 + $0x80] sm:$0xff]
  %v2892 = vld [vmem:[%s2874 + $0x88] sm:$0xff]
  %v2893 = vld [vmem:[%s2874 + $0x90] sm:$0xff]
  %v2894 = vld [vmem:[%s2874 + $0x98] sm:$0xff]
  %v2895 = vld [vmem:[%s2874 + $0xa0] sm:$0xff]
  %v2896 = vld [vmem:[%s2874 + $0xa8] sm:$0xff]
  %v2897 = vld [vmem:[%s2874 + $0xb0] sm:$0xff]
  %v2898 = vld [vmem:[%s2874 + $0xb8] sm:$0xff]
  %v2899 = vld [vmem:[%s2874 + $0xc0] sm:$0xff]
  %v2900 = vld [vmem:[%s2874 + $0xc8] sm:$0xff]
  %v2901 = vld [vmem:[%s2874 + $0xd0] sm:$0xff]
  %v2902 = vld [vmem:[%s2874 + $0xd8] sm:$0xff]
  %v2903 = vld [vmem:[%s2874 + $0xe0] sm:$0xff]
  %v2904 = vld [vmem:[%s2874 + $0xe8] sm:$0xff]
  %v2905 = vld [vmem:[%s2874 + $0xf0] sm:$0xff]
  %v2906 = vld [vmem:[%s2874 + $0xf8] sm:$0xff]
  %v2907 = vld [vmem:[%s2874 + $0x100] sm:$0xff]
  %v2908 = vld [vmem:[%s2874 + $0x108] sm:$0xff]
  %v2909 = vld [vmem:[%s2874 + $0x110] sm:$0xff]
  %v2910 = vld [vmem:[%s2874 + $0x118] sm:$0xff]
  %v2911 = vld [vmem:[%s2874 + $0x120] sm:$0xff]
  %v2912 = vld [vmem:[%s2874 + $0x128] sm:$0xff]
  %v2913 = vld [vmem:[%s2874 + $0x130] sm:$0xff]
  %v2914 = vld [vmem:[%s2874 + $0x138] sm:$0xff]
  %v2915 = vld [vmem:[%s2874 + $0x140] sm:$0xff]
  %v2916 = vld [vmem:[%s2874 + $0x148] sm:$0xff]
  %v2917 = vld [vmem:[%s2874 + $0x150] sm:$0xff]
  %v2918 = vld [vmem:[%s2874 + $0x158] sm:$0xff]
  %v2919 = vld [vmem:[%s2874 + $0x160] sm:$0xff]
  %v2920 = vld [vmem:[%s2874 + $0x168] sm:$0xff]
  %v2921 = vld [vmem:[%s2874 + $0x170] sm:$0xff]
  %v2922 = vld [vmem:[%s2874 + $0x178] sm:$0xff]
  %2923 = vmatpush.msra.mxu0 %v2890
  %2924 = vmatpush.msra.mxu0 %v2889
  %2925 = vmatpush.msra.mxu0 %v2888
  %2926 = vmatpush.msra.mxu0 %v2887
  %2927 = vmatpush.msra.mxu0 %v2886
  %2928 = vmatpush.msra.mxu0 %v2885
  %2929 = vmatpush.msra.mxu0 %v2884
  %2930 = vmatpush.msra.mxu0 %v2883
  %2931 = vmatpush.msra.mxu0 %v2882
  %2932 = vmatpush.msra.mxu0 %v2881
  %2933 = vmatpush.msra.mxu0 %v2880
  %2934 = vmatpush.msra.mxu0 %v2879
  %2935 = vmatpush.msra.mxu0 %v2878
  %2936 = vmatpush.msra.mxu0 %v2877
  %2937 = vmatpush.msra.mxu0 %v2876
  %2938 = vmatpush.msra.mxu0 %v2875
  %2939 = vmatmul.f32.gmra.mxu0 %v2871
  %v2940 = vpop.f32.mrf.mxu0
  %v2941 = vadd.f32 0.0, %v2940
  %2942 = vdwg.mxu0
  %2943 = vmatpush.msra.mxu0 %v2906
  %2944 = vmatpush.msra.mxu0 %v2905
  %2945 = vmatpush.msra.mxu0 %v2904
  %2946 = vmatpush.msra.mxu0 %v2903
  %2947 = vmatpush.msra.mxu0 %v2902
  %2948 = vmatpush.msra.mxu0 %v2901
  %2949 = vmatpush.msra.mxu0 %v2900
  %2950 = vmatpush.msra.mxu0 %v2899
  %2951 = vmatpush.msra.mxu0 %v2898
  %2952 = vmatpush.msra.mxu0 %v2897
  %2953 = vmatpush.msra.mxu0 %v2896
  %2954 = vmatpush.msra.mxu0 %v2895
  %2955 = vmatpush.msra.mxu0 %v2894
  %2956 = vmatpush.msra.mxu0 %v2893
  %2957 = vmatpush.msra.mxu0 %v2892
  %2958 = vmatpush.msra.mxu0 %v2891
  %2959 = vmatmul.f32.gmra.mxu0 %v2872
  %v2960 = vpop.f32.mrf.mxu0
  %v2961 = vadd.f32 %v2941, %v2960
  %2962 = vdwg.mxu0
  %2963 = vmatpush.msra.mxu0 %v2922
  %2964 = vmatpush.msra.mxu0 %v2921
  %2965 = vmatpush.msra.mxu0 %v2920
  %2966 = vmatpush.msra.mxu0 %v2919
  %2967 = vmatpush.msra.mxu0 %v2918
  %2968 = vmatpush.msra.mxu0 %v2917
  %2969 = vmatpush.msra.mxu0 %v2916
  %2970 = vmatpush.msra.mxu0 %v2915
  %2971 = vmatpush.msra.mxu0 %v2914
  %2972 = vmatpush.msra.mxu0 %v2913
  %2973 = vmatpush.msra.mxu0 %v2912
  %2974 = vmatpush.msra.mxu0 %v2911
  %2975 = vmatpush.msra.mxu0 %v2910
  %2976 = vmatpush.msra.mxu0 %v2909
  %2977 = vmatpush.msra.mxu0 %v2908
  %2978 = vmatpush.msra.mxu0 %v2907
  %2979 = vmatmul.f32.gmra.mxu0 %v2873
  %v2980 = vpop.f32.mrf.mxu0
  %v2981 = vadd.f32 %v2961, %v2980
  %2982 = vdwg.mxu0
  %v2983 = vadd.f32 %v2870, %v2981
  %v2984 = vld [vmem:[#allocation2 + $0xd8] sm:$0xff]
  %v2985 = vld [vmem:[#allocation2 + $0xe0] sm:$0xff]
  %v2986 = vld [vmem:[#allocation2 + $0xe8] sm:$0xff]
  %s2987 = scalar_lea.vmem %s2, 3456
  %v2988 = vld [vmem:[%s2987] sm:$0xff]
  %v2989 = vld [vmem:[%s2987 + $0x8] sm:$0xff]
  %v2990 = vld [vmem:[%s2987 + $0x10] sm:$0xff]
  %v2991 = vld [vmem:[%s2987 + $0x18] sm:$0xff]
  %v2992 = vld [vmem:[%s2987 + $0x20] sm:$0xff]
  %v2993 = vld [vmem:[%s2987 + $0x28] sm:$0xff]
  %v2994 = vld [vmem:[%s2987 + $0x30] sm:$0xff]
  %v2995 = vld [vmem:[%s2987 + $0x38] sm:$0xff]
  %v2996 = vld [vmem:[%s2987 + $0x40] sm:$0xff]
  %v2997 = vld [vmem:[%s2987 + $0x48] sm:$0xff]
  %v2998 = vld [vmem:[%s2987 + $0x50] sm:$0xff]
  %v2999 = vld [vmem:[%s2987 + $0x58] sm:$0xff]
  %v3000 = vld [vmem:[%s2987 + $0x60] sm:$0xff]
  %v3001 = vld [vmem:[%s2987 + $0x68] sm:$0xff]
  %v3002 = vld [vmem:[%s2987 + $0x70] sm:$0xff]
  %v3003 = vld [vmem:[%s2987 + $0x78] sm:$0xff]
  %v3004 = vld [vmem:[%s2987 + $0x80] sm:$0xff]
  %v3005 = vld [vmem:[%s2987 + $0x88] sm:$0xff]
  %v3006 = vld [vmem:[%s2987 + $0x90] sm:$0xff]
  %v3007 = vld [vmem:[%s2987 + $0x98] sm:$0xff]
  %v3008 = vld [vmem:[%s2987 + $0xa0] sm:$0xff]
  %v3009 = vld [vmem:[%s2987 + $0xa8] sm:$0xff]
  %v3010 = vld [vmem:[%s2987 + $0xb0] sm:$0xff]
  %v3011 = vld [vmem:[%s2987 + $0xb8] sm:$0xff]
  %v3012 = vld [vmem:[%s2987 + $0xc0] sm:$0xff]
  %v3013 = vld [vmem:[%s2987 + $0xc8] sm:$0xff]
  %v3014 = vld [vmem:[%s2987 + $0xd0] sm:$0xff]
  %v3015 = vld [vmem:[%s2987 + $0xd8] sm:$0xff]
  %v3016 = vld [vmem:[%s2987 + $0xe0] sm:$0xff]
  %v3017 = vld [vmem:[%s2987 + $0xe8] sm:$0xff]
  %v3018 = vld [vmem:[%s2987 + $0xf0] sm:$0xff]
  %v3019 = vld [vmem:[%s2987 + $0xf8] sm:$0xff]
  %v3020 = vld [vmem:[%s2987 + $0x100] sm:$0xff]
  %v3021 = vld [vmem:[%s2987 + $0x108] sm:$0xff]
  %v3022 = vld [vmem:[%s2987 + $0x110] sm:$0xff]
  %v3023 = vld [vmem:[%s2987 + $0x118] sm:$0xff]
  %v3024 = vld [vmem:[%s2987 + $0x120] sm:$0xff]
  %v3025 = vld [vmem:[%s2987 + $0x128] sm:$0xff]
  %v3026 = vld [vmem:[%s2987 + $0x130] sm:$0xff]
  %v3027 = vld [vmem:[%s2987 + $0x138] sm:$0xff]
  %v3028 = vld [vmem:[%s2987 + $0x140] sm:$0xff]
  %v3029 = vld [vmem:[%s2987 + $0x148] sm:$0xff]
  %v3030 = vld [vmem:[%s2987 + $0x150] sm:$0xff]
  %v3031 = vld [vmem:[%s2987 + $0x158] sm:$0xff]
  %v3032 = vld [vmem:[%s2987 + $0x160] sm:$0xff]
  %v3033 = vld [vmem:[%s2987 + $0x168] sm:$0xff]
  %v3034 = vld [vmem:[%s2987 + $0x170] sm:$0xff]
  %v3035 = vld [vmem:[%s2987 + $0x178] sm:$0xff]
  %3036 = vmatpush.msra.mxu0 %v3003
  %3037 = vmatpush.msra.mxu0 %v3002
  %3038 = vmatpush.msra.mxu0 %v3001
  %3039 = vmatpush.msra.mxu0 %v3000
  %3040 = vmatpush.msra.mxu0 %v2999
  %3041 = vmatpush.msra.mxu0 %v2998
  %3042 = vmatpush.msra.mxu0 %v2997
  %3043 = vmatpush.msra.mxu0 %v2996
  %3044 = vmatpush.msra.mxu0 %v2995
  %3045 = vmatpush.msra.mxu0 %v2994
  %3046 = vmatpush.msra.mxu0 %v2993
  %3047 = vmatpush.msra.mxu0 %v2992
  %3048 = vmatpush.msra.mxu0 %v2991
  %3049 = vmatpush.msra.mxu0 %v2990
  %3050 = vmatpush.msra.mxu0 %v2989
  %3051 = vmatpush.msra.mxu0 %v2988
  %3052 = vmatmul.f32.gmra.mxu0 %v2984
  %v3053 = vpop.f32.mrf.mxu0
  %v3054 = vadd.f32 0.0, %v3053
  %3055 = vdwg.mxu0
  %3056 = vmatpush.msra.mxu0 %v3019
  %3057 = vmatpush.msra.mxu0 %v3018
  %3058 = vmatpush.msra.mxu0 %v3017
  %3059 = vmatpush.msra.mxu0 %v3016
  %3060 = vmatpush.msra.mxu0 %v3015
  %3061 = vmatpush.msra.mxu0 %v3014
  %3062 = vmatpush.msra.mxu0 %v3013
  %3063 = vmatpush.msra.mxu0 %v3012
  %3064 = vmatpush.msra.mxu0 %v3011
  %3065 = vmatpush.msra.mxu0 %v3010
  %3066 = vmatpush.msra.mxu0 %v3009
  %3067 = vmatpush.msra.mxu0 %v3008
  %3068 = vmatpush.msra.mxu0 %v3007
  %3069 = vmatpush.msra.mxu0 %v3006
  %3070 = vmatpush.msra.mxu0 %v3005
  %3071 = vmatpush.msra.mxu0 %v3004
  %3072 = vmatmul.f32.gmra.mxu0 %v2985
  %v3073 = vpop.f32.mrf.mxu0
  %v3074 = vadd.f32 %v3054, %v3073
  %3075 = vdwg.mxu0
  %3076 = vmatpush.msra.mxu0 %v3035
  %3077 = vmatpush.msra.mxu0 %v3034
  %3078 = vmatpush.msra.mxu0 %v3033
  %3079 = vmatpush.msra.mxu0 %v3032
  %3080 = vmatpush.msra.mxu0 %v3031
  %3081 = vmatpush.msra.mxu0 %v3030
  %3082 = vmatpush.msra.mxu0 %v3029
  %3083 = vmatpush.msra.mxu0 %v3028
  %3084 = vmatpush.msra.mxu0 %v3027
  %3085 = vmatpush.msra.mxu0 %v3026
  %3086 = vmatpush.msra.mxu0 %v3025
  %3087 = vmatpush.msra.mxu0 %v3024
  %3088 = vmatpush.msra.mxu0 %v3023
  %3089 = vmatpush.msra.mxu0 %v3022
  %3090 = vmatpush.msra.mxu0 %v3021
  %3091 = vmatpush.msra.mxu0 %v3020
  %3092 = vmatmul.f32.gmra.mxu0 %v2986
  %v3093 = vpop.f32.mrf.mxu0
  %v3094 = vadd.f32 %v3074, %v3093
  %3095 = vdwg.mxu0
  %v3096 = vadd.f32 %v2983, %v3094
  %v3097 = vld [vmem:[#allocation2 + $0xf0] sm:$0xff]
  %v3098 = vld [vmem:[#allocation2 + $0xf8] sm:$0xff]
  %v3099 = vld [vmem:[#allocation2 + $0x100] sm:$0xff]
  %s3100 = scalar_lea.vmem %s2, 3840
  %v3101 = vld [vmem:[%s3100] sm:$0xff]
  %v3102 = vld [vmem:[%s3100 + $0x8] sm:$0xff]
  %v3103 = vld [vmem:[%s3100 + $0x10] sm:$0xff]
  %v3104 = vld [vmem:[%s3100 + $0x18] sm:$0xff]
  %v3105 = vld [vmem:[%s3100 + $0x20] sm:$0xff]
  %v3106 = vld [vmem:[%s3100 + $0x28] sm:$0xff]
  %v3107 = vld [vmem:[%s3100 + $0x30] sm:$0xff]
  %v3108 = vld [vmem:[%s3100 + $0x38] sm:$0xff]
  %v3109 = vld [vmem:[%s3100 + $0x40] sm:$0xff]
  %v3110 = vld [vmem:[%s3100 + $0x48] sm:$0xff]
  %v3111 = vld [vmem:[%s3100 + $0x50] sm:$0xff]
  %v3112 = vld [vmem:[%s3100 + $0x58] sm:$0xff]
  %v3113 = vld [vmem:[%s3100 + $0x60] sm:$0xff]
  %v3114 = vld [vmem:[%s3100 + $0x68] sm:$0xff]
  %v3115 = vld [vmem:[%s3100 + $0x70] sm:$0xff]
  %v3116 = vld [vmem:[%s3100 + $0x78] sm:$0xff]
  %v3117 = vld [vmem:[%s3100 + $0x80] sm:$0xff]
  %v3118 = vld [vmem:[%s3100 + $0x88] sm:$0xff]
  %v3119 = vld [vmem:[%s3100 + $0x90] sm:$0xff]
  %v3120 = vld [vmem:[%s3100 + $0x98] sm:$0xff]
  %v3121 = vld [vmem:[%s3100 + $0xa0] sm:$0xff]
  %v3122 = vld [vmem:[%s3100 + $0xa8] sm:$0xff]
  %v3123 = vld [vmem:[%s3100 + $0xb0] sm:$0xff]
  %v3124 = vld [vmem:[%s3100 + $0xb8] sm:$0xff]
  %v3125 = vld [vmem:[%s3100 + $0xc0] sm:$0xff]
  %v3126 = vld [vmem:[%s3100 + $0xc8] sm:$0xff]
  %v3127 = vld [vmem:[%s3100 + $0xd0] sm:$0xff]
  %v3128 = vld [vmem:[%s3100 + $0xd8] sm:$0xff]
  %v3129 = vld [vmem:[%s3100 + $0xe0] sm:$0xff]
  %v3130 = vld [vmem:[%s3100 + $0xe8] sm:$0xff]
  %v3131 = vld [vmem:[%s3100 + $0xf0] sm:$0xff]
  %v3132 = vld [vmem:[%s3100 + $0xf8] sm:$0xff]
  %v3133 = vld [vmem:[%s3100 + $0x100] sm:$0xff]
  %v3134 = vld [vmem:[%s3100 + $0x108] sm:$0xff]
  %v3135 = vld [vmem:[%s3100 + $0x110] sm:$0xff]
  %v3136 = vld [vmem:[%s3100 + $0x118] sm:$0xff]
  %v3137 = vld [vmem:[%s3100 + $0x120] sm:$0xff]
  %v3138 = vld [vmem:[%s3100 + $0x128] sm:$0xff]
  %v3139 = vld [vmem:[%s3100 + $0x130] sm:$0xff]
  %v3140 = vld [vmem:[%s3100 + $0x138] sm:$0xff]
  %v3141 = vld [vmem:[%s3100 + $0x140] sm:$0xff]
  %v3142 = vld [vmem:[%s3100 + $0x148] sm:$0xff]
  %v3143 = vld [vmem:[%s3100 + $0x150] sm:$0xff]
  %v3144 = vld [vmem:[%s3100 + $0x158] sm:$0xff]
  %v3145 = vld [vmem:[%s3100 + $0x160] sm:$0xff]
  %v3146 = vld [vmem:[%s3100 + $0x168] sm:$0xff]
  %v3147 = vld [vmem:[%s3100 + $0x170] sm:$0xff]
  %v3148 = vld [vmem:[%s3100 + $0x178] sm:$0xff]
  %3149 = vmatpush.msra.mxu0 %v3116
  %3150 = vmatpush.msra.mxu0 %v3115
  %3151 = vmatpush.msra.mxu0 %v3114
  %3152 = vmatpush.msra.mxu0 %v3113
  %3153 = vmatpush.msra.mxu0 %v3112
  %3154 = vmatpush.msra.mxu0 %v3111
  %3155 = vmatpush.msra.mxu0 %v3110
  %3156 = vmatpush.msra.mxu0 %v3109
  %3157 = vmatpush.msra.mxu0 %v3108
  %3158 = vmatpush.msra.mxu0 %v3107
  %3159 = vmatpush.msra.mxu0 %v3106
  %3160 = vmatpush.msra.mxu0 %v3105
  %3161 = vmatpush.msra.mxu0 %v3104
  %3162 = vmatpush.msra.mxu0 %v3103
  %3163 = vmatpush.msra.mxu0 %v3102
  %3164 = vmatpush.msra.mxu0 %v3101
  %3165 = vmatmul.f32.gmra.mxu0 %v3097
  %v3166 = vpop.f32.mrf.mxu0
  %v3167 = vadd.f32 0.0, %v3166
  %3168 = vdwg.mxu0
  %3169 = vmatpush.msra.mxu0 %v3132
  %3170 = vmatpush.msra.mxu0 %v3131
  %3171 = vmatpush.msra.mxu0 %v3130
  %3172 = vmatpush.msra.mxu0 %v3129
  %3173 = vmatpush.msra.mxu0 %v3128
  %3174 = vmatpush.msra.mxu0 %v3127
  %3175 = vmatpush.msra.mxu0 %v3126
  %3176 = vmatpush.msra.mxu0 %v3125
  %3177 = vmatpush.msra.mxu0 %v3124
  %3178 = vmatpush.msra.mxu0 %v3123
  %3179 = vmatpush.msra.mxu0 %v3122
  %3180 = vmatpush.msra.mxu0 %v3121
  %3181 = vmatpush.msra.mxu0 %v3120
  %3182 = vmatpush.msra.mxu0 %v3119
  %3183 = vmatpush.msra.mxu0 %v3118
  %3184 = vmatpush.msra.mxu0 %v3117
  %3185 = vmatmul.f32.gmra.mxu0 %v3098
  %v3186 = vpop.f32.mrf.mxu0
  %v3187 = vadd.f32 %v3167, %v3186
  %3188 = vdwg.mxu0
  %3189 = vmatpush.msra.mxu0 %v3148
  %3190 = vmatpush.msra.mxu0 %v3147
  %3191 = vmatpush.msra.mxu0 %v3146
  %3192 = vmatpush.msra.mxu0 %v3145
  %3193 = vmatpush.msra.mxu0 %v3144
  %3194 = vmatpush.msra.mxu0 %v3143
  %3195 = vmatpush.msra.mxu0 %v3142
  %3196 = vmatpush.msra.mxu0 %v3141
  %3197 = vmatpush.msra.mxu0 %v3140
  %3198 = vmatpush.msra.mxu0 %v3139
  %3199 = vmatpush.msra.mxu0 %v3138
  %3200 = vmatpush.msra.mxu0 %v3137
  %3201 = vmatpush.msra.mxu0 %v3136
  %3202 = vmatpush.msra.mxu0 %v3135
  %3203 = vmatpush.msra.mxu0 %v3134
  %3204 = vmatpush.msra.mxu0 %v3133
  %3205 = vmatmul.f32.gmra.mxu0 %v3099
  %v3206 = vpop.f32.mrf.mxu0
  %v3207 = vadd.f32 %v3187, %v3206
  %3208 = vdwg.mxu0
  %v3209 = vadd.f32 %v3096, %v3207
  %v3210 = vld [vmem:[#allocation2 + $0x108] sm:$0xff]
  %v3211 = vld [vmem:[#allocation2 + $0x110] sm:$0xff]
  %v3212 = vld [vmem:[#allocation2 + $0x118] sm:$0xff]
  %s3213 = scalar_lea.vmem %s2, 4224
  %v3214 = vld [vmem:[%s3213] sm:$0xff]
  %v3215 = vld [vmem:[%s3213 + $0x8] sm:$0xff]
  %v3216 = vld [vmem:[%s3213 + $0x10] sm:$0xff]
  %v3217 = vld [vmem:[%s3213 + $0x18] sm:$0xff]
  %v3218 = vld [vmem:[%s3213 + $0x20] sm:$0xff]
  %v3219 = vld [vmem:[%s3213 + $0x28] sm:$0xff]
  %v3220 = vld [vmem:[%s3213 + $0x30] sm:$0xff]
  %v3221 = vld [vmem:[%s3213 + $0x38] sm:$0xff]
  %v3222 = vld [vmem:[%s3213 + $0x40] sm:$0xff]
  %v3223 = vld [vmem:[%s3213 + $0x48] sm:$0xff]
  %v3224 = vld [vmem:[%s3213 + $0x50] sm:$0xff]
  %v3225 = vld [vmem:[%s3213 + $0x58] sm:$0xff]
  %v3226 = vld [vmem:[%s3213 + $0x60] sm:$0xff]
  %v3227 = vld [vmem:[%s3213 + $0x68] sm:$0xff]
  %v3228 = vld [vmem:[%s3213 + $0x70] sm:$0xff]
  %v3229 = vld [vmem:[%s3213 + $0x78] sm:$0xff]
  %v3230 = vld [vmem:[%s3213 + $0x80] sm:$0xff]
  %v3231 = vld [vmem:[%s3213 + $0x88] sm:$0xff]
  %v3232 = vld [vmem:[%s3213 + $0x90] sm:$0xff]
  %v3233 = vld [vmem:[%s3213 + $0x98] sm:$0xff]
  %v3234 = vld [vmem:[%s3213 + $0xa0] sm:$0xff]
  %v3235 = vld [vmem:[%s3213 + $0xa8] sm:$0xff]
  %v3236 = vld [vmem:[%s3213 + $0xb0] sm:$0xff]
  %v3237 = vld [vmem:[%s3213 + $0xb8] sm:$0xff]
  %v3238 = vld [vmem:[%s3213 + $0xc0] sm:$0xff]
  %v3239 = vld [vmem:[%s3213 + $0xc8] sm:$0xff]
  %v3240 = vld [vmem:[%s3213 + $0xd0] sm:$0xff]
  %v3241 = vld [vmem:[%s3213 + $0xd8] sm:$0xff]
  %v3242 = vld [vmem:[%s3213 + $0xe0] sm:$0xff]
  %v3243 = vld [vmem:[%s3213 + $0xe8] sm:$0xff]
  %v3244 = vld [vmem:[%s3213 + $0xf0] sm:$0xff]
  %v3245 = vld [vmem:[%s3213 + $0xf8] sm:$0xff]
  %v3246 = vld [vmem:[%s3213 + $0x100] sm:$0xff]
  %v3247 = vld [vmem:[%s3213 + $0x108] sm:$0xff]
  %v3248 = vld [vmem:[%s3213 + $0x110] sm:$0xff]
  %v3249 = vld [vmem:[%s3213 + $0x118] sm:$0xff]
  %v3250 = vld [vmem:[%s3213 + $0x120] sm:$0xff]
  %v3251 = vld [vmem:[%s3213 + $0x128] sm:$0xff]
  %v3252 = vld [vmem:[%s3213 + $0x130] sm:$0xff]
  %v3253 = vld [vmem:[%s3213 + $0x138] sm:$0xff]
  %v3254 = vld [vmem:[%s3213 + $0x140] sm:$0xff]
  %v3255 = vld [vmem:[%s3213 + $0x148] sm:$0xff]
  %v3256 = vld [vmem:[%s3213 + $0x150] sm:$0xff]
  %v3257 = vld [vmem:[%s3213 + $0x158] sm:$0xff]
  %v3258 = vld [vmem:[%s3213 + $0x160] sm:$0xff]
  %v3259 = vld [vmem:[%s3213 + $0x168] sm:$0xff]
  %v3260 = vld [vmem:[%s3213 + $0x170] sm:$0xff]
  %v3261 = vld [vmem:[%s3213 + $0x178] sm:$0xff]
  %3262 = vmatpush.msra.mxu0 %v3229
  %3263 = vmatpush.msra.mxu0 %v3228
  %3264 = vmatpush.msra.mxu0 %v3227
  %3265 = vmatpush.msra.mxu0 %v3226
  %3266 = vmatpush.msra.mxu0 %v3225
  %3267 = vmatpush.msra.mxu0 %v3224
  %3268 = vmatpush.msra.mxu0 %v3223
  %3269 = vmatpush.msra.mxu0 %v3222
  %3270 = vmatpush.msra.mxu0 %v3221
  %3271 = vmatpush.msra.mxu0 %v3220
  %3272 = vmatpush.msra.mxu0 %v3219
  %3273 = vmatpush.msra.mxu0 %v3218
  %3274 = vmatpush.msra.mxu0 %v3217
  %3275 = vmatpush.msra.mxu0 %v3216
  %3276 = vmatpush.msra.mxu0 %v3215
  %3277 = vmatpush.msra.mxu0 %v3214
  %3278 = vmatmul.f32.gmra.mxu0 %v3210
  %v3279 = vpop.f32.mrf.mxu0
  %v3280 = vadd.f32 0.0, %v3279
  %3281 = vdwg.mxu0
  %3282 = vmatpush.msra.mxu0 %v3245
  %3283 = vmatpush.msra.mxu0 %v3244
  %3284 = vmatpush.msra.mxu0 %v3243
  %3285 = vmatpush.msra.mxu0 %v3242
  %3286 = vmatpush.msra.mxu0 %v3241
  %3287 = vmatpush.msra.mxu0 %v3240
  %3288 = vmatpush.msra.mxu0 %v3239
  %3289 = vmatpush.msra.mxu0 %v3238
  %3290 = vmatpush.msra.mxu0 %v3237
  %3291 = vmatpush.msra.mxu0 %v3236
  %3292 = vmatpush.msra.mxu0 %v3235
  %3293 = vmatpush.msra.mxu0 %v3234
  %3294 = vmatpush.msra.mxu0 %v3233
  %3295 = vmatpush.msra.mxu0 %v3232
  %3296 = vmatpush.msra.mxu0 %v3231
  %3297 = vmatpush.msra.mxu0 %v3230
  %3298 = vmatmul.f32.gmra.mxu0 %v3211
  %v3299 = vpop.f32.mrf.mxu0
  %v3300 = vadd.f32 %v3280, %v3299
  %3301 = vdwg.mxu0
  %3302 = vmatpush.msra.mxu0 %v3261
  %3303 = vmatpush.msra.mxu0 %v3260
  %3304 = vmatpush.msra.mxu0 %v3259
  %3305 = vmatpush.msra.mxu0 %v3258
  %3306 = vmatpush.msra.mxu0 %v3257
  %3307 = vmatpush.msra.mxu0 %v3256
  %3308 = vmatpush.msra.mxu0 %v3255
  %3309 = vmatpush.msra.mxu0 %v3254
  %3310 = vmatpush.msra.mxu0 %v3253
  %3311 = vmatpush.msra.mxu0 %v3252
  %3312 = vmatpush.msra.mxu0 %v3251
  %3313 = vmatpush.msra.mxu0 %v3250
  %3314 = vmatpush.msra.mxu0 %v3249
  %3315 = vmatpush.msra.mxu0 %v3248
  %3316 = vmatpush.msra.mxu0 %v3247
  %3317 = vmatpush.msra.mxu0 %v3246
  %3318 = vmatmul.f32.gmra.mxu0 %v3212
  %v3319 = vpop.f32.mrf.mxu0
  %v3320 = vadd.f32 %v3300, %v3319
  %3321 = vdwg.mxu0
  %v3322 = vadd.f32 %v3209, %v3320
  %v3323 = vld [vmem:[#allocation2 + $0x120] sm:$0xff]
  %v3324 = vld [vmem:[#allocation2 + $0x128] sm:$0xff]
  %v3325 = vld [vmem:[#allocation2 + $0x130] sm:$0xff]
  %s3326 = scalar_lea.vmem %s2, 4608
  %v3327 = vld [vmem:[%s3326] sm:$0xff]
  %v3328 = vld [vmem:[%s3326 + $0x8] sm:$0xff]
  %v3329 = vld [vmem:[%s3326 + $0x10] sm:$0xff]
  %v3330 = vld [vmem:[%s3326 + $0x18] sm:$0xff]
  %v3331 = vld [vmem:[%s3326 + $0x20] sm:$0xff]
  %v3332 = vld [vmem:[%s3326 + $0x28] sm:$0xff]
  %v3333 = vld [vmem:[%s3326 + $0x30] sm:$0xff]
  %v3334 = vld [vmem:[%s3326 + $0x38] sm:$0xff]
  %v3335 = vld [vmem:[%s3326 + $0x40] sm:$0xff]
  %v3336 = vld [vmem:[%s3326 + $0x48] sm:$0xff]
  %v3337 = vld [vmem:[%s3326 + $0x50] sm:$0xff]
  %v3338 = vld [vmem:[%s3326 + $0x58] sm:$0xff]
  %v3339 = vld [vmem:[%s3326 + $0x60] sm:$0xff]
  %v3340 = vld [vmem:[%s3326 + $0x68] sm:$0xff]
  %v3341 = vld [vmem:[%s3326 + $0x70] sm:$0xff]
  %v3342 = vld [vmem:[%s3326 + $0x78] sm:$0xff]
  %v3343 = vld [vmem:[%s3326 + $0x80] sm:$0xff]
  %v3344 = vld [vmem:[%s3326 + $0x88] sm:$0xff]
  %v3345 = vld [vmem:[%s3326 + $0x90] sm:$0xff]
  %v3346 = vld [vmem:[%s3326 + $0x98] sm:$0xff]
  %v3347 = vld [vmem:[%s3326 + $0xa0] sm:$0xff]
  %v3348 = vld [vmem:[%s3326 + $0xa8] sm:$0xff]
  %v3349 = vld [vmem:[%s3326 + $0xb0] sm:$0xff]
  %v3350 = vld [vmem:[%s3326 + $0xb8] sm:$0xff]
  %v3351 = vld [vmem:[%s3326 + $0xc0] sm:$0xff]
  %v3352 = vld [vmem:[%s3326 + $0xc8] sm:$0xff]
  %v3353 = vld [vmem:[%s3326 + $0xd0] sm:$0xff]
  %v3354 = vld [vmem:[%s3326 + $0xd8] sm:$0xff]
  %v3355 = vld [vmem:[%s3326 + $0xe0] sm:$0xff]
  %v3356 = vld [vmem:[%s3326 + $0xe8] sm:$0xff]
  %v3357 = vld [vmem:[%s3326 + $0xf0] sm:$0xff]
  %v3358 = vld [vmem:[%s3326 + $0xf8] sm:$0xff]
  %v3359 = vld [vmem:[%s3326 + $0x100] sm:$0xff]
  %v3360 = vld [vmem:[%s3326 + $0x108] sm:$0xff]
  %v3361 = vld [vmem:[%s3326 + $0x110] sm:$0xff]
  %v3362 = vld [vmem:[%s3326 + $0x118] sm:$0xff]
  %v3363 = vld [vmem:[%s3326 + $0x120] sm:$0xff]
  %v3364 = vld [vmem:[%s3326 + $0x128] sm:$0xff]
  %v3365 = vld [vmem:[%s3326 + $0x130] sm:$0xff]
  %v3366 = vld [vmem:[%s3326 + $0x138] sm:$0xff]
  %v3367 = vld [vmem:[%s3326 + $0x140] sm:$0xff]
  %v3368 = vld [vmem:[%s3326 + $0x148] sm:$0xff]
  %v3369 = vld [vmem:[%s3326 + $0x150] sm:$0xff]
  %v3370 = vld [vmem:[%s3326 + $0x158] sm:$0xff]
  %v3371 = vld [vmem:[%s3326 + $0x160] sm:$0xff]
  %v3372 = vld [vmem:[%s3326 + $0x168] sm:$0xff]
  %v3373 = vld [vmem:[%s3326 + $0x170] sm:$0xff]
  %v3374 = vld [vmem:[%s3326 + $0x178] sm:$0xff]
  %3375 = vmatpush.msra.mxu0 %v3342
  %3376 = vmatpush.msra.mxu0 %v3341
  %3377 = vmatpush.msra.mxu0 %v3340
  %3378 = vmatpush.msra.mxu0 %v3339
  %3379 = vmatpush.msra.mxu0 %v3338
  %3380 = vmatpush.msra.mxu0 %v3337
  %3381 = vmatpush.msra.mxu0 %v3336
  %3382 = vmatpush.msra.mxu0 %v3335
  %3383 = vmatpush.msra.mxu0 %v3334
  %3384 = vmatpush.msra.mxu0 %v3333
  %3385 = vmatpush.msra.mxu0 %v3332
  %3386 = vmatpush.msra.mxu0 %v3331
  %3387 = vmatpush.msra.mxu0 %v3330
  %3388 = vmatpush.msra.mxu0 %v3329
  %3389 = vmatpush.msra.mxu0 %v3328
  %3390 = vmatpush.msra.mxu0 %v3327
  %3391 = vmatmul.f32.gmra.mxu0 %v3323
  %v3392 = vpop.f32.mrf.mxu0
  %v3393 = vadd.f32 0.0, %v3392
  %3394 = vdwg.mxu0
  %3395 = vmatpush.msra.mxu0 %v3358
  %3396 = vmatpush.msra.mxu0 %v3357
  %3397 = vmatpush.msra.mxu0 %v3356
  %3398 = vmatpush.msra.mxu0 %v3355
  %3399 = vmatpush.msra.mxu0 %v3354
  %3400 = vmatpush.msra.mxu0 %v3353
  %3401 = vmatpush.msra.mxu0 %v3352
  %3402 = vmatpush.msra.mxu0 %v3351
  %3403 = vmatpush.msra.mxu0 %v3350
  %3404 = vmatpush.msra.mxu0 %v3349
  %3405 = vmatpush.msra.mxu0 %v3348
  %3406 = vmatpush.msra.mxu0 %v3347
  %3407 = vmatpush.msra.mxu0 %v3346
  %3408 = vmatpush.msra.mxu0 %v3345
  %3409 = vmatpush.msra.mxu0 %v3344
  %3410 = vmatpush.msra.mxu0 %v3343
  %3411 = vmatmul.f32.gmra.mxu0 %v3324
  %v3412 = vpop.f32.mrf.mxu0
  %v3413 = vadd.f32 %v3393, %v3412
  %3414 = vdwg.mxu0
  %3415 = vmatpush.msra.mxu0 %v3374
  %3416 = vmatpush.msra.mxu0 %v3373
  %3417 = vmatpush.msra.mxu0 %v3372
  %3418 = vmatpush.msra.mxu0 %v3371
  %3419 = vmatpush.msra.mxu0 %v3370
  %3420 = vmatpush.msra.mxu0 %v3369
  %3421 = vmatpush.msra.mxu0 %v3368
  %3422 = vmatpush.msra.mxu0 %v3367
  %3423 = vmatpush.msra.mxu0 %v3366
  %3424 = vmatpush.msra.mxu0 %v3365
  %3425 = vmatpush.msra.mxu0 %v3364
  %3426 = vmatpush.msra.mxu0 %v3363
  %3427 = vmatpush.msra.mxu0 %v3362
  %3428 = vmatpush.msra.mxu0 %v3361
  %3429 = vmatpush.msra.mxu0 %v3360
  %3430 = vmatpush.msra.mxu0 %v3359
  %3431 = vmatmul.f32.gmra.mxu0 %v3325
  %v3432 = vpop.f32.mrf.mxu0
  %v3433 = vadd.f32 %v3413, %v3432
  %3434 = vdwg.mxu0
  %v3435 = vadd.f32 %v3322, %v3433
  %v3436 = vld [vmem:[#allocation2 + $0x138] sm:$0xff]
  %v3437 = vld [vmem:[#allocation2 + $0x140] sm:$0xff]
  %v3438 = vld [vmem:[#allocation2 + $0x148] sm:$0xff]
  %s3439 = scalar_lea.vmem %s2, 4992
  %v3440 = vld [vmem:[%s3439] sm:$0xff]
  %v3441 = vld [vmem:[%s3439 + $0x8] sm:$0xff]
  %v3442 = vld [vmem:[%s3439 + $0x10] sm:$0xff]
  %v3443 = vld [vmem:[%s3439 + $0x18] sm:$0xff]
  %v3444 = vld [vmem:[%s3439 + $0x20] sm:$0xff]
  %v3445 = vld [vmem:[%s3439 + $0x28] sm:$0xff]
  %v3446 = vld [vmem:[%s3439 + $0x30] sm:$0xff]
  %v3447 = vld [vmem:[%s3439 + $0x38] sm:$0xff]
  %v3448 = vld [vmem:[%s3439 + $0x40] sm:$0xff]
  %v3449 = vld [vmem:[%s3439 + $0x48] sm:$0xff]
  %v3450 = vld [vmem:[%s3439 + $0x50] sm:$0xff]
  %v3451 = vld [vmem:[%s3439 + $0x58] sm:$0xff]
  %v3452 = vld [vmem:[%s3439 + $0x60] sm:$0xff]
  %v3453 = vld [vmem:[%s3439 + $0x68] sm:$0xff]
  %v3454 = vld [vmem:[%s3439 + $0x70] sm:$0xff]
  %v3455 = vld [vmem:[%s3439 + $0x78] sm:$0xff]
  %v3456 = vld [vmem:[%s3439 + $0x80] sm:$0xff]
  %v3457 = vld [vmem:[%s3439 + $0x88] sm:$0xff]
  %v3458 = vld [vmem:[%s3439 + $0x90] sm:$0xff]
  %v3459 = vld [vmem:[%s3439 + $0x98] sm:$0xff]
  %v3460 = vld [vmem:[%s3439 + $0xa0] sm:$0xff]
  %v3461 = vld [vmem:[%s3439 + $0xa8] sm:$0xff]
  %v3462 = vld [vmem:[%s3439 + $0xb0] sm:$0xff]
  %v3463 = vld [vmem:[%s3439 + $0xb8] sm:$0xff]
  %v3464 = vld [vmem:[%s3439 + $0xc0] sm:$0xff]
  %v3465 = vld [vmem:[%s3439 + $0xc8] sm:$0xff]
  %v3466 = vld [vmem:[%s3439 + $0xd0] sm:$0xff]
  %v3467 = vld [vmem:[%s3439 + $0xd8] sm:$0xff]
  %v3468 = vld [vmem:[%s3439 + $0xe0] sm:$0xff]
  %v3469 = vld [vmem:[%s3439 + $0xe8] sm:$0xff]
  %v3470 = vld [vmem:[%s3439 + $0xf0] sm:$0xff]
  %v3471 = vld [vmem:[%s3439 + $0xf8] sm:$0xff]
  %v3472 = vld [vmem:[%s3439 + $0x100] sm:$0xff]
  %v3473 = vld [vmem:[%s3439 + $0x108] sm:$0xff]
  %v3474 = vld [vmem:[%s3439 + $0x110] sm:$0xff]
  %v3475 = vld [vmem:[%s3439 + $0x118] sm:$0xff]
  %v3476 = vld [vmem:[%s3439 + $0x120] sm:$0xff]
  %v3477 = vld [vmem:[%s3439 + $0x128] sm:$0xff]
  %v3478 = vld [vmem:[%s3439 + $0x130] sm:$0xff]
  %v3479 = vld [vmem:[%s3439 + $0x138] sm:$0xff]
  %v3480 = vld [vmem:[%s3439 + $0x140] sm:$0xff]
  %v3481 = vld [vmem:[%s3439 + $0x148] sm:$0xff]
  %v3482 = vld [vmem:[%s3439 + $0x150] sm:$0xff]
  %v3483 = vld [vmem:[%s3439 + $0x158] sm:$0xff]
  %v3484 = vld [vmem:[%s3439 + $0x160] sm:$0xff]
  %v3485 = vld [vmem:[%s3439 + $0x168] sm:$0xff]
  %v3486 = vld [vmem:[%s3439 + $0x170] sm:$0xff]
  %v3487 = vld [vmem:[%s3439 + $0x178] sm:$0xff]
  %3488 = vmatpush.msra.mxu0 %v3455
  %3489 = vmatpush.msra.mxu0 %v3454
  %3490 = vmatpush.msra.mxu0 %v3453
  %3491 = vmatpush.msra.mxu0 %v3452
  %3492 = vmatpush.msra.mxu0 %v3451
  %3493 = vmatpush.msra.mxu0 %v3450
  %3494 = vmatpush.msra.mxu0 %v3449
  %3495 = vmatpush.msra.mxu0 %v3448
  %3496 = vmatpush.msra.mxu0 %v3447
  %3497 = vmatpush.msra.mxu0 %v3446
  %3498 = vmatpush.msra.mxu0 %v3445
  %3499 = vmatpush.msra.mxu0 %v3444
  %3500 = vmatpush.msra.mxu0 %v3443
  %3501 = vmatpush.msra.mxu0 %v3442
  %3502 = vmatpush.msra.mxu0 %v3441
  %3503 = vmatpush.msra.mxu0 %v3440
  %3504 = vmatmul.f32.gmra.mxu0 %v3436
  %v3505 = vpop.f32.mrf.mxu0
  %v3506 = vadd.f32 0.0, %v3505
  %3507 = vdwg.mxu0
  %3508 = vmatpush.msra.mxu0 %v3471
  %3509 = vmatpush.msra.mxu0 %v3470
  %3510 = vmatpush.msra.mxu0 %v3469
  %3511 = vmatpush.msra.mxu0 %v3468
  %3512 = vmatpush.msra.mxu0 %v3467
  %3513 = vmatpush.msra.mxu0 %v3466
  %3514 = vmatpush.msra.mxu0 %v3465
  %3515 = vmatpush.msra.mxu0 %v3464
  %3516 = vmatpush.msra.mxu0 %v3463
  %3517 = vmatpush.msra.mxu0 %v3462
  %3518 = vmatpush.msra.mxu0 %v3461
  %3519 = vmatpush.msra.mxu0 %v3460
  %3520 = vmatpush.msra.mxu0 %v3459
  %3521 = vmatpush.msra.mxu0 %v3458
  %3522 = vmatpush.msra.mxu0 %v3457
  %3523 = vmatpush.msra.mxu0 %v3456
  %3524 = vmatmul.f32.gmra.mxu0 %v3437
  %v3525 = vpop.f32.mrf.mxu0
  %v3526 = vadd.f32 %v3506, %v3525
  %3527 = vdwg.mxu0
  %3528 = vmatpush.msra.mxu0 %v3487
  %3529 = vmatpush.msra.mxu0 %v3486
  %3530 = vmatpush.msra.mxu0 %v3485
  %3531 = vmatpush.msra.mxu0 %v3484
  %3532 = vmatpush.msra.mxu0 %v3483
  %3533 = vmatpush.msra.mxu0 %v3482
  %3534 = vmatpush.msra.mxu0 %v3481
  %3535 = vmatpush.msra.mxu0 %v3480
  %3536 = vmatpush.msra.mxu0 %v3479
  %3537 = vmatpush.msra.mxu0 %v3478
  %3538 = vmatpush.msra.mxu0 %v3477
  %3539 = vmatpush.msra.mxu0 %v3476
  %3540 = vmatpush.msra.mxu0 %v3475
  %3541 = vmatpush.msra.mxu0 %v3474
  %3542 = vmatpush.msra.mxu0 %v3473
  %3543 = vmatpush.msra.mxu0 %v3472
  %3544 = vmatmul.f32.gmra.mxu0 %v3438
  %v3545 = vpop.f32.mrf.mxu0
  %v3546 = vadd.f32 %v3526, %v3545
  %3547 = vdwg.mxu0
  %v3548 = vadd.f32 %v3435, %v3546
  %v3549 = vld [vmem:[#allocation2 + $0x150] sm:$0xff]
  %v3550 = vld [vmem:[#allocation2 + $0x158] sm:$0xff]
  %v3551 = vld [vmem:[#allocation2 + $0x160] sm:$0xff]
  %s3552 = scalar_lea.vmem %s2, 5376
  %v3553 = vld [vmem:[%s3552] sm:$0xff]
  %v3554 = vld [vmem:[%s3552 + $0x8] sm:$0xff]
  %v3555 = vld [vmem:[%s3552 + $0x10] sm:$0xff]
  %v3556 = vld [vmem:[%s3552 + $0x18] sm:$0xff]
  %v3557 = vld [vmem:[%s3552 + $0x20] sm:$0xff]
  %v3558 = vld [vmem:[%s3552 + $0x28] sm:$0xff]
  %v3559 = vld [vmem:[%s3552 + $0x30] sm:$0xff]
  %v3560 = vld [vmem:[%s3552 + $0x38] sm:$0xff]
  %v3561 = vld [vmem:[%s3552 + $0x40] sm:$0xff]
  %v3562 = vld [vmem:[%s3552 + $0x48] sm:$0xff]
  %v3563 = vld [vmem:[%s3552 + $0x50] sm:$0xff]
  %v3564 = vld [vmem:[%s3552 + $0x58] sm:$0xff]
  %v3565 = vld [vmem:[%s3552 + $0x60] sm:$0xff]
  %v3566 = vld [vmem:[%s3552 + $0x68] sm:$0xff]
  %v3567 = vld [vmem:[%s3552 + $0x70] sm:$0xff]
  %v3568 = vld [vmem:[%s3552 + $0x78] sm:$0xff]
  %v3569 = vld [vmem:[%s3552 + $0x80] sm:$0xff]
  %v3570 = vld [vmem:[%s3552 + $0x88] sm:$0xff]
  %v3571 = vld [vmem:[%s3552 + $0x90] sm:$0xff]
  %v3572 = vld [vmem:[%s3552 + $0x98] sm:$0xff]
  %v3573 = vld [vmem:[%s3552 + $0xa0] sm:$0xff]
  %v3574 = vld [vmem:[%s3552 + $0xa8] sm:$0xff]
  %v3575 = vld [vmem:[%s3552 + $0xb0] sm:$0xff]
  %v3576 = vld [vmem:[%s3552 + $0xb8] sm:$0xff]
  %v3577 = vld [vmem:[%s3552 + $0xc0] sm:$0xff]
  %v3578 = vld [vmem:[%s3552 + $0xc8] sm:$0xff]
  %v3579 = vld [vmem:[%s3552 + $0xd0] sm:$0xff]
  %v3580 = vld [vmem:[%s3552 + $0xd8] sm:$0xff]
  %v3581 = vld [vmem:[%s3552 + $0xe0] sm:$0xff]
  %v3582 = vld [vmem:[%s3552 + $0xe8] sm:$0xff]
  %v3583 = vld [vmem:[%s3552 + $0xf0] sm:$0xff]
  %v3584 = vld [vmem:[%s3552 + $0xf8] sm:$0xff]
  %v3585 = vld [vmem:[%s3552 + $0x100] sm:$0xff]
  %v3586 = vld [vmem:[%s3552 + $0x108] sm:$0xff]
  %v3587 = vld [vmem:[%s3552 + $0x110] sm:$0xff]
  %v3588 = vld [vmem:[%s3552 + $0x118] sm:$0xff]
  %v3589 = vld [vmem:[%s3552 + $0x120] sm:$0xff]
  %v3590 = vld [vmem:[%s3552 + $0x128] sm:$0xff]
  %v3591 = vld [vmem:[%s3552 + $0x130] sm:$0xff]
  %v3592 = vld [vmem:[%s3552 + $0x138] sm:$0xff]
  %v3593 = vld [vmem:[%s3552 + $0x140] sm:$0xff]
  %v3594 = vld [vmem:[%s3552 + $0x148] sm:$0xff]
  %v3595 = vld [vmem:[%s3552 + $0x150] sm:$0xff]
  %v3596 = vld [vmem:[%s3552 + $0x158] sm:$0xff]
  %v3597 = vld [vmem:[%s3552 + $0x160] sm:$0xff]
  %v3598 = vld [vmem:[%s3552 + $0x168] sm:$0xff]
  %v3599 = vld [vmem:[%s3552 + $0x170] sm:$0xff]
  %v3600 = vld [vmem:[%s3552 + $0x178] sm:$0xff]
  %3601 = vmatpush.msra.mxu0 %v3568
  %3602 = vmatpush.msra.mxu0 %v3567
  %3603 = vmatpush.msra.mxu0 %v3566
  %3604 = vmatpush.msra.mxu0 %v3565
  %3605 = vmatpush.msra.mxu0 %v3564
  %3606 = vmatpush.msra.mxu0 %v3563
  %3607 = vmatpush.msra.mxu0 %v3562
  %3608 = vmatpush.msra.mxu0 %v3561
  %3609 = vmatpush.msra.mxu0 %v3560
  %3610 = vmatpush.msra.mxu0 %v3559
  %3611 = vmatpush.msra.mxu0 %v3558
  %3612 = vmatpush.msra.mxu0 %v3557
  %3613 = vmatpush.msra.mxu0 %v3556
  %3614 = vmatpush.msra.mxu0 %v3555
  %3615 = vmatpush.msra.mxu0 %v3554
  %3616 = vmatpush.msra.mxu0 %v3553
  %3617 = vmatmul.f32.gmra.mxu0 %v3549
  %v3618 = vpop.f32.mrf.mxu0
  %v3619 = vadd.f32 0.0, %v3618
  %3620 = vdwg.mxu0
  %3621 = vmatpush.msra.mxu0 %v3584
  %3622 = vmatpush.msra.mxu0 %v3583
  %3623 = vmatpush.msra.mxu0 %v3582
  %3624 = vmatpush.msra.mxu0 %v3581
  %3625 = vmatpush.msra.mxu0 %v3580
  %3626 = vmatpush.msra.mxu0 %v3579
  %3627 = vmatpush.msra.mxu0 %v3578
  %3628 = vmatpush.msra.mxu0 %v3577
  %3629 = vmatpush.msra.mxu0 %v3576
  %3630 = vmatpush.msra.mxu0 %v3575
  %3631 = vmatpush.msra.mxu0 %v3574
  %3632 = vmatpush.msra.mxu0 %v3573
  %3633 = vmatpush.msra.mxu0 %v3572
  %3634 = vmatpush.msra.mxu0 %v3571
  %3635 = vmatpush.msra.mxu0 %v3570
  %3636 = vmatpush.msra.mxu0 %v3569
  %3637 = vmatmul.f32.gmra.mxu0 %v3550
  %v3638 = vpop.f32.mrf.mxu0
  %v3639 = vadd.f32 %v3619, %v3638
  %3640 = vdwg.mxu0
  %3641 = vmatpush.msra.mxu0 %v3600
  %3642 = vmatpush.msra.mxu0 %v3599
  %3643 = vmatpush.msra.mxu0 %v3598
  %3644 = vmatpush.msra.mxu0 %v3597
  %3645 = vmatpush.msra.mxu0 %v3596
  %3646 = vmatpush.msra.mxu0 %v3595
  %3647 = vmatpush.msra.mxu0 %v3594
  %3648 = vmatpush.msra.mxu0 %v3593
  %3649 = vmatpush.msra.mxu0 %v3592
  %3650 = vmatpush.msra.mxu0 %v3591
  %3651 = vmatpush.msra.mxu0 %v3590
  %3652 = vmatpush.msra.mxu0 %v3589
  %3653 = vmatpush.msra.mxu0 %v3588
  %3654 = vmatpush.msra.mxu0 %v3587
  %3655 = vmatpush.msra.mxu0 %v3586
  %3656 = vmatpush.msra.mxu0 %v3585
  %3657 = vmatmul.f32.gmra.mxu0 %v3551
  %v3658 = vpop.f32.mrf.mxu0
  %v3659 = vadd.f32 %v3639, %v3658
  %3660 = vdwg.mxu0
  %v3661 = vadd.f32 %v3548, %v3659
  %v3662 = vld [vmem:[#allocation2 + $0x168] sm:$0xff]
  %v3663 = vld [vmem:[#allocation2 + $0x170] sm:$0xff]
  %v3664 = vld [vmem:[#allocation2 + $0x178] sm:$0xff]
  %s3665 = scalar_lea.vmem %s2, 5760
  %v3666 = vld [vmem:[%s3665] sm:$0xff]
  %v3667 = vld [vmem:[%s3665 + $0x8] sm:$0xff]
  %v3668 = vld [vmem:[%s3665 + $0x10] sm:$0xff]
  %v3669 = vld [vmem:[%s3665 + $0x18] sm:$0xff]
  %v3670 = vld [vmem:[%s3665 + $0x20] sm:$0xff]
  %v3671 = vld [vmem:[%s3665 + $0x28] sm:$0xff]
  %v3672 = vld [vmem:[%s3665 + $0x30] sm:$0xff]
  %v3673 = vld [vmem:[%s3665 + $0x38] sm:$0xff]
  %v3674 = vld [vmem:[%s3665 + $0x40] sm:$0xff]
  %v3675 = vld [vmem:[%s3665 + $0x48] sm:$0xff]
  %v3676 = vld [vmem:[%s3665 + $0x50] sm:$0xff]
  %v3677 = vld [vmem:[%s3665 + $0x58] sm:$0xff]
  %v3678 = vld [vmem:[%s3665 + $0x60] sm:$0xff]
  %v3679 = vld [vmem:[%s3665 + $0x68] sm:$0xff]
  %v3680 = vld [vmem:[%s3665 + $0x70] sm:$0xff]
  %v3681 = vld [vmem:[%s3665 + $0x78] sm:$0xff]
  %v3682 = vld [vmem:[%s3665 + $0x80] sm:$0xff]
  %v3683 = vld [vmem:[%s3665 + $0x88] sm:$0xff]
  %v3684 = vld [vmem:[%s3665 + $0x90] sm:$0xff]
  %v3685 = vld [vmem:[%s3665 + $0x98] sm:$0xff]
  %v3686 = vld [vmem:[%s3665 + $0xa0] sm:$0xff]
  %v3687 = vld [vmem:[%s3665 + $0xa8] sm:$0xff]
  %v3688 = vld [vmem:[%s3665 + $0xb0] sm:$0xff]
  %v3689 = vld [vmem:[%s3665 + $0xb8] sm:$0xff]
  %v3690 = vld [vmem:[%s3665 + $0xc0] sm:$0xff]
  %v3691 = vld [vmem:[%s3665 + $0xc8] sm:$0xff]
  %v3692 = vld [vmem:[%s3665 + $0xd0] sm:$0xff]
  %v3693 = vld [vmem:[%s3665 + $0xd8] sm:$0xff]
  %v3694 = vld [vmem:[%s3665 + $0xe0] sm:$0xff]
  %v3695 = vld [vmem:[%s3665 + $0xe8] sm:$0xff]
  %v3696 = vld [vmem:[%s3665 + $0xf0] sm:$0xff]
  %v3697 = vld [vmem:[%s3665 + $0xf8] sm:$0xff]
  %v3698 = vld [vmem:[%s3665 + $0x100] sm:$0xff]
  %v3699 = vld [vmem:[%s3665 + $0x108] sm:$0xff]
  %v3700 = vld [vmem:[%s3665 + $0x110] sm:$0xff]
  %v3701 = vld [vmem:[%s3665 + $0x118] sm:$0xff]
  %v3702 = vld [vmem:[%s3665 + $0x120] sm:$0xff]
  %v3703 = vld [vmem:[%s3665 + $0x128] sm:$0xff]
  %v3704 = vld [vmem:[%s3665 + $0x130] sm:$0xff]
  %v3705 = vld [vmem:[%s3665 + $0x138] sm:$0xff]
  %v3706 = vld [vmem:[%s3665 + $0x140] sm:$0xff]
  %v3707 = vld [vmem:[%s3665 + $0x148] sm:$0xff]
  %v3708 = vld [vmem:[%s3665 + $0x150] sm:$0xff]
  %v3709 = vld [vmem:[%s3665 + $0x158] sm:$0xff]
  %v3710 = vld [vmem:[%s3665 + $0x160] sm:$0xff]
  %v3711 = vld [vmem:[%s3665 + $0x168] sm:$0xff]
  %v3712 = vld [vmem:[%s3665 + $0x170] sm:$0xff]
  %v3713 = vld [vmem:[%s3665 + $0x178] sm:$0xff]
  %3714 = vmatpush.msra.mxu0 %v3681
  %3715 = vmatpush.msra.mxu0 %v3680
  %3716 = vmatpush.msra.mxu0 %v3679
  %3717 = vmatpush.msra.mxu0 %v3678
  %3718 = vmatpush.msra.mxu0 %v3677
  %3719 = vmatpush.msra.mxu0 %v3676
  %3720 = vmatpush.msra.mxu0 %v3675
  %3721 = vmatpush.msra.mxu0 %v3674
  %3722 = vmatpush.msra.mxu0 %v3673
  %3723 = vmatpush.msra.mxu0 %v3672
  %3724 = vmatpush.msra.mxu0 %v3671
  %3725 = vmatpush.msra.mxu0 %v3670
  %3726 = vmatpush.msra.mxu0 %v3669
  %3727 = vmatpush.msra.mxu0 %v3668
  %3728 = vmatpush.msra.mxu0 %v3667
  %3729 = vmatpush.msra.mxu0 %v3666
  %3730 = vmatmul.f32.gmra.mxu0 %v3662
  %v3731 = vpop.f32.mrf.mxu0
  %v3732 = vadd.f32 0.0, %v3731
  %3733 = vdwg.mxu0
  %3734 = vmatpush.msra.mxu0 %v3697
  %3735 = vmatpush.msra.mxu0 %v3696
  %3736 = vmatpush.msra.mxu0 %v3695
  %3737 = vmatpush.msra.mxu0 %v3694
  %3738 = vmatpush.msra.mxu0 %v3693
  %3739 = vmatpush.msra.mxu0 %v3692
  %3740 = vmatpush.msra.mxu0 %v3691
  %3741 = vmatpush.msra.mxu0 %v3690
  %3742 = vmatpush.msra.mxu0 %v3689
  %3743 = vmatpush.msra.mxu0 %v3688
  %3744 = vmatpush.msra.mxu0 %v3687
  %3745 = vmatpush.msra.mxu0 %v3686
  %3746 = vmatpush.msra.mxu0 %v3685
  %3747 = vmatpush.msra.mxu0 %v3684
  %3748 = vmatpush.msra.mxu0 %v3683
  %3749 = vmatpush.msra.mxu0 %v3682
  %3750 = vmatmul.f32.gmra.mxu0 %v3663
  %v3751 = vpop.f32.mrf.mxu0
  %v3752 = vadd.f32 %v3732, %v3751
  %3753 = vdwg.mxu0
  %3754 = vmatpush.msra.mxu0 %v3713
  %3755 = vmatpush.msra.mxu0 %v3712
  %3756 = vmatpush.msra.mxu0 %v3711
  %3757 = vmatpush.msra.mxu0 %v3710
  %3758 = vmatpush.msra.mxu0 %v3709
  %3759 = vmatpush.msra.mxu0 %v3708
  %3760 = vmatpush.msra.mxu0 %v3707
  %3761 = vmatpush.msra.mxu0 %v3706
  %3762 = vmatpush.msra.mxu0 %v3705
  %3763 = vmatpush.msra.mxu0 %v3704
  %3764 = vmatpush.msra.mxu0 %v3703
  %3765 = vmatpush.msra.mxu0 %v3702
  %3766 = vmatpush.msra.mxu0 %v3701
  %3767 = vmatpush.msra.mxu0 %v3700
  %3768 = vmatpush.msra.mxu0 %v3699
  %3769 = vmatpush.msra.mxu0 %v3698
  %3770 = vmatmul.f32.gmra.mxu0 %v3664
  %v3771 = vpop.f32.mrf.mxu0
  %v3772 = vadd.f32 %v3752, %v3771
  %3773 = vdwg.mxu0
  %v3774 = vadd.f32 %v3661, %v3772
  %v3775 = vld [vmem:[#allocation2 + $0x180] sm:$0xff]
  %v3776 = vld [vmem:[#allocation2 + $0x188] sm:$0xff]
  %v3777 = vld [vmem:[#allocation2 + $0x190] sm:$0xff]
  %s3778 = scalar_lea.vmem %s2, 6144
  %v3779 = vld [vmem:[%s3778] sm:$0xff]
  %v3780 = vld [vmem:[%s3778 + $0x8] sm:$0xff]
  %v3781 = vld [vmem:[%s3778 + $0x10] sm:$0xff]
  %v3782 = vld [vmem:[%s3778 + $0x18] sm:$0xff]
  %v3783 = vld [vmem:[%s3778 + $0x20] sm:$0xff]
  %v3784 = vld [vmem:[%s3778 + $0x28] sm:$0xff]
  %v3785 = vld [vmem:[%s3778 + $0x30] sm:$0xff]
  %v3786 = vld [vmem:[%s3778 + $0x38] sm:$0xff]
  %v3787 = vld [vmem:[%s3778 + $0x40] sm:$0xff]
  %v3788 = vld [vmem:[%s3778 + $0x48] sm:$0xff]
  %v3789 = vld [vmem:[%s3778 + $0x50] sm:$0xff]
  %v3790 = vld [vmem:[%s3778 + $0x58] sm:$0xff]
  %v3791 = vld [vmem:[%s3778 + $0x60] sm:$0xff]
  %v3792 = vld [vmem:[%s3778 + $0x68] sm:$0xff]
  %v3793 = vld [vmem:[%s3778 + $0x70] sm:$0xff]
  %v3794 = vld [vmem:[%s3778 + $0x78] sm:$0xff]
  %v3795 = vld [vmem:[%s3778 + $0x80] sm:$0xff]
  %v3796 = vld [vmem:[%s3778 + $0x88] sm:$0xff]
  %v3797 = vld [vmem:[%s3778 + $0x90] sm:$0xff]
  %v3798 = vld [vmem:[%s3778 + $0x98] sm:$0xff]
  %v3799 = vld [vmem:[%s3778 + $0xa0] sm:$0xff]
  %v3800 = vld [vmem:[%s3778 + $0xa8] sm:$0xff]
  %v3801 = vld [vmem:[%s3778 + $0xb0] sm:$0xff]
  %v3802 = vld [vmem:[%s3778 + $0xb8] sm:$0xff]
  %v3803 = vld [vmem:[%s3778 + $0xc0] sm:$0xff]
  %v3804 = vld [vmem:[%s3778 + $0xc8] sm:$0xff]
  %v3805 = vld [vmem:[%s3778 + $0xd0] sm:$0xff]
  %v3806 = vld [vmem:[%s3778 + $0xd8] sm:$0xff]
  %v3807 = vld [vmem:[%s3778 + $0xe0] sm:$0xff]
  %v3808 = vld [vmem:[%s3778 + $0xe8] sm:$0xff]
  %v3809 = vld [vmem:[%s3778 + $0xf0] sm:$0xff]
  %v3810 = vld [vmem:[%s3778 + $0xf8] sm:$0xff]
  %v3811 = vld [vmem:[%s3778 + $0x100] sm:$0xff]
  %v3812 = vld [vmem:[%s3778 + $0x108] sm:$0xff]
  %v3813 = vld [vmem:[%s3778 + $0x110] sm:$0xff]
  %v3814 = vld [vmem:[%s3778 + $0x118] sm:$0xff]
  %v3815 = vld [vmem:[%s3778 + $0x120] sm:$0xff]
  %v3816 = vld [vmem:[%s3778 + $0x128] sm:$0xff]
  %v3817 = vld [vmem:[%s3778 + $0x130] sm:$0xff]
  %v3818 = vld [vmem:[%s3778 + $0x138] sm:$0xff]
  %v3819 = vld [vmem:[%s3778 + $0x140] sm:$0xff]
  %v3820 = vld [vmem:[%s3778 + $0x148] sm:$0xff]
  %v3821 = vld [vmem:[%s3778 + $0x150] sm:$0xff]
  %v3822 = vld [vmem:[%s3778 + $0x158] sm:$0xff]
  %v3823 = vld [vmem:[%s3778 + $0x160] sm:$0xff]
  %v3824 = vld [vmem:[%s3778 + $0x168] sm:$0xff]
  %v3825 = vld [vmem:[%s3778 + $0x170] sm:$0xff]
  %v3826 = vld [vmem:[%s3778 + $0x178] sm:$0xff]
  %3827 = vmatpush.msra.mxu0 %v3794
  %3828 = vmatpush.msra.mxu0 %v3793
  %3829 = vmatpush.msra.mxu0 %v3792
  %3830 = vmatpush.msra.mxu0 %v3791
  %3831 = vmatpush.msra.mxu0 %v3790
  %3832 = vmatpush.msra.mxu0 %v3789
  %3833 = vmatpush.msra.mxu0 %v3788
  %3834 = vmatpush.msra.mxu0 %v3787
  %3835 = vmatpush.msra.mxu0 %v3786
  %3836 = vmatpush.msra.mxu0 %v3785
  %3837 = vmatpush.msra.mxu0 %v3784
  %3838 = vmatpush.msra.mxu0 %v3783
  %3839 = vmatpush.msra.mxu0 %v3782
  %3840 = vmatpush.msra.mxu0 %v3781
  %3841 = vmatpush.msra.mxu0 %v3780
  %3842 = vmatpush.msra.mxu0 %v3779
  %3843 = vmatmul.f32.gmra.mxu0 %v3775
  %v3844 = vpop.f32.mrf.mxu0
  %v3845 = vadd.f32 0.0, %v3844
  %3846 = vdwg.mxu0
  %3847 = vmatpush.msra.mxu0 %v3810
  %3848 = vmatpush.msra.mxu0 %v3809
  %3849 = vmatpush.msra.mxu0 %v3808
  %3850 = vmatpush.msra.mxu0 %v3807
  %3851 = vmatpush.msra.mxu0 %v3806
  %3852 = vmatpush.msra.mxu0 %v3805
  %3853 = vmatpush.msra.mxu0 %v3804
  %3854 = vmatpush.msra.mxu0 %v3803
  %3855 = vmatpush.msra.mxu0 %v3802
  %3856 = vmatpush.msra.mxu0 %v3801
  %3857 = vmatpush.msra.mxu0 %v3800
  %3858 = vmatpush.msra.mxu0 %v3799
  %3859 = vmatpush.msra.mxu0 %v3798
  %3860 = vmatpush.msra.mxu0 %v3797
  %3861 = vmatpush.msra.mxu0 %v3796
  %3862 = vmatpush.msra.mxu0 %v3795
  %3863 = vmatmul.f32.gmra.mxu0 %v3776
  %v3864 = vpop.f32.mrf.mxu0
  %v3865 = vadd.f32 %v3845, %v3864
  %3866 = vdwg.mxu0
  %3867 = vmatpush.msra.mxu0 %v3826
  %3868 = vmatpush.msra.mxu0 %v3825
  %3869 = vmatpush.msra.mxu0 %v3824
  %3870 = vmatpush.msra.mxu0 %v3823
  %3871 = vmatpush.msra.mxu0 %v3822
  %3872 = vmatpush.msra.mxu0 %v3821
  %3873 = vmatpush.msra.mxu0 %v3820
  %3874 = vmatpush.msra.mxu0 %v3819
  %3875 = vmatpush.msra.mxu0 %v3818
  %3876 = vmatpush.msra.mxu0 %v3817
  %3877 = vmatpush.msra.mxu0 %v3816
  %3878 = vmatpush.msra.mxu0 %v3815
  %3879 = vmatpush.msra.mxu0 %v3814
  %3880 = vmatpush.msra.mxu0 %v3813
  %3881 = vmatpush.msra.mxu0 %v3812
  %3882 = vmatpush.msra.mxu0 %v3811
  %3883 = vmatmul.f32.gmra.mxu0 %v3777
  %v3884 = vpop.f32.mrf.mxu0
  %v3885 = vadd.f32 %v3865, %v3884
  %3886 = vdwg.mxu0
  %v3887 = vadd.f32 %v3774, %v3885
  %v3888 = vld [vmem:[%s3] sm:$0x1]
  %v3890 = vperm.slane %v3888, 0
  %v3892 = vadd.f32 %v3887, %v3890
  %v3893 = vtanh.pop %v3892
  %v3894 = vld [vmem:[%s4] sm:$0xff]
  %v3895 = vld [vmem:[%s4 + $0x8] sm:$0xff]
  %v3896 = vld [vmem:[%s4 + $0x10] sm:$0xff]
  %v3897 = vld [vmem:[%s4 + $0x18] sm:$0xff]
  %v3898 = vld [vmem:[%s4 + $0x20] sm:$0xff]
  %v3899 = vld [vmem:[%s4 + $0x28] sm:$0xff]
  %v3900 = vld [vmem:[%s4 + $0x30] sm:$0xff]
  %v3901 = vld [vmem:[%s4 + $0x38] sm:$0xff]
  %v3902 = vld [vmem:[%s4 + $0x40] sm:$0xff]
  %v3903 = vld [vmem:[%s4 + $0x48] sm:$0xff]
  %v3904 = vld [vmem:[%s4 + $0x50] sm:$0xff]
  %v3905 = vld [vmem:[%s4 + $0x58] sm:$0xff]
  %v3906 = vld [vmem:[%s4 + $0x60] sm:$0xff]
  %v3907 = vld [vmem:[%s4 + $0x68] sm:$0xff]
  %v3908 = vld [vmem:[%s4 + $0x70] sm:$0xff]
  %v3909 = vld [vmem:[%s4 + $0x78] sm:$0xff]
  %3910 = vmatpush.msra.mxu0 %v3909
  %3911 = vmatpush.msra.mxu0 %v3908
  %3912 = vmatpush.msra.mxu0 %v3907
  %3913 = vmatpush.msra.mxu0 %v3906
  %3914 = vmatpush.msra.mxu0 %v3905
  %3915 = vmatpush.msra.mxu0 %v3904
  %3916 = vmatpush.msra.mxu0 %v3903
  %3917 = vmatpush.msra.mxu0 %v3902
  %3918 = vmatpush.msra.mxu0 %v3901
  %3919 = vmatpush.msra.mxu0 %v3900
  %3920 = vmatpush.msra.mxu0 %v3899
  %3921 = vmatpush.msra.mxu0 %v3898
  %3922 = vmatpush.msra.mxu0 %v3897
  %3923 = vmatpush.msra.mxu0 %v3896
  %3924 = vmatpush.msra.mxu0 %v3895
  %3925 = vmatpush.msra.mxu0 %v3894
  %3926 = vmatmul.f32.gmra.mxu0 %v3893
  %v3927 = vpop.f32.mrf.mxu0
  %v3928 = vadd.f32 0.0, %v3927
  %3929 = vdwg.mxu0
  %vm3930 = vcmask 80896
  %v3931 = vsel %vm3930, %v3928, -inf
  %3932 = vmax.xlane.f32.xlu0 %v3931
  %v3933 = vpop.xlane.xlu0 %3932
  %v3934 = vsub.f32 %v3928, %v3933
  %v3935 = vmul.f32 %v3934, 1.442695
  %v3936 = vpow.pop %v3935
  %v3937 = vsel %vm3930, %v3936, 0.0
  %3938 = vadd.xlane.f32.xlu0 %v3937
  %v3939 = vpop.xlane.xlu0 %3938
  %v3940 = vlog2.pop %v3939
  %v3941 = vmul.f32 %v3940, 0.6931472
  %v3942 = vadd.f32 %v3941, %v3933
  %v3943 = vsub.f32 %v3928, %v3942
  %3944 = vst.msk [vmem:[%s5] sm:$0xff] %vm3930, %v3943
  // Predicated region
  $region22: #{conv2dthenlinear_28_forward.1} parent=0 // pred_check
    _
  $region23: #{conv2dthenlinear_28_forward.1} parent=0 // pred_check_branch
    %3946 = sbr.rel (0) target = $region25
  $region24: #{conv2dthenlinear_28_forward.1} parent=0 // pred_region
    _
  $region25: #{conv2dthenlinear_28_forward.1} parent=0 // pred_fallthru
    _
  // Predicated region
  $region26: #{conv2dthenlinear_28_forward.1} parent=0 // pred_check
    _
  $region27: #{conv2dthenlinear_28_forward.1} parent=0 // pred_check_branch
    %3948 = sbr.rel (0) target = $region29
  $region28: #{conv2dthenlinear_28_forward.1} parent=0 // pred_region
    _
  $region29: #{conv2dthenlinear_28_forward.1} parent=0 // pred_fallthru
    _

</llo_original>
